<compile_context>
chip_gen: v5e
topology: v5e:2x2
jax: 0.10.0
libtpu: 0.0.40
codegen_flags: <defaults>
</compile_context>

<pallas_src>
import functools

import jax
import jax.numpy as jnp
from jax.experimental import pallas as pl
from jax.experimental.pallas import tpu as pltpu


def _round_up(x, m):
    return ((x + m - 1) // m) * m


# ----------------------------------------------------------------------------- kernel
def _encoder_kernel(x_ref, e_ref,
                    wn1_ref, wn2_ref, pn_ref,
                    we1_ref, we2_ref, pe_ref,
                    hn_ref, he_ref, *, nt_node, eps):
    """One grid step = one row tile of either the node branch (steps < nt_node) or the
    edge branch (steps >= nt_node).

    Per tile: LayerNorm(SiLU(x @ W1 + b1) @ W2 + b2) * gamma + beta.
    Matmuls run on the MXU in the weights' dtype (f32 or bf16) with f32 accumulation;
    SiLU / LayerNorm math stays in f32.
    """
    i = pl.program_id(0)

    def mlp_ln(inp, w1_ref, w2_ref, p_ref, out_ref):
        w1 = w1_ref[...]
        h = jnp.dot(inp.astype(w1.dtype), w1, preferred_element_type=jnp.float32)
        p = p_ref[...].astype(jnp.float32)            # packed (4, dim): b1, b2, gamma, beta
        h = h + p[0:1, :]                             # + b1
        h = h * jax.nn.sigmoid(h)                     # SiLU (sigmoid -> EUP slot)
        w2 = w2_ref[...]
        h = jnp.dot(h.astype(w2.dtype), w2, preferred_element_type=jnp.float32)
        h = h + p[1:2, :]                             # + b2
        # LayerNorm over last dim (torch default: biased variance, eps inside sqrt).
        mean = jnp.mean(h, axis=-1, keepdims=True)
        cent = h - mean
        var = jnp.mean(cent * cent, axis=-1, keepdims=True)
        h = cent * jax.lax.rsqrt(var + eps)
        out_ref[...] = (h * p[2:3, :] + p[3:4, :]).astype(out_ref.dtype)

    @pl.when(i < nt_node)
    def _():
        mlp_ln(x_ref[...], wn1_ref, wn2_ref, pn_ref, hn_ref)

    @pl.when(i >= nt_node)
    def _():
        mlp_ln(e_ref[...], we1_ref, we2_ref, pe_ref, he_ref)


# ------------------------------------------------------------------------ sizing helpers
def _vmem_budget_and_limit():
    """Generation-aware scoped-VMEM limit (+ a conservative planning budget)."""
    phys = 128 * 1024 * 1024                      # v5e/v6e physical VMEM
    try:
        phys = int(pltpu.get_tpu_info().vmem_capacity_bytes)
    except Exception:
        pass                                      # fall back to the v5e/v6e figure
    limit = min(phys // 2, 64 * 1024 * 1024)      # 64 MiB on v5e/v6e, 32 MiB on v7x
    budget = int(limit * 0.7)                     # leave compiler/headroom slack
    return budget, limit


def _choose_row_tile(total_rows, d_in_n, d_in_e, dim,
                     in_itemsize, out_itemsize, w_itemsize, budget, align):
    """Largest sublane-aligned row tile that fits the VMEM budget while keeping >= 3
    grid steps (so prefetch / writeback stay hidden)."""
    lane = 128
    din_p = _round_up(max(d_in_n, d_in_e, 1), lane)   # input tiles are lane-padded in VMEM
    dim_p = _round_up(dim, lane)
    # Resident weights/params for both branches (double-buffered constant-index blocks).
    weight_bytes = 2 * 2 * ((_round_up(d_in_n, 8) + _round_up(d_in_e, 8)
                             + 2 * dim + 16) * dim_p * w_itemsize)
    budget = max(budget - weight_bytes, 1 << 20)
    # Per-row VMEM: node+edge input blocks and node+edge output blocks (double-buffered)
    # plus f32 intermediates headroom.
    per_row = (2 * 2 * din_p * in_itemsize
               + 2 * 2 * dim_p * out_itemsize
               + 4 * dim_p * 4)
    for t in (4096, 2048, 1024, 512, 256, 128):
        if total_rows >= 3 * t and t * per_row <= budget:
            return _round_up(t, align)
    return _round_up(128, align)                  # tiny graphs: one tile per branch


def _prep_branch(params, matmul_dtype):
    """Cast weights for the MXU (host-side, so the DMA is also halved for bf16) and pack
    b1/b2/gamma/beta into a single (4, dim) block."""
    w1, b1, w2, b2, gamma, beta = params
    if matmul_dtype is not None:
        w1 = w1.astype(matmul_dtype)
        w2 = w2.astype(matmul_dtype)
    packed = jnp.stack([b1, b2, gamma, beta]).astype(jnp.float32)
    return w1, w2, packed


# ----------------------------------------------------------------------------- wrapper
def encoder_forward(x, edge_attr, node_params, edge_params, *,
                    row_tile=None, eps=1e-5, matmul_dtype=None, out_dtype=None):
    """Encoder.forward(x, edge_attr) -> (h_node, h_edge), fused into one pallas_call."""
    n, d_in_n = x.shape
    e, d_in_e = edge_attr.shape
    dim = node_params[2].shape[1]                 # W2 is (dim, dim)
    out_dtype = x.dtype if out_dtype is None else out_dtype

    if n == 0 or e == 0:                          # degenerate empty graph: zero-size work
        return (_reference(x, node_params, eps).astype(out_dtype),
                _reference(edge_attr, edge_params, eps).astype(out_dtype))

    wn1, wn2, pn = _prep_branch(node_params, matmul_dtype)
    we1, we2, pe = _prep_branch(edge_params, matmul_dtype)

    in_itemsize = jnp.dtype(x.dtype).itemsize
    out_itemsize = jnp.dtype(out_dtype).itemsize
    w_itemsize = jnp.dtype(wn1.dtype).itemsize
    # Sublane tile is (8,128) f32 / (16,128) bf16 / (32,128) int8-fp8: align rows to it.
    align = max(8, 32 // min(in_itemsize, out_itemsize))

    budget, vmem_limit = _vmem_budget_and_limit()
    if row_tile is None:
        row_tile = _choose_row_tile(n + e, d_in_n, d_in_e, dim, in_itemsize,
                                    out_itemsize, w_itemsize, budget, align)
    row_tile = max(align, _round_up(int(row_tile), align))

    nt_node = pl.cdiv(n, row_tile)
    nt_edge = pl.cdiv(e, row_tile)
    grid = (nt_node + nt_edge,)

    # Clamped index maps: during edge steps the node-side blocks stay pinned on their
    # last (already-processed) index -> no re-DMA, and the final writeback re-stores the
    # same valid rows.  Conversely the edge-side block index stays 0 during node steps;
    # it is only written back after the first edge step has filled it.  Partial tail
    # blocks are clipped by Pallas (garbage reads confined to clipped rows, OOB writes
    # dropped) so arbitrary N / E need no padding.
    node_idx = lambda i: (jnp.minimum(i, nt_node - 1), 0)
    edge_idx = lambda i: (jnp.maximum(i - nt_node, 0), 0)
    const = lambda i: (0, 0)

    kernel = functools.partial(_encoder_kernel, nt_node=nt_node, eps=eps)

    cost = pl.CostEstimate(
        flops=2 * dim * (n * (d_in_n + dim) + e * (d_in_e + dim)),
        transcendentals=(n + e) * dim,            # sigmoid
        bytes_accessed=((n * d_in_n + e * d_in_e) * in_itemsize
                        + (n + e) * dim * out_itemsize
                        + ((d_in_n + d_in_e + 2 * dim) * dim + 8 * dim) * w_itemsize),
    )

    h_node, h_edge = pl.pallas_call(
        kernel,
        out_shape=(jax.ShapeDtypeStruct((n, dim), out_dtype),
                   jax.ShapeDtypeStruct((e, dim), out_dtype)),
        grid_spec=pltpu.PrefetchScalarGridSpec(
            num_scalar_prefetch=0,
            grid=grid,
            in_specs=[
                pl.BlockSpec((row_tile, d_in_n), node_idx),   # node features (streamed)
                pl.BlockSpec((row_tile, d_in_e), edge_idx),   # edge features (streamed)
                pl.BlockSpec((d_in_n, dim), const),           # node W1 (fetched once)
                pl.BlockSpec((dim, dim), const),              # node W2
                pl.BlockSpec((4, dim), const),                # node b1/b2/gamma/beta
                pl.BlockSpec((d_in_e, dim), const),           # edge W1
                pl.BlockSpec((dim, dim), const),              # edge W2
                pl.BlockSpec((4, dim), const),                # edge b1/b2/gamma/beta
            ],
            out_specs=[
                pl.BlockSpec((row_tile, dim), node_idx),      # h_node (tail clipped)
                pl.BlockSpec((row_tile, dim), edge_idx),      # h_edge (tail clipped)
            ],
        ),
        compiler_params=pltpu.CompilerParams(
            # "arbitrary": the clamped/revisited output block indices above are only
            # safe when the grid runs sequentially (free on single-TC v5e/v6e).
            dimension_semantics=("arbitrary",),
            vmem_limit_bytes=vmem_limit,
        ),
        cost_estimate=cost,
    )(x, edge_attr, wn1, wn2, pn, we1, we2, pe)
    return h_node, h_edge


# ------------------------------------------------------------------------ params / ref
def init_branch_params(key, d_in, dim, dtype=jnp.float32):
    """Deterministic params for MLP([d_in, dim, dim]) + LayerNorm(dim)."""
    k1, k2 = jax.random.split(key)
    scale1 = 1.0 / jnp.sqrt(jnp.float32(d_in))
    scale2 = 1.0 / jnp.sqrt(jnp.float32(dim))
    w1 = (jax.random.normal(k1, (d_in, dim), dtype=jnp.float32) * scale1).astype(dtype)
    w2 = (jax.random.normal(k2, (dim, dim), dtype=jnp.float32) * scale2).astype(dtype)
    b1 = jnp.zeros((dim,), dtype)
    b2 = jnp.zeros((dim,), dtype)
    gamma = jnp.ones((dim,), dtype)
    beta = jnp.zeros((dim,), dtype)
    return (w1, b1, w2, b2, gamma, beta)


def _reference(x, params, eps=1e-5):
    w1, b1, w2, b2, g, be = params
    h = x @ w1 + b1
    h = h * jax.nn.sigmoid(h)
    h = h @ w2 + b2
    mean = jnp.mean(h, axis=-1, keepdims=True)
    var = jnp.mean((h - mean) ** 2, axis=-1, keepdims=True)
    return (h - mean) / jnp.sqrt(var + eps) * g + be


# ------------------------------------------------------------------------------- demo
if __name__ == "__main__":
    init_node_dim = 8
    init_edge_dim = 4
    dim = 128          # multiple of 128 -> lane-dense output stores
    num_nodes = 200    # deliberately not tile-aligned (exercises Pallas tail clipping)
    num_edges = 616

    key = jax.random.PRNGKey(0)
    kx, ke, kn, kp = jax.random.split(key, 4)

    x = jax.random.normal(kx, (num_nodes, init_node_dim), dtype=jnp.float32)
    edge_attr = jax.random.normal(ke, (num_edges, init_edge_dim), dtype=jnp.float32)

    node_params = init_branch_params(kn, init_node_dim, dim)
    edge_params = init_branch_params(kp, init_edge_dim, dim)

    # f32 path: exact match against a plain-JAX reference.
    h_node, h_edge = encoder_forward(x, edge_attr, node_params, edge_params)
    jax.block_until_ready((h_node, h_edge))

    ref_node = _reference(x, node_params)
    ref_edge = _reference(edge_attr, edge_params)
    assert h_node.shape == (num_nodes, dim) and h_edge.shape == (num_edges, dim)
    assert jnp.allclose(h_node, ref_node, atol=1e-4, rtol=1e-4)
    assert jnp.allclose(h_edge, ref_edge, atol=1e-4, rtol=1e-4)

    # bf16-MXU path (recommended on v5e at large N): weights fed to the MXU in bf16,
    # f32 accumulation + f32 SiLU/LayerNorm; I/O stays f32.
    h_node_bf, h_edge_bf = encoder_forward(x, edge_attr, node_params, edge_params,
                                           matmul_dtype=jnp.bfloat16)
    jax.block_until_ready((h_node_bf, h_edge_bf))
    assert jnp.allclose(h_node_bf, ref_node, atol=5e-2, rtol=5e-2)
    assert jnp.allclose(h_edge_bf, ref_edge, atol=5e-2, rtol=5e-2)

    print("KERNEL_OK")
</pallas_src>

<mosaic_0001>
module attributes {stable_mosaic.version = 11 : i64} {
  func.func @_encoder_kernel(%arg0: i32, %arg1: memref<256x8xf32, #tpu.memory_space<vmem>>, %arg2: memref<256x4xf32, #tpu.memory_space<vmem>>, %arg3: memref<8x128xf32, #tpu.memory_space<vmem>>, %arg4: memref<128x128xf32, #tpu.memory_space<vmem>>, %arg5: memref<4x128xf32, #tpu.memory_space<vmem>>, %arg6: memref<4x128xf32, #tpu.memory_space<vmem>>, %arg7: memref<128x128xf32, #tpu.memory_space<vmem>>, %arg8: memref<4x128xf32, #tpu.memory_space<vmem>>, %arg9: memref<256x128xf32, #tpu.memory_space<vmem>>, %arg10: memref<256x128xf32, #tpu.memory_space<vmem>>) attributes {dimension_semantics = [#tpu.dimension_semantics<arbitrary>], iteration_bounds = array<i64: 4>, scalar_prefetch = 0 : i64, scratch_operands = 0 : i64, tpu.core_type = #tpu.core_type<tc>, window_params = [{transform_indices = @transform_0, window_bounds = array<i64: 256, 8>}, {transform_indices = @transform_1, window_bounds = array<i64: 256, 4>}, {pipeline_mode = #tpu.pipeline_mode<synchronous>, transform_indices = @transform_2, window_bounds = array<i64: 8, 128>}, {pipeline_mode = #tpu.pipeline_mode<synchronous>, transform_indices = @transform_3, window_bounds = array<i64: 128, 128>}, {pipeline_mode = #tpu.pipeline_mode<synchronous>, transform_indices = @transform_4, window_bounds = array<i64: 4, 128>}, {pipeline_mode = #tpu.pipeline_mode<synchronous>, transform_indices = @transform_5, window_bounds = array<i64: 4, 128>}, {pipeline_mode = #tpu.pipeline_mode<synchronous>, transform_indices = @transform_6, window_bounds = array<i64: 128, 128>}, {pipeline_mode = #tpu.pipeline_mode<synchronous>, transform_indices = @transform_7, window_bounds = array<i64: 4, 128>}, {transform_indices = @transform_8, window_bounds = array<i64: 256, 128>}, {transform_indices = @transform_9, window_bounds = array<i64: 256, 128>}]} {
    %c1_i32 = arith.constant 1 : i32
    %0 = arith.cmpi slt, %arg0, %c1_i32 : i32
    %1 = arith.extui %0 : i1 to i32
    %c0_i32 = arith.constant 0 : i32
    %2 = arith.cmpi ne, %1, %c0_i32 : i32
    scf.if %2 {
      %c0 = arith.constant 0 : index
      %c0_2 = arith.constant 0 : index
      %6 = vector.load %arg1[%c0, %c0_2] : memref<256x8xf32, #tpu.memory_space<vmem>>, vector<256x8xf32>
      %c0_3 = arith.constant 0 : index
      %c0_4 = arith.constant 0 : index
      %7 = vector.load %arg3[%c0_3, %c0_4] : memref<8x128xf32, #tpu.memory_space<vmem>>, vector<8x128xf32>
      %cst = arith.constant dense<0.000000e+00> : vector<256x128xf32>
      %8 = tpu.matmul %6, %7, %cst {dimension_numbers = #tpu.dot_dimension_numbers<[1], [0], [0], [1], [0, 0, 1, 1], [], []>} : vector<256x8xf32>, vector<8x128xf32>, vector<256x128xf32> -> vector<256x128xf32>
      %c0_5 = arith.constant 0 : index
      %c0_6 = arith.constant 0 : index
      %9 = vector.load %arg5[%c0_5, %c0_6] : memref<4x128xf32, #tpu.memory_space<vmem>>, vector<4x128xf32>
      %10 = vector.extract_strided_slice %9 {offsets = [0, 0], sizes = [1, 128], strides = [1, 1]} : vector<4x128xf32> to vector<1x128xf32>
      %11 = vector.broadcast %10 : vector<1x128xf32> to vector<256x128xf32>
      %12 = arith.addf %8, %11 : vector<256x128xf32>
      %13 = arith.negf %12 : vector<256x128xf32>
      %14 = math.exp %13 : vector<256x128xf32>
      %cst_7 = arith.constant 1.000000e+00 : f32
      %15 = vector.broadcast %cst_7 : f32 to vector<256x128xf32>
      %16 = arith.addf %15, %14 : vector<256x128xf32>
      %17 = arith.divf %15, %16 : vector<256x128xf32>
      %18 = arith.mulf %12, %17 : vector<256x128xf32>
      %c0_8 = arith.constant 0 : index
      %c0_9 = arith.constant 0 : index
      %19 = vector.load %arg4[%c0_8, %c0_9] : memref<128x128xf32, #tpu.memory_space<vmem>>, vector<128x128xf32>
      %cst_10 = arith.constant dense<0.000000e+00> : vector<256x128xf32>
      %20 = tpu.matmul %18, %19, %cst_10 {dimension_numbers = #tpu.dot_dimension_numbers<[1], [0], [0], [1], [0, 0, 1, 1], [], []>} : vector<256x128xf32>, vector<128x128xf32>, vector<256x128xf32> -> vector<256x128xf32>
      %21 = vector.extract_strided_slice %9 {offsets = [1, 0], sizes = [1, 128], strides = [1, 1]} : vector<4x128xf32> to vector<1x128xf32>
      %22 = vector.broadcast %21 : vector<1x128xf32> to vector<256x128xf32>
      %23 = arith.addf %20, %22 : vector<256x128xf32>
      %cst_11 = arith.constant dense<0.000000e+00> : vector<256xf32>
      %24 = vector.multi_reduction <add>, %23, %cst_11 [1] : vector<256x128xf32> to vector<256xf32>
      %25 = vector.shape_cast %24 : vector<256xf32> to vector<256x1xf32>
      %cst_12 = arith.constant 1.280000e+02 : f32
      %26 = vector.broadcast %cst_12 : f32 to vector<256x1xf32>
      %27 = arith.divf %25, %26 : vector<256x1xf32>
      %28 = vector.broadcast %27 : vector<256x1xf32> to vector<256x128xf32>
      %29 = arith.subf %23, %28 : vector<256x128xf32>
      %30 = arith.mulf %29, %29 : vector<256x128xf32>
      %cst_13 = arith.constant dense<0.000000e+00> : vector<256xf32>
      %31 = vector.multi_reduction <add>, %30, %cst_13 [1] : vector<256x128xf32> to vector<256xf32>
      %32 = vector.shape_cast %31 : vector<256xf32> to vector<256x1xf32>
      %cst_14 = arith.constant 1.280000e+02 : f32
      %33 = vector.broadcast %cst_14 : f32 to vector<256x1xf32>
      %34 = arith.divf %32, %33 : vector<256x1xf32>
      %cst_15 = arith.constant 9.99999974E-6 : f32
      %35 = vector.broadcast %cst_15 : f32 to vector<256x1xf32>
      %36 = arith.addf %34, %35 : vector<256x1xf32>
      %37 = math.rsqrt %36 : vector<256x1xf32>
      %38 = vector.broadcast %37 : vector<256x1xf32> to vector<256x128xf32>
      %39 = arith.mulf %29, %38 : vector<256x128xf32>
      %40 = vector.extract_strided_slice %9 {offsets = [2, 0], sizes = [1, 128], strides = [1, 1]} : vector<4x128xf32> to vector<1x128xf32>
      %41 = vector.broadcast %40 : vector<1x128xf32> to vector<256x128xf32>
      %42 = arith.mulf %39, %41 : vector<256x128xf32>
      %43 = vector.extract_strided_slice %9 {offsets = [3, 0], sizes = [1, 128], strides = [1, 1]} : vector<4x128xf32> to vector<1x128xf32>
      %44 = vector.broadcast %43 : vector<1x128xf32> to vector<256x128xf32>
      %45 = arith.addf %42, %44 : vector<256x128xf32>
      %c0_16 = arith.constant 0 : index
      %c0_17 = arith.constant 0 : index
      %46 = vector.load %arg9[%c0_16, %c0_17] : memref<256x128xf32, #tpu.memory_space<vmem>>, vector<256x128xf32>
      tpu.vector_store %arg9[%c0_16, %c0_17], %45 {strides = array<i32>} : memref<256x128xf32, #tpu.memory_space<vmem>>, vector<256x128xf32>,
    } else {
    }
    %c1_i32_0 = arith.constant 1 : i32
    %3 = arith.cmpi sge, %arg0, %c1_i32_0 : i32
    %4 = arith.extui %3 : i1 to i32
    %c0_i32_1 = arith.constant 0 : i32
    %5 = arith.cmpi ne, %4, %c0_i32_1 : i32
    scf.if %5 {
      %c0 = arith.constant 0 : index
      %c0_2 = arith.constant 0 : index
      %6 = vector.load %arg2[%c0, %c0_2] : memref<256x4xf32, #tpu.memory_space<vmem>>, vector<256x4xf32>
      %c0_3 = arith.constant 0 : index
      %c0_4 = arith.constant 0 : index
      %7 = vector.load %arg6[%c0_3, %c0_4] : memref<4x128xf32, #tpu.memory_space<vmem>>, vector<4x128xf32>
      %cst = arith.constant dense<0.000000e+00> : vector<256x128xf32>
      %8 = tpu.matmul %6, %7, %cst {dimension_numbers = #tpu.dot_dimension_numbers<[1], [0], [0], [1], [0, 0, 1, 1], [], []>} : vector<256x4xf32>, vector<4x128xf32>, vector<256x128xf32> -> vector<256x128xf32>
      %c0_5 = arith.constant 0 : index
      %c0_6 = arith.constant 0 : index
      %9 = vector.load %arg8[%c0_5, %c0_6] : memref<4x128xf32, #tpu.memory_space<vmem>>, vector<4x128xf32>
      %10 = vector.extract_strided_slice %9 {offsets = [0, 0], sizes = [1, 128], strides = [1, 1]} : vector<4x128xf32> to vector<1x128xf32>
      %11 = vector.broadcast %10 : vector<1x128xf32> to vector<256x128xf32>
      %12 = arith.addf %8, %11 : vector<256x128xf32>
      %13 = arith.negf %12 : vector<256x128xf32>
      %14 = math.exp %13 : vector<256x128xf32>
      %cst_7 = arith.constant 1.000000e+00 : f32
      %15 = vector.broadcast %cst_7 : f32 to vector<256x128xf32>
      %16 = arith.addf %15, %14 : vector<256x128xf32>
      %17 = arith.divf %15, %16 : vector<256x128xf32>
      %18 = arith.mulf %12, %17 : vector<256x128xf32>
      %c0_8 = arith.constant 0 : index
      %c0_9 = arith.constant 0 : index
      %19 = vector.load %arg7[%c0_8, %c0_9] : memref<128x128xf32, #tpu.memory_space<vmem>>, vector<128x128xf32>
      %cst_10 = arith.constant dense<0.000000e+00> : vector<256x128xf32>
      %20 = tpu.matmul %18, %19, %cst_10 {dimension_numbers = #tpu.dot_dimension_numbers<[1], [0], [0], [1], [0, 0, 1, 1], [], []>} : vector<256x128xf32>, vector<128x128xf32>, vector<256x128xf32> -> vector<256x128xf32>
      %21 = vector.extract_strided_slice %9 {offsets = [1, 0], sizes = [1, 128], strides = [1, 1]} : vector<4x128xf32> to vector<1x128xf32>
      %22 = vector.broadcast %21 : vector<1x128xf32> to vector<256x128xf32>
      %23 = arith.addf %20, %22 : vector<256x128xf32>
      %cst_11 = arith.constant dense<0.000000e+00> : vector<256xf32>
      %24 = vector.multi_reduction <add>, %23, %cst_11 [1] : vector<256x128xf32> to vector<256xf32>
      %25 = vector.shape_cast %24 : vector<256xf32> to vector<256x1xf32>
      %cst_12 = arith.constant 1.280000e+02 : f32
      %26 = vector.broadcast %cst_12 : f32 to vector<256x1xf32>
      %27 = arith.divf %25, %26 : vector<256x1xf32>
      %28 = vector.broadcast %27 : vector<256x1xf32> to vector<256x128xf32>
      %29 = arith.subf %23, %28 : vector<256x128xf32>
      %30 = arith.mulf %29, %29 : vector<256x128xf32>
      %cst_13 = arith.constant dense<0.000000e+00> : vector<256xf32>
      %31 = vector.multi_reduction <add>, %30, %cst_13 [1] : vector<256x128xf32> to vector<256xf32>
      %32 = vector.shape_cast %31 : vector<256xf32> to vector<256x1xf32>
      %cst_14 = arith.constant 1.280000e+02 : f32
      %33 = vector.broadcast %cst_14 : f32 to vector<256x1xf32>
      %34 = arith.divf %32, %33 : vector<256x1xf32>
      %cst_15 = arith.constant 9.99999974E-6 : f32
      %35 = vector.broadcast %cst_15 : f32 to vector<256x1xf32>
      %36 = arith.addf %34, %35 : vector<256x1xf32>
      %37 = math.rsqrt %36 : vector<256x1xf32>
      %38 = vector.broadcast %37 : vector<256x1xf32> to vector<256x128xf32>
      %39 = arith.mulf %29, %38 : vector<256x128xf32>
      %40 = vector.extract_strided_slice %9 {offsets = [2, 0], sizes = [1, 128], strides = [1, 1]} : vector<4x128xf32> to vector<1x128xf32>
      %41 = vector.broadcast %40 : vector<1x128xf32> to vector<256x128xf32>
      %42 = arith.mulf %39, %41 : vector<256x128xf32>
      %43 = vector.extract_strided_slice %9 {offsets = [3, 0], sizes = [1, 128], strides = [1, 1]} : vector<4x128xf32> to vector<1x128xf32>
      %44 = vector.broadcast %43 : vector<1x128xf32> to vector<256x128xf32>
      %45 = arith.addf %42, %44 : vector<256x128xf32>
      %c0_16 = arith.constant 0 : index
      %c0_17 = arith.constant 0 : index
      %46 = vector.load %arg10[%c0_16, %c0_17] : memref<256x128xf32, #tpu.memory_space<vmem>>, vector<256x128xf32>
      tpu.vector_store %arg10[%c0_16, %c0_17], %45 {strides = array<i32>} : memref<256x128xf32, #tpu.memory_space<vmem>>, vector<256x128xf32>,
    } else {
    }
    return
  }
  func.func @transform_0(%arg0: i32) -> (i32, i32) {
    %c0_i32 = arith.constant 0 : i32
    %0 = arith.minsi %arg0, %c0_i32 : i32
    %c0_i32_0 = arith.constant 0 : i32
    %c0_i32_1 = arith.constant 0 : i32
    return %0, %c0_i32_0 : i32, i32
  }
  func.func @transform_1(%arg0: i32) -> (i32, i32) {
    %c1_i32 = arith.constant 1 : i32
    %0 = arith.subi %arg0, %c1_i32 : i32
    %c0_i32 = arith.constant 0 : i32
    %1 = arith.maxsi %0, %c0_i32 : i32
    %c0_i32_0 = arith.constant 0 : i32
    %c0_i32_1 = arith.constant 0 : i32
    return %1, %c0_i32_0 : i32, i32
  }
  func.func @transform_2(%arg0: i32) -> (i32, i32) {
    %c0_i32 = arith.constant 0 : i32
    %c0_i32_0 = arith.constant 0 : i32
    %c0_i32_1 = arith.constant 0 : i32
    return %c0_i32, %c0_i32_0 : i32, i32
  }
  func.func @transform_3(%arg0: i32) -> (i32, i32) {
    %c0_i32 = arith.constant 0 : i32
    %c0_i32_0 = arith.constant 0 : i32
    %c0_i32_1 = arith.constant 0 : i32
    return %c0_i32, %c0_i32_0 : i32, i32
  }
  func.func @transform_4(%arg0: i32) -> (i32, i32) {
    %c0_i32 = arith.constant 0 : i32
    %c0_i32_0 = arith.constant 0 : i32
    %c0_i32_1 = arith.constant 0 : i32
    return %c0_i32, %c0_i32_0 : i32, i32
  }
  func.func @transform_5(%arg0: i32) -> (i32, i32) {
    %c0_i32 = arith.constant 0 : i32
    %c0_i32_0 = arith.constant 0 : i32
    %c0_i32_1 = arith.constant 0 : i32
    return %c0_i32, %c0_i32_0 : i32, i32
  }
  func.func @transform_6(%arg0: i32) -> (i32, i32) {
    %c0_i32 = arith.constant 0 : i32
    %c0_i32_0 = arith.constant 0 : i32
    %c0_i32_1 = arith.constant 0 : i32
    return %c0_i32, %c0_i32_0 : i32, i32
  }
  func.func @transform_7(%arg0: i32) -> (i32, i32) {
    %c0_i32 = arith.constant 0 : i32
    %c0_i32_0 = arith.constant 0 : i32
    %c0_i32_1 = arith.constant 0 : i32
    return %c0_i32, %c0_i32_0 : i32, i32
  }
  func.func @transform_8(%arg0: i32) -> (i32, i32) {
    %c0_i32 = arith.constant 0 : i32
    %0 = arith.minsi %arg0, %c0_i32 : i32
    %c0_i32_0 = arith.constant 0 : i32
    %c0_i32_1 = arith.constant 0 : i32
    return %0, %c0_i32_0 : i32, i32
  }
  func.func @transform_9(%arg0: i32) -> (i32, i32) {
    %c1_i32 = arith.constant 1 : i32
    %0 = arith.subi %arg0, %c1_i32 : i32
    %c0_i32 = arith.constant 0 : i32
    %1 = arith.maxsi %0, %c0_i32 : i32
    %c0_i32_0 = arith.constant 0 : i32
    %c0_i32_1 = arith.constant 0 : i32
    return %1, %c0_i32_0 : i32, i32
  }
}

</mosaic_0001>

<llo_original>
// kernel: tpu_custom_call.1
$region0: #{tpu_custom_call.1}
  #allocation0 [shape = 'u32[]', space=smem, size = 0x4, offset = 0x4, fixed_abs, tag = 'smem constant byte address 0x4 - core index']
  #allocation1 [shape = 'u32[72,128]{1,0:T(1,128)}', space=vmem, size = 0x9000, scoped, tag = 'internal scratch']
  %s0 = inlined_call_operand.vmem [shape: f32[200,8], index: 0, kind: input, shape index: {}]
  %s1 = inlined_call_operand.vmem [shape: f32[616,4], index: 1, kind: input, shape index: {}]
  %s2 = inlined_call_operand.vmem [shape: f32[8,128], index: 2, kind: input, shape index: {}]
  %s3 = inlined_call_operand.vmem [shape: f32[128,128], index: 3, kind: input, shape index: {}]
  %s4 = inlined_call_operand.vmem [shape: f32[4,128], index: 4, kind: input, shape index: {}]
  %s5 = inlined_call_operand.vmem [shape: f32[4,128], index: 5, kind: input, shape index: {}]
  %s6 = inlined_call_operand.vmem [shape: f32[128,128], index: 6, kind: input, shape index: {}]
  %s7 = inlined_call_operand.vmem [shape: f32[4,128], index: 7, kind: input, shape index: {}]
  %s8 = inlined_call_operand.hbm [shape: f32[200,128], index: 8, kind: output, shape index: {0}]
  %s9 = inlined_call_operand.hbm [shape: f32[616,128], index: 9, kind: output, shape index: {1}]
  %10 = xla_tuple %s8, %s9
  %s11 = sld [smem:[#allocation0]]
  $region81: #{tpu_custom_call.1} parent=0
    _
  %s13 = ssub.s32 1, %s11
  %s14 = scalar_select 0, %s13, %s11
  $region1: #{tpu_custom_call.1} parent=0
    #allocation2 [shape = 'u8[262144]{0}', space=vmem, size = 0x40000, scoped, tag = 'output window, operand 0']
    #allocation3 [shape = 's32[2]{0}', space=sflag, size = 0x8, scoped, tag = 'scoped memory for tpu_custom_call.1']
    #allocation4 [shape = 'u8[262144]{0}', space=vmem, size = 0x40000, scoped, tag = 'output window, operand 1']
    #allocation5 [shape = 's32[2]{0}', space=sflag, size = 0x8, scoped, tag = 'scoped memory for tpu_custom_call.1']
    %15 = vsyncpa [#allocation3], 0
    %s16 = scalar_lea.sflag [#allocation3], 1
    %17 = vsyncpa %s16, 0
    %18 = vsyncpa [#allocation5], 0
    %s19 = scalar_lea.sflag [#allocation5], 1
    %20 = vsyncpa %s19, 0
    loop: start=0, step=1, limit=6
    $region2: #{tpu_custom_call.1} parent=1 // loop_pre_header
      _
    $region3: #{tpu_custom_call.1} parent=1 // loop_header
      %s22 = sphi 0, %s26
      %p23 = scmp.ge.s32.totalorder %s22, 6
      %s36 = sphi 0, %s38
      %s39 = sphi 0, %s36
      %s40 = sphi 0, %s39
      %s56 = sphi 0, %s40
      %s68 = sphi 0, %s70
      %s71 = sphi 0, %s68
      %s72 = sphi 0, %s71
      %s88 = sphi 0, %s72
      %s92 = sphi 0, %s92
      %s94 = sphi 0, %s92
      %s95 = sphi 0, %s94
      %s109 = sphi 0, %s95
      %s113 = sphi 0, %s113
      %s115 = sphi 0, %s113
      %s116 = sphi 0, %s115
      %s130 = sphi 0, %s116
      %s134 = sphi 0, %s134
      %s136 = sphi 0, %s134
      %s137 = sphi 0, %s136
      %s151 = sphi 0, %s137
      %s155 = sphi 0, %s155
      %s157 = sphi 0, %s155
      %s158 = sphi 0, %s157
      %s172 = sphi 0, %s158
      %s176 = sphi 0, %s176
      %s178 = sphi 0, %s176
      %s179 = sphi 0, %s178
      %s193 = sphi 0, %s179
      %s197 = sphi 0, %s197
      %s199 = sphi 0, %s197
      %s200 = sphi 0, %s199
      %s214 = sphi 0, %s200
      %s224 = sphi 0, %s226
      %s227 = sphi 0, %s224
      %s228 = sphi 0, %s227
      %s244 = sphi 0, %s228
      %s256 = sphi 0, %s258
      %s259 = sphi 0, %s256
      %s260 = sphi 0, %s259
      %s276 = sphi 0, %s260
    $region4: #{tpu_custom_call.1} parent=1 // loop_header_branch
      %25 = sbr.rel (%p23) target = $region8
    $region5: #{tpu_custom_call.1} parent=1 // loop_body
      %s27 = ssub.s32 %s22, 1
      %s28 = ssub.s32 %s22, 2
      %s29 = sadd.s32 %s22, 1
      %p30 = scmp.lt.s32.totalorder %s22, 0
      %s31 = scalar_select %p30, %s22, 0
      %p32 = scmp.lt.s32.totalorder %s29, 0
      %s33 = scalar_select %p32, %s29, 0
      %s34 = ssub.s32 %s31, %s33
      %p35 = scmp.eq.s32.totalorder %s34, 0
      %s37 = sadd.s32 %s36, 1
      %s38 = scalar_select %p35, %s36, %s37
      %p41 = pneg %p35
      %p42 = scmp.eq.s32.totalorder %s22, 3
      %p43 = por %p41, %p42
      %p44 = scmp.ne.s32.totalorder %s36, %s39
      %p45 = scmp.eq.s32.totalorder %s22, 0
      %p46 = por %p44, %p45
      %p47 = scmp.ne.s32.totalorder %s36, %s39
      %p48 = scmp.eq.s32.totalorder %s27, 3
      %p49 = por %p47, %p48
      %p50 = scmp.ne.s32.totalorder %s39, %s40
      %p51 = scmp.eq.s32.totalorder %s27, 0
      %p52 = por %p50, %p51
      %p53 = scmp.ne.s32.totalorder %s39, %s40
      %p54 = scmp.eq.s32.totalorder %s28, 3
      %p55 = por %p53, %p54
      %p57 = scmp.ne.s32.totalorder %s40, %s56
      %p58 = scmp.eq.s32.totalorder %s28, 0
      %p59 = por %p57, %p58
      %s60 = ssub.s32 %s22, 1
      %p61 = scmp.gt.s32.totalorder %s60, 0
      %s62 = scalar_select %p61, %s60, 0
      %s63 = ssub.s32 %s29, 1
      %p64 = scmp.gt.s32.totalorder %s63, 0
      %s65 = scalar_select %p64, %s63, 0
      %s66 = ssub.s32 %s62, %s65
      %p67 = scmp.eq.s32.totalorder %s66, 0
      %s69 = sadd.s32 %s68, 1
      %s70 = scalar_select %p67, %s68, %s69
      %p73 = pneg %p67
      %p74 = scmp.eq.s32.totalorder %s22, 3
      %p75 = por %p73, %p74
      %p76 = scmp.ne.s32.totalorder %s68, %s71
      %p77 = scmp.eq.s32.totalorder %s22, 0
      %p78 = por %p76, %p77
      %p79 = scmp.ne.s32.totalorder %s68, %s71
      %p80 = scmp.eq.s32.totalorder %s27, 3
      %p81 = por %p79, %p80
      %p82 = scmp.ne.s32.totalorder %s71, %s72
      %p83 = scmp.eq.s32.totalorder %s27, 0
      %p84 = por %p82, %p83
      %p85 = scmp.ne.s32.totalorder %s71, %s72
      %p86 = scmp.eq.s32.totalorder %s28, 3
      %p87 = por %p85, %p86
      %p89 = scmp.ne.s32.totalorder %s72, %s88
      %p90 = scmp.eq.s32.totalorder %s28, 0
      %p91 = por %p89, %p90
      %s93 = sadd.s32 %s92, 1
      %p96 = scmp.eq.s32.totalorder %s22, 3
      %p97 = scmp.ne.s32.totalorder %s92, %s94
      %p98 = scmp.eq.s32.totalorder %s22, 0
      %p99 = por %p97, %p98
      %p100 = scmp.ne.s32.totalorder %s92, %s94
      %p101 = scmp.eq.s32.totalorder %s27, 3
      %p102 = por %p100, %p101
      %p103 = scmp.ne.s32.totalorder %s94, %s95
      %p104 = scmp.eq.s32.totalorder %s27, 0
      %p105 = por %p103, %p104
      %p106 = scmp.ne.s32.totalorder %s94, %s95
      %p107 = scmp.eq.s32.totalorder %s28, 3
      %p108 = por %p106, %p107
      %p110 = scmp.ne.s32.totalorder %s95, %s109
      %p111 = scmp.eq.s32.totalorder %s28, 0
      %p112 = por %p110, %p111
      %s114 = sadd.s32 %s113, 1
      %p117 = scmp.eq.s32.totalorder %s22, 3
      %p118 = scmp.ne.s32.totalorder %s113, %s115
      %p119 = scmp.eq.s32.totalorder %s22, 0
      %p120 = por %p118, %p119
      %p121 = scmp.ne.s32.totalorder %s113, %s115
      %p122 = scmp.eq.s32.totalorder %s27, 3
      %p123 = por %p121, %p122
      %p124 = scmp.ne.s32.totalorder %s115, %s116
      %p125 = scmp.eq.s32.totalorder %s27, 0
      %p126 = por %p124, %p125
      %p127 = scmp.ne.s32.totalorder %s115, %s116
      %p128 = scmp.eq.s32.totalorder %s28, 3
      %p129 = por %p127, %p128
      %p131 = scmp.ne.s32.totalorder %s116, %s130
      %p132 = scmp.eq.s32.totalorder %s28, 0
      %p133 = por %p131, %p132
      %s135 = sadd.s32 %s134, 1
      %p138 = scmp.eq.s32.totalorder %s22, 3
      %p139 = scmp.ne.s32.totalorder %s134, %s136
      %p140 = scmp.eq.s32.totalorder %s22, 0
      %p141 = por %p139, %p140
      %p142 = scmp.ne.s32.totalorder %s134, %s136
      %p143 = scmp.eq.s32.totalorder %s27, 3
      %p144 = por %p142, %p143
      %p145 = scmp.ne.s32.totalorder %s136, %s137
      %p146 = scmp.eq.s32.totalorder %s27, 0
      %p147 = por %p145, %p146
      %p148 = scmp.ne.s32.totalorder %s136, %s137
      %p149 = scmp.eq.s32.totalorder %s28, 3
      %p150 = por %p148, %p149
      %p152 = scmp.ne.s32.totalorder %s137, %s151
      %p153 = scmp.eq.s32.totalorder %s28, 0
      %p154 = por %p152, %p153
      %s156 = sadd.s32 %s155, 1
      %p159 = scmp.eq.s32.totalorder %s22, 3
      %p160 = scmp.ne.s32.totalorder %s155, %s157
      %p161 = scmp.eq.s32.totalorder %s22, 0
      %p162 = por %p160, %p161
      %p163 = scmp.ne.s32.totalorder %s155, %s157
      %p164 = scmp.eq.s32.totalorder %s27, 3
      %p165 = por %p163, %p164
      %p166 = scmp.ne.s32.totalorder %s157, %s158
      %p167 = scmp.eq.s32.totalorder %s27, 0
      %p168 = por %p166, %p167
      %p169 = scmp.ne.s32.totalorder %s157, %s158
      %p170 = scmp.eq.s32.totalorder %s28, 3
      %p171 = por %p169, %p170
      %p173 = scmp.ne.s32.totalorder %s158, %s172
      %p174 = scmp.eq.s32.totalorder %s28, 0
      %p175 = por %p173, %p174
      %s177 = sadd.s32 %s176, 1
      %p180 = scmp.eq.s32.totalorder %s22, 3
      %p181 = scmp.ne.s32.totalorder %s176, %s178
      %p182 = scmp.eq.s32.totalorder %s22, 0
      %p183 = por %p181, %p182
      %p184 = scmp.ne.s32.totalorder %s176, %s178
      %p185 = scmp.eq.s32.totalorder %s27, 3
      %p186 = por %p184, %p185
      %p187 = scmp.ne.s32.totalorder %s178, %s179
      %p188 = scmp.eq.s32.totalorder %s27, 0
      %p189 = por %p187, %p188
      %p190 = scmp.ne.s32.totalorder %s178, %s179
      %p191 = scmp.eq.s32.totalorder %s28, 3
      %p192 = por %p190, %p191
      %p194 = scmp.ne.s32.totalorder %s179, %s193
      %p195 = scmp.eq.s32.totalorder %s28, 0
      %p196 = por %p194, %p195
      %s198 = sadd.s32 %s197, 1
      %p201 = scmp.eq.s32.totalorder %s22, 3
      %p202 = scmp.ne.s32.totalorder %s197, %s199
      %p203 = scmp.eq.s32.totalorder %s22, 0
      %p204 = por %p202, %p203
      %p205 = scmp.ne.s32.totalorder %s197, %s199
      %p206 = scmp.eq.s32.totalorder %s27, 3
      %p207 = por %p205, %p206
      %p208 = scmp.ne.s32.totalorder %s199, %s200
      %p209 = scmp.eq.s32.totalorder %s27, 0
      %p210 = por %p208, %p209
      %p211 = scmp.ne.s32.totalorder %s199, %s200
      %p212 = scmp.eq.s32.totalorder %s28, 3
      %p213 = por %p211, %p212
      %p215 = scmp.ne.s32.totalorder %s200, %s214
      %p216 = scmp.eq.s32.totalorder %s28, 0
      %p217 = por %p215, %p216
      %p218 = scmp.lt.s32.totalorder %s22, 0
      %s219 = scalar_select %p218, %s22, 0
      %p220 = scmp.lt.s32.totalorder %s29, 0
      %s221 = scalar_select %p220, %s29, 0
      %s222 = ssub.s32 %s219, %s221
      %p223 = scmp.eq.s32.totalorder %s222, 0
      %s225 = sadd.s32 %s224, 1
      %s226 = scalar_select %p223, %s224, %s225
      %p229 = pneg %p223
      %p230 = scmp.eq.s32.totalorder %s22, 3
      %p231 = por %p229, %p230
      %p232 = scmp.ne.s32.totalorder %s224, %s227
      %p233 = scmp.eq.s32.totalorder %s22, 0
      %p234 = por %p232, %p233
      %p235 = scmp.ne.s32.totalorder %s224, %s227
      %p236 = scmp.eq.s32.totalorder %s27, 3
      %p237 = por %p235, %p236
      %p238 = scmp.ne.s32.totalorder %s227, %s228
      %p239 = scmp.eq.s32.totalorder %s27, 0
      %p240 = por %p238, %p239
      %p241 = scmp.ne.s32.totalorder %s227, %s228
      %p242 = scmp.eq.s32.totalorder %s28, 3
      %p243 = por %p241, %p242
      %p245 = scmp.ne.s32.totalorder %s228, %s244
      %p246 = scmp.eq.s32.totalorder %s28, 0
      %p247 = por %p245, %p246
      %s248 = ssub.s32 %s22, 1
      %p249 = scmp.gt.s32.totalorder %s248, 0
      %s250 = scalar_select %p249, %s248, 0
      %s251 = ssub.s32 %s29, 1
      %p252 = scmp.gt.s32.totalorder %s251, 0
      %s253 = scalar_select %p252, %s251, 0
      %s254 = ssub.s32 %s250, %s253
      %p255 = scmp.eq.s32.totalorder %s254, 0
      %s257 = sadd.s32 %s256, 1
      %s258 = scalar_select %p255, %s256, %s257
      %p261 = pneg %p255
      %p262 = scmp.eq.s32.totalorder %s22, 3
      %p263 = por %p261, %p262
      %p264 = scmp.ne.s32.totalorder %s256, %s259
      %p265 = scmp.eq.s32.totalorder %s22, 0
      %p266 = por %p264, %p265
      %p267 = scmp.ne.s32.totalorder %s256, %s259
      %p268 = scmp.eq.s32.totalorder %s27, 3
      %p269 = por %p267, %p268
      %p270 = scmp.ne.s32.totalorder %s259, %s260
      %p271 = scmp.eq.s32.totalorder %s27, 0
      %p272 = por %p270, %p271
      %p273 = scmp.ne.s32.totalorder %s259, %s260
      %p274 = scmp.eq.s32.totalorder %s28, 3
      %p275 = por %p273, %p274
      %p277 = scmp.ne.s32.totalorder %s260, %s276
      %p278 = scmp.eq.s32.totalorder %s28, 0
      %p279 = por %p277, %p278
      %p280 = scmp.le.s32.totalorder 1, %s22
      %p281 = scmp.lt.s32.totalorder %s22, 5
      %p282 = pnand %p280, %p281
      %p283 = pneg %p282
      // Predicated region
      $region9: #{tpu_custom_call.1} parent=5 // pred_check
        _
      $region10: #{tpu_custom_call.1} parent=5 // pred_check_branch
        %285 = sbr.rel (%p282) target = $region12
      $region11: #{tpu_custom_call.1} parent=5 // pred_region
        %s286 = ssub.s32 %s22, 1
        // Predicated region
        $region13: #{tpu_custom_call.1} parent=11 // pred_check
          %p287 = pneg %p105
        $region14: #{tpu_custom_call.1} parent=11 // pred_check_branch
          %289 = sbr.rel (%p287) target = $region16
        $region15: #{tpu_custom_call.1} parent=11 // pred_region
          _
        $region16: #{tpu_custom_call.1} parent=11 // pred_fallthru
          _
        // Predicated region
        $region17: #{tpu_custom_call.1} parent=11 // pred_check
          %p290 = pneg %p126
        $region18: #{tpu_custom_call.1} parent=11 // pred_check_branch
          %292 = sbr.rel (%p290) target = $region20
        $region19: #{tpu_custom_call.1} parent=11 // pred_region
          _
        $region20: #{tpu_custom_call.1} parent=11 // pred_fallthru
          _
        // Predicated region
        $region21: #{tpu_custom_call.1} parent=11 // pred_check
          %p293 = pneg %p147
        $region22: #{tpu_custom_call.1} parent=11 // pred_check_branch
          %295 = sbr.rel (%p293) target = $region24
        $region23: #{tpu_custom_call.1} parent=11 // pred_region
          _
        $region24: #{tpu_custom_call.1} parent=11 // pred_fallthru
          _
        // Predicated region
        $region25: #{tpu_custom_call.1} parent=11 // pred_check
          %p296 = pneg %p168
        $region26: #{tpu_custom_call.1} parent=11 // pred_check_branch
          %298 = sbr.rel (%p296) target = $region28
        $region27: #{tpu_custom_call.1} parent=11 // pred_region
          _
        $region28: #{tpu_custom_call.1} parent=11 // pred_fallthru
          _
        // Predicated region
        $region29: #{tpu_custom_call.1} parent=11 // pred_check
          %p299 = pneg %p189
        $region30: #{tpu_custom_call.1} parent=11 // pred_check_branch
          %301 = sbr.rel (%p299) target = $region32
        $region31: #{tpu_custom_call.1} parent=11 // pred_region
          _
        $region32: #{tpu_custom_call.1} parent=11 // pred_fallthru
          _
        // Predicated region
        $region33: #{tpu_custom_call.1} parent=11 // pred_check
          %p302 = pneg %p210
        $region34: #{tpu_custom_call.1} parent=11 // pred_check_branch
          %304 = sbr.rel (%p302) target = $region36
        $region35: #{tpu_custom_call.1} parent=11 // pred_region
          _
        $region36: #{tpu_custom_call.1} parent=11 // pred_fallthru
          _
      $region12: #{tpu_custom_call.1} parent=5 // pred_fallthru
        _
      %p305 = scmp.lt.s32.totalorder %s22, 4
      // Predicated region
      $region37: #{tpu_custom_call.1} parent=5 // pred_check
        %p306 = pneg %p305
      $region38: #{tpu_custom_call.1} parent=5 // pred_check_branch
        %308 = sbr.rel (%p306) target = $region40
      $region39: #{tpu_custom_call.1} parent=5 // pred_region
        // Predicated region
        $region41: #{tpu_custom_call.1} parent=39 // pred_check
          %p309 = pneg %p46
        $region42: #{tpu_custom_call.1} parent=39 // pred_check_branch
          %311 = sbr.rel (%p309) target = $region44
        $region43: #{tpu_custom_call.1} parent=39 // pred_region
          %p312 = scmp.lt.s32.totalorder %s22, 0
          %s313 = scalar_select %p312, %s22, 0
          %s314 = smul.u32 32, %s313
          %s315 = ssub.s32 25, %s314
          %s316 = smul.u32 8, %s315
          %p317 = scmp.lt.s32.totalorder %s314, 24
          %s318 = scalar_select %p317, %s314, 24
          %s319 = smul.addr %s318, 8
          %s320 = scalar_lea.vmem %s0, %s319
          %p321 = scmp.lt.s32.totalorder %s22, 0
          %s322 = scalar_select %p321, %s22, 0
          %s323 = smul.u32 32, %s322
          %s324 = ssub.s32 25, %s323
          %s325 = smul.u32 8, %s324
        $region44: #{tpu_custom_call.1} parent=39 // pred_fallthru
          _
        // Predicated region
        $region45: #{tpu_custom_call.1} parent=39 // pred_check
          %p326 = pneg %p78
        $region46: #{tpu_custom_call.1} parent=39 // pred_check_branch
          %328 = sbr.rel (%p326) target = $region48
        $region47: #{tpu_custom_call.1} parent=39 // pred_region
          %s329 = ssub.s32 %s22, 1
          %p330 = scmp.gt.s32.totalorder %s329, 0
          %s331 = scalar_select %p330, %s329, 0
          %s332 = smul.u32 32, %s331
          %s333 = ssub.s32 77, %s332
          %p334 = scmp.lt.s32.totalorder %s333, 32
          %s335 = scalar_select %p334, %s333, 32
          %s336 = smul.u32 8, %s335
          %p337 = scmp.lt.s32.totalorder %s332, 76
          %s338 = scalar_select %p337, %s332, 76
          %s339 = smul.addr %s338, 8
          %s340 = scalar_lea.vmem %s1, %s339
          %s341 = ssub.s32 %s22, 1
          %p342 = scmp.gt.s32.totalorder %s341, 0
          %s343 = scalar_select %p342, %s341, 0
          %s344 = smul.u32 32, %s343
          %s345 = ssub.s32 77, %s344
          %p346 = scmp.lt.s32.totalorder %s345, 32
          %s347 = scalar_select %p346, %s345, 32
          %s348 = smul.u32 8, %s347
        $region48: #{tpu_custom_call.1} parent=39 // pred_fallthru
          _
      $region40: #{tpu_custom_call.1} parent=5 // pred_fallthru
        _
      %p349 = scmp.le.s32.totalorder 1, %s22
      %p350 = scmp.lt.s32.totalorder %s22, 5
      %p351 = pnand %p349, %p350
      %p352 = pneg %p351
      // Predicated region
      $region49: #{tpu_custom_call.1} parent=5 // pred_check
        _
      $region50: #{tpu_custom_call.1} parent=5 // pred_check_branch
        %354 = sbr.rel (%p351) target = $region52
      $region51: #{tpu_custom_call.1} parent=5 // pred_region
        %s355 = ssub.s32 %s22, 1
        %p356 = scmp.lt.s32.totalorder %s27, 0
        %s357 = scalar_select %p356, %s27, 0
        %s358 = smul.u32 32, %s357
        %s359 = ssub.s32 25, %s358
        %s360 = smul.u32 8, %s359
        %p361 = scmp.lt.s32.totalorder %s358, 24
        %s362 = scalar_select %p361, %s358, 24
        %s363 = smul.addr %s362, 8
        %s364 = scalar_lea.vmem %s0, %s363
        %p365 = pneg %p52
        %p366 = pneg %p49
        %s367 = ssub.s32 %s27, 1
        %p368 = scmp.gt.s32.totalorder %s367, 0
        %s369 = scalar_select %p368, %s367, 0
        %s370 = smul.u32 32, %s369
        %s371 = ssub.s32 77, %s370
        %p372 = scmp.lt.s32.totalorder %s371, 32
        %s373 = scalar_select %p372, %s371, 32
        %s374 = smul.u32 8, %s373
        %p375 = scmp.lt.s32.totalorder %s370, 76
        %s376 = scalar_select %p375, %s370, 76
        %s377 = smul.addr %s376, 8
        %s378 = scalar_lea.vmem %s1, %s377
        %p379 = pneg %p84
        %p380 = pneg %p81
        %p381 = pneg %p105
        %p382 = pneg %p102
        %p383 = pneg %p126
        %p384 = pneg %p123
        %p385 = pneg %p147
        %p386 = pneg %p144
        %p387 = pneg %p168
        %p388 = pneg %p165
        %p389 = pneg %p189
        %p390 = pneg %p186
        %p391 = pneg %p210
        %p392 = pneg %p207
        %p393 = pneg %p240
        %p394 = pneg %p237
        %s395 = sand.u32 %s227, 1
        %s396 = scalar_lea.sflag [#allocation3], %s395
        %s397 = sand.u32 %s227, 1
        %s398 = smul.addr %s397, 256
        %s399 = scalar_lea.vmem [#allocation2], %s398
        %p400 = pneg %p272
        %p401 = pneg %p269
        %s402 = sand.u32 %s259, 1
        %s403 = scalar_lea.sflag [#allocation5], %s402
        %s404 = sand.u32 %s259, 1
        %s405 = smul.addr %s404, 256
        %s406 = scalar_lea.vmem [#allocation4], %s405
        %p407 = scmp.lt.s32.totalorder %s27, 0
        %s408 = scalar_select %p407, %s27, 0
        %s409 = smul.u32 32, %s408
        %s410 = ssub.s32 25, %s409
        %s411 = smul.u32 8, %s410
        %p412 = scmp.lt.s32.totalorder %s409, 24
        %s413 = scalar_select %p412, %s409, 24
        %s414 = smul.addr %s413, 8
        %s415 = scalar_lea.vmem %s0, %s414
        %p416 = scmp.lt.s32.totalorder %s27, 0
        %s417 = scalar_select %p416, %s27, 0
        %s418 = smul.u32 32, %s417
        %s419 = ssub.s32 25, %s418
        %s420 = smul.u32 8, %s419
        %s421 = ssub.s32 %s27, 1
        %p422 = scmp.gt.s32.totalorder %s421, 0
        %s423 = scalar_select %p422, %s421, 0
        %s424 = smul.u32 32, %s423
        %s425 = ssub.s32 77, %s424
        %p426 = scmp.lt.s32.totalorder %s425, 32
        %s427 = scalar_select %p426, %s425, 32
        %s428 = smul.u32 8, %s427
        %p429 = scmp.lt.s32.totalorder %s424, 76
        %s430 = scalar_select %p429, %s424, 76
        %s431 = smul.addr %s430, 8
        %s432 = scalar_lea.vmem %s1, %s431
        %s433 = ssub.s32 %s27, 1
        %p434 = scmp.gt.s32.totalorder %s433, 0
        %s435 = scalar_select %p434, %s433, 0
        %s436 = smul.u32 32, %s435
        %s437 = ssub.s32 77, %s436
        %p438 = scmp.lt.s32.totalorder %s437, 32
        %s439 = scalar_select %p438, %s437, 32
        %s440 = smul.u32 8, %s439
        %p441 = scmp.lt.s32.totalorder %s27, 0
        %s442 = scalar_select %p441, %s27, 0
        %s443 = smul.u32 32, %s442
        %s444 = ssub.s32 25, %s443
        %s445 = smul.u32 8, %s444
        %s446 = ssub.s32 %s27, 1
        %p447 = scmp.gt.s32.totalorder %s446, 0
        %s448 = scalar_select %p447, %s446, 0
        %s449 = smul.u32 32, %s448
        %s450 = ssub.s32 77, %s449
        %p451 = scmp.lt.s32.totalorder %s450, 32
        %s452 = scalar_select %p451, %s450, 32
        %s453 = smul.u32 8, %s452
        %p454 = scmp.lt.s32.totalorder %s27, 1
        // Predicated region
        $region53: #{tpu_custom_call.1} parent=51 // pred_check
          %p455 = pneg %p454
        $region54: #{tpu_custom_call.1} parent=51 // pred_check_branch
          %457 = sbr.rel (%p455) target = $region56
        $region55: #{tpu_custom_call.1} parent=51 // pred_region
          %v458 = vld [vmem:[%s415] sm:$0xff]
          %v459 = vld [vmem:[%s415 + $0x8] sm:$0xff]
          %v460 = vld [vmem:[%s415 + $0x10] sm:$0xff]
          %v461 = vld [vmem:[%s415 + $0x18] sm:$0xff]
          %v462 = vld [vmem:[%s415 + $0x20] sm:$0xff]
          %v463 = vld [vmem:[%s415 + $0x28] sm:$0xff]
          %v464 = vld [vmem:[%s415 + $0x30] sm:$0xff]
          %v465 = vld [vmem:[%s415 + $0x38] sm:$0xff]
          %v466 = vld [vmem:[%s415 + $0x40] sm:$0xff]
          %v467 = vld [vmem:[%s415 + $0x48] sm:$0xff]
          %v468 = vld [vmem:[%s415 + $0x50] sm:$0xff]
          %v469 = vld [vmem:[%s415 + $0x58] sm:$0xff]
          %v470 = vld [vmem:[%s415 + $0x60] sm:$0xff]
          %v471 = vld [vmem:[%s415 + $0x68] sm:$0xff]
          %v472 = vld [vmem:[%s415 + $0x70] sm:$0xff]
          %v473 = vld [vmem:[%s415 + $0x78] sm:$0xff]
          %v474 = vld [vmem:[%s415 + $0x80] sm:$0xff]
          %v475 = vld [vmem:[%s415 + $0x88] sm:$0xff]
          %v476 = vld [vmem:[%s415 + $0x90] sm:$0xff]
          %v477 = vld [vmem:[%s415 + $0x98] sm:$0xff]
          %v478 = vld [vmem:[%s415 + $0xa0] sm:$0xff]
          %v479 = vld [vmem:[%s415 + $0xa8] sm:$0xff]
          %v480 = vld [vmem:[%s415 + $0xb0] sm:$0xff]
          %v481 = vld [vmem:[%s415 + $0xb8] sm:$0xff]
          %v482 = vld [vmem:[%s415 + $0xc0] sm:$0xff]
          %v483 = vld [vmem:[%s415 + $0xc8] sm:$0xff]
          %v484 = vld [vmem:[%s415 + $0xd0] sm:$0xff]
          %v485 = vld [vmem:[%s415 + $0xd8] sm:$0xff]
          %v486 = vld [vmem:[%s415 + $0xe0] sm:$0xff]
          %v487 = vld [vmem:[%s415 + $0xe8] sm:$0xff]
          %v488 = vld [vmem:[%s415 + $0xf0] sm:$0xff]
          %v489 = vld [vmem:[%s415 + $0xf8] sm:$0xff]
          %v490 = vld [vmem:[%s2] sm:$0xff]
          %v491 = vld [vmem:[%s4] sm:$0xf]
          %v492 = vperm.slane %v491, 0
          %vm493 = vcmask 64512
          %v495 = vsel %vm493, %v458, 0
          %v498 = vsel %vm493, %v459, 0
          %v501 = vsel %vm493, %v460, 0
          %v504 = vsel %vm493, %v461, 0
          %v507 = vsel %vm493, %v462, 0
          %v510 = vsel %vm493, %v463, 0
          %v513 = vsel %vm493, %v464, 0
          %v516 = vsel %vm493, %v465, 0
          %v519 = vsel %vm493, %v466, 0
          %v522 = vsel %vm493, %v467, 0
          %v525 = vsel %vm493, %v468, 0
          %v528 = vsel %vm493, %v469, 0
          %v531 = vsel %vm493, %v470, 0
          %v534 = vsel %vm493, %v471, 0
          %v537 = vsel %vm493, %v472, 0
          %v540 = vsel %vm493, %v473, 0
          %v543 = vsel %vm493, %v474, 0
          %v546 = vsel %vm493, %v475, 0
          %v549 = vsel %vm493, %v476, 0
          %v552 = vsel %vm493, %v477, 0
          %v555 = vsel %vm493, %v478, 0
          %v558 = vsel %vm493, %v479, 0
          %v561 = vsel %vm493, %v480, 0
          %v564 = vsel %vm493, %v481, 0
          %v567 = vsel %vm493, %v482, 0
          %v570 = vsel %vm493, %v483, 0
          %v573 = vsel %vm493, %v484, 0
          %v576 = vsel %vm493, %v485, 0
          %v579 = vsel %vm493, %v486, 0
          %v582 = vsel %vm493, %v487, 0
          %v585 = vsel %vm493, %v488, 0
          %v588 = vsel %vm493, %v489, 0
          %590 = vmatpush.msra.mxu0 0.0
          %591 = vmatpush.msra.mxu0 0.0
          %592 = vmatpush.msra.mxu0 0.0
          %593 = vmatpush.msra.mxu0 0.0
          %594 = vmatpush.msra.mxu0 0.0
          %595 = vmatpush.msra.mxu0 0.0
          %596 = vmatpush.msra.mxu0 0.0
          %597 = vmatpush.msra.mxu0 0.0
          %598 = vmatpush.msra.mxu0 0.0
          %599 = vmatpush.msra.mxu0 0.0
          %600 = vmatpush.msra.mxu0 0.0
          %601 = vmatpush.msra.mxu0 0.0
          %602 = vmatpush.msra.mxu0 0.0
          %603 = vmatpush.msra.mxu0 0.0
          %604 = vmatpush.msra.mxu0 0.0
          %605 = vmatpush.msra.mxu0 %v490
          %606 = vmatmul.f32.gmra.mxu0 %v495
          %v607 = vpop.f32.mrf.mxu0
          %v608 = vadd.f32 %v492, %v607
          %609 = vmatmul.f32.gmra.mxu0 %v498
          %v610 = vpop.f32.mrf.mxu0
          %v611 = vadd.f32 %v492, %v610
          %612 = vmatmul.f32.gmra.mxu0 %v501
          %v613 = vpop.f32.mrf.mxu0
          %v614 = vadd.f32 %v492, %v613
          %615 = vmatmul.f32.gmra.mxu0 %v504
          %v616 = vpop.f32.mrf.mxu0
          %v617 = vadd.f32 %v492, %v616
          %618 = vmatmul.f32.gmra.mxu0 %v507
          %v619 = vpop.f32.mrf.mxu0
          %v620 = vadd.f32 %v492, %v619
          %621 = vmatmul.f32.gmra.mxu0 %v510
          %v622 = vpop.f32.mrf.mxu0
          %v623 = vadd.f32 %v492, %v622
          %624 = vmatmul.f32.gmra.mxu0 %v513
          %v625 = vpop.f32.mrf.mxu0
          %v626 = vadd.f32 %v492, %v625
          %627 = vmatmul.f32.gmra.mxu0 %v516
          %v628 = vpop.f32.mrf.mxu0
          %v629 = vadd.f32 %v492, %v628
          %630 = vmatmul.f32.gmra.mxu0 %v519
          %v631 = vpop.f32.mrf.mxu0
          %v632 = vadd.f32 %v492, %v631
          %633 = vmatmul.f32.gmra.mxu0 %v522
          %v634 = vpop.f32.mrf.mxu0
          %v635 = vadd.f32 %v492, %v634
          %636 = vmatmul.f32.gmra.mxu0 %v525
          %v637 = vpop.f32.mrf.mxu0
          %v638 = vadd.f32 %v492, %v637
          %639 = vmatmul.f32.gmra.mxu0 %v528
          %v640 = vpop.f32.mrf.mxu0
          %v641 = vadd.f32 %v492, %v640
          %642 = vmatmul.f32.gmra.mxu0 %v531
          %v643 = vpop.f32.mrf.mxu0
          %v644 = vadd.f32 %v492, %v643
          %645 = vmatmul.f32.gmra.mxu0 %v534
          %v646 = vpop.f32.mrf.mxu0
          %v647 = vadd.f32 %v492, %v646
          %648 = vmatmul.f32.gmra.mxu0 %v537
          %v649 = vpop.f32.mrf.mxu0
          %v650 = vadd.f32 %v492, %v649
          %651 = vmatmul.f32.gmra.mxu0 %v540
          %v652 = vpop.f32.mrf.mxu0
          %v653 = vadd.f32 %v492, %v652
          %654 = vmatmul.f32.gmra.mxu0 %v543
          %v655 = vpop.f32.mrf.mxu0
          %v656 = vadd.f32 %v492, %v655
          %657 = vmatmul.f32.gmra.mxu0 %v546
          %v658 = vpop.f32.mrf.mxu0
          %v659 = vadd.f32 %v492, %v658
          %660 = vmatmul.f32.gmra.mxu0 %v549
          %v661 = vpop.f32.mrf.mxu0
          %v662 = vadd.f32 %v492, %v661
          %663 = vmatmul.f32.gmra.mxu0 %v552
          %v664 = vpop.f32.mrf.mxu0
          %v665 = vadd.f32 %v492, %v664
          %666 = vmatmul.f32.gmra.mxu0 %v555
          %v667 = vpop.f32.mrf.mxu0
          %v668 = vadd.f32 %v492, %v667
          %669 = vmatmul.f32.gmra.mxu0 %v558
          %v670 = vpop.f32.mrf.mxu0
          %v671 = vadd.f32 %v492, %v670
          %672 = vmatmul.f32.gmra.mxu0 %v561
          %v673 = vpop.f32.mrf.mxu0
          %v674 = vadd.f32 %v492, %v673
          %675 = vmatmul.f32.gmra.mxu0 %v564
          %v676 = vpop.f32.mrf.mxu0
          %v677 = vadd.f32 %v492, %v676
          %678 = vmatmul.f32.gmra.mxu0 %v567
          %v679 = vpop.f32.mrf.mxu0
          %v680 = vadd.f32 %v492, %v679
          %681 = vmatmul.f32.gmra.mxu0 %v570
          %v682 = vpop.f32.mrf.mxu0
          %v683 = vadd.f32 %v492, %v682
          %684 = vmatmul.f32.gmra.mxu0 %v573
          %v685 = vpop.f32.mrf.mxu0
          %v686 = vadd.f32 %v492, %v685
          %687 = vmatmul.f32.gmra.mxu0 %v576
          %v688 = vpop.f32.mrf.mxu0
          %v689 = vadd.f32 %v492, %v688
          %690 = vmatmul.f32.gmra.mxu0 %v579
          %v691 = vpop.f32.mrf.mxu0
          %v692 = vadd.f32 %v492, %v691
          %693 = vmatmul.f32.gmra.mxu0 %v582
          %v694 = vpop.f32.mrf.mxu0
          %v695 = vadd.f32 %v492, %v694
          %696 = vmatmul.f32.gmra.mxu0 %v585
          %v697 = vpop.f32.mrf.mxu0
          %v698 = vadd.f32 %v492, %v697
          %699 = vmatmul.f32.gmra.mxu0 %v588
          %v700 = vpop.f32.mrf.mxu0
          %v701 = vadd.f32 %v492, %v700
          %702 = vdwg.mxu0
          %v703 = vxor.u32 %v608, 2147483648
          %v704 = vxor.u32 %v611, 2147483648
          %v705 = vxor.u32 %v614, 2147483648
          %v706 = vxor.u32 %v617, 2147483648
          %v707 = vxor.u32 %v620, 2147483648
          %v708 = vxor.u32 %v623, 2147483648
          %v709 = vxor.u32 %v626, 2147483648
          %v710 = vxor.u32 %v629, 2147483648
          %v711 = vxor.u32 %v632, 2147483648
          %v712 = vxor.u32 %v635, 2147483648
          %v713 = vxor.u32 %v638, 2147483648
          %v714 = vxor.u32 %v641, 2147483648
          %v715 = vxor.u32 %v644, 2147483648
          %v716 = vxor.u32 %v647, 2147483648
          %v717 = vxor.u32 %v650, 2147483648
          %v718 = vxor.u32 %v653, 2147483648
          %v719 = vxor.u32 %v656, 2147483648
          %v720 = vxor.u32 %v659, 2147483648
          %v721 = vxor.u32 %v662, 2147483648
          %v722 = vxor.u32 %v665, 2147483648
          %v723 = vxor.u32 %v668, 2147483648
          %v724 = vxor.u32 %v671, 2147483648
          %v725 = vxor.u32 %v674, 2147483648
          %v726 = vxor.u32 %v677, 2147483648
          %v727 = vxor.u32 %v680, 2147483648
          %v728 = vxor.u32 %v683, 2147483648
          %v729 = vxor.u32 %v686, 2147483648
          %v730 = vxor.u32 %v689, 2147483648
          %v731 = vxor.u32 %v692, 2147483648
          %v732 = vxor.u32 %v695, 2147483648
          %v733 = vxor.u32 %v698, 2147483648
          %v734 = vxor.u32 %v701, 2147483648
          %v735 = vmul.f32 %v703, 1.442695
          %v736 = vpow.pop %v735
          %v737 = vmul.f32 %v704, 1.442695
          %v738 = vpow.pop %v737
          %v739 = vmul.f32 %v705, 1.442695
          %v740 = vpow.pop %v739
          %v741 = vmul.f32 %v706, 1.442695
          %v742 = vpow.pop %v741
          %v743 = vmul.f32 %v707, 1.442695
          %v744 = vpow.pop %v743
          %v745 = vmul.f32 %v708, 1.442695
          %v746 = vpow.pop %v745
          %v747 = vmul.f32 %v709, 1.442695
          %v748 = vpow.pop %v747
          %v749 = vmul.f32 %v710, 1.442695
          %v750 = vpow.pop %v749
          %v751 = vmul.f32 %v711, 1.442695
          %v752 = vpow.pop %v751
          %v753 = vmul.f32 %v712, 1.442695
          %v754 = vpow.pop %v753
          %v755 = vmul.f32 %v713, 1.442695
          %v756 = vpow.pop %v755
          %v757 = vmul.f32 %v714, 1.442695
          %v758 = vpow.pop %v757
          %v759 = vmul.f32 %v715, 1.442695
          %v760 = vpow.pop %v759
          %v761 = vmul.f32 %v716, 1.442695
          %v762 = vpow.pop %v761
          %v763 = vmul.f32 %v717, 1.442695
          %v764 = vpow.pop %v763
          %v765 = vmul.f32 %v718, 1.442695
          %v766 = vpow.pop %v765
          %v767 = vmul.f32 %v719, 1.442695
          %v768 = vpow.pop %v767
          %v769 = vmul.f32 %v720, 1.442695
          %v770 = vpow.pop %v769
          %v771 = vmul.f32 %v721, 1.442695
          %v772 = vpow.pop %v771
          %v773 = vmul.f32 %v722, 1.442695
          %v774 = vpow.pop %v773
          %v775 = vmul.f32 %v723, 1.442695
          %v776 = vpow.pop %v775
          %v777 = vmul.f32 %v724, 1.442695
          %v778 = vpow.pop %v777
          %v779 = vmul.f32 %v725, 1.442695
          %v780 = vpow.pop %v779
          %v781 = vmul.f32 %v726, 1.442695
          %v782 = vpow.pop %v781
          %v783 = vmul.f32 %v727, 1.442695
          %v784 = vpow.pop %v783
          %v785 = vmul.f32 %v728, 1.442695
          %v786 = vpow.pop %v785
          %v787 = vmul.f32 %v729, 1.442695
          %v788 = vpow.pop %v787
          %v789 = vmul.f32 %v730, 1.442695
          %v790 = vpow.pop %v789
          %v791 = vmul.f32 %v731, 1.442695
          %v792 = vpow.pop %v791
          %v793 = vmul.f32 %v732, 1.442695
          %v794 = vpow.pop %v793
          %v795 = vmul.f32 %v733, 1.442695
          %v796 = vpow.pop %v795
          %v797 = vmul.f32 %v734, 1.442695
          %v798 = vpow.pop %v797
          %v799 = vadd.f32 %v736, 1.0
          %v800 = vadd.f32 %v738, 1.0
          %v801 = vadd.f32 %v740, 1.0
          %v802 = vadd.f32 %v742, 1.0
          %v803 = vadd.f32 %v744, 1.0
          %v804 = vadd.f32 %v746, 1.0
          %v805 = vadd.f32 %v748, 1.0
          %v806 = vadd.f32 %v750, 1.0
          %v807 = vadd.f32 %v752, 1.0
          %v808 = vadd.f32 %v754, 1.0
          %v809 = vadd.f32 %v756, 1.0
          %v810 = vadd.f32 %v758, 1.0
          %v811 = vadd.f32 %v760, 1.0
          %v812 = vadd.f32 %v762, 1.0
          %v813 = vadd.f32 %v764, 1.0
          %v814 = vadd.f32 %v766, 1.0
          %v815 = vadd.f32 %v768, 1.0
          %v816 = vadd.f32 %v770, 1.0
          %v817 = vadd.f32 %v772, 1.0
          %v818 = vadd.f32 %v774, 1.0
          %v819 = vadd.f32 %v776, 1.0
          %v820 = vadd.f32 %v778, 1.0
          %v821 = vadd.f32 %v780, 1.0
          %v822 = vadd.f32 %v782, 1.0
          %v823 = vadd.f32 %v784, 1.0
          %v824 = vadd.f32 %v786, 1.0
          %v825 = vadd.f32 %v788, 1.0
          %v826 = vadd.f32 %v790, 1.0
          %v827 = vadd.f32 %v792, 1.0
          %v828 = vadd.f32 %v794, 1.0
          %v829 = vadd.f32 %v796, 1.0
          %v830 = vadd.f32 %v798, 1.0
          %v831 = vrcp.pop %v799
          %v832 = vmul.f32 %v799, %v831
          %v833 = vsub.f32 1.0, %v832
          %v834 = vmul.f32 %v831, %v833
          %v835 = vadd.f32 %v831, %v834
          %vm836 = vweird.f32 %v799
          %vm837 = vweird.f32 %v831
          %vm838 = vmor %vm836, %vm837
          %v839 = vsel %vm838, %v831, %v835
          %v840 = vand.u32 2147483647, %v799
          %vm841 = vcmp.eq.f32.partialorder %v840, 8.507059e+37
          %v842 = vand.u32 %v799, 2147483648
          %v843 = vor.u32 1.1754944e-38, %v842
          %v844 = vsel %vm841, %v843, %v839
          %v845 = vmul.f32 1.0, %v844
          %v846 = vrcp.pop %v800
          %v847 = vmul.f32 %v800, %v846
          %v848 = vsub.f32 1.0, %v847
          %v849 = vmul.f32 %v846, %v848
          %v850 = vadd.f32 %v846, %v849
          %vm851 = vweird.f32 %v800
          %vm852 = vweird.f32 %v846
          %vm853 = vmor %vm851, %vm852
          %v854 = vsel %vm853, %v846, %v850
          %v855 = vand.u32 2147483647, %v800
          %vm856 = vcmp.eq.f32.partialorder %v855, 8.507059e+37
          %v857 = vand.u32 %v800, 2147483648
          %v858 = vor.u32 1.1754944e-38, %v857
          %v859 = vsel %vm856, %v858, %v854
          %v860 = vmul.f32 1.0, %v859
          %v861 = vrcp.pop %v801
          %v862 = vmul.f32 %v801, %v861
          %v863 = vsub.f32 1.0, %v862
          %v864 = vmul.f32 %v861, %v863
          %v865 = vadd.f32 %v861, %v864
          %vm866 = vweird.f32 %v801
          %vm867 = vweird.f32 %v861
          %vm868 = vmor %vm866, %vm867
          %v869 = vsel %vm868, %v861, %v865
          %v870 = vand.u32 2147483647, %v801
          %vm871 = vcmp.eq.f32.partialorder %v870, 8.507059e+37
          %v872 = vand.u32 %v801, 2147483648
          %v873 = vor.u32 1.1754944e-38, %v872
          %v874 = vsel %vm871, %v873, %v869
          %v875 = vmul.f32 1.0, %v874
          %v876 = vrcp.pop %v802
          %v877 = vmul.f32 %v802, %v876
          %v878 = vsub.f32 1.0, %v877
          %v879 = vmul.f32 %v876, %v878
          %v880 = vadd.f32 %v876, %v879
          %vm881 = vweird.f32 %v802
          %vm882 = vweird.f32 %v876
          %vm883 = vmor %vm881, %vm882
          %v884 = vsel %vm883, %v876, %v880
          %v885 = vand.u32 2147483647, %v802
          %vm886 = vcmp.eq.f32.partialorder %v885, 8.507059e+37
          %v887 = vand.u32 %v802, 2147483648
          %v888 = vor.u32 1.1754944e-38, %v887
          %v889 = vsel %vm886, %v888, %v884
          %v890 = vmul.f32 1.0, %v889
          %v891 = vrcp.pop %v803
          %v892 = vmul.f32 %v803, %v891
          %v893 = vsub.f32 1.0, %v892
          %v894 = vmul.f32 %v891, %v893
          %v895 = vadd.f32 %v891, %v894
          %vm896 = vweird.f32 %v803
          %vm897 = vweird.f32 %v891
          %vm898 = vmor %vm896, %vm897
          %v899 = vsel %vm898, %v891, %v895
          %v900 = vand.u32 2147483647, %v803
          %vm901 = vcmp.eq.f32.partialorder %v900, 8.507059e+37
          %v902 = vand.u32 %v803, 2147483648
          %v903 = vor.u32 1.1754944e-38, %v902
          %v904 = vsel %vm901, %v903, %v899
          %v905 = vmul.f32 1.0, %v904
          %v906 = vrcp.pop %v804
          %v907 = vmul.f32 %v804, %v906
          %v908 = vsub.f32 1.0, %v907
          %v909 = vmul.f32 %v906, %v908
          %v910 = vadd.f32 %v906, %v909
          %vm911 = vweird.f32 %v804
          %vm912 = vweird.f32 %v906
          %vm913 = vmor %vm911, %vm912
          %v914 = vsel %vm913, %v906, %v910
          %v915 = vand.u32 2147483647, %v804
          %vm916 = vcmp.eq.f32.partialorder %v915, 8.507059e+37
          %v917 = vand.u32 %v804, 2147483648
          %v918 = vor.u32 1.1754944e-38, %v917
          %v919 = vsel %vm916, %v918, %v914
          %v920 = vmul.f32 1.0, %v919
          %v921 = vrcp.pop %v805
          %v922 = vmul.f32 %v805, %v921
          %v923 = vsub.f32 1.0, %v922
          %v924 = vmul.f32 %v921, %v923
          %v925 = vadd.f32 %v921, %v924
          %vm926 = vweird.f32 %v805
          %vm927 = vweird.f32 %v921
          %vm928 = vmor %vm926, %vm927
          %v929 = vsel %vm928, %v921, %v925
          %v930 = vand.u32 2147483647, %v805
          %vm931 = vcmp.eq.f32.partialorder %v930, 8.507059e+37
          %v932 = vand.u32 %v805, 2147483648
          %v933 = vor.u32 1.1754944e-38, %v932
          %v934 = vsel %vm931, %v933, %v929
          %v935 = vmul.f32 1.0, %v934
          %v936 = vrcp.pop %v806
          %v937 = vmul.f32 %v806, %v936
          %v938 = vsub.f32 1.0, %v937
          %v939 = vmul.f32 %v936, %v938
          %v940 = vadd.f32 %v936, %v939
          %vm941 = vweird.f32 %v806
          %vm942 = vweird.f32 %v936
          %vm943 = vmor %vm941, %vm942
          %v944 = vsel %vm943, %v936, %v940
          %v945 = vand.u32 2147483647, %v806
          %vm946 = vcmp.eq.f32.partialorder %v945, 8.507059e+37
          %v947 = vand.u32 %v806, 2147483648
          %v948 = vor.u32 1.1754944e-38, %v947
          %v949 = vsel %vm946, %v948, %v944
          %v950 = vmul.f32 1.0, %v949
          %v951 = vrcp.pop %v807
          %v952 = vmul.f32 %v807, %v951
          %v953 = vsub.f32 1.0, %v952
          %v954 = vmul.f32 %v951, %v953
          %v955 = vadd.f32 %v951, %v954
          %vm956 = vweird.f32 %v807
          %vm957 = vweird.f32 %v951
          %vm958 = vmor %vm956, %vm957
          %v959 = vsel %vm958, %v951, %v955
          %v960 = vand.u32 2147483647, %v807
          %vm961 = vcmp.eq.f32.partialorder %v960, 8.507059e+37
          %v962 = vand.u32 %v807, 2147483648
          %v963 = vor.u32 1.1754944e-38, %v962
          %v964 = vsel %vm961, %v963, %v959
          %v965 = vmul.f32 1.0, %v964
          %v966 = vrcp.pop %v808
          %v967 = vmul.f32 %v808, %v966
          %v968 = vsub.f32 1.0, %v967
          %v969 = vmul.f32 %v966, %v968
          %v970 = vadd.f32 %v966, %v969
          %vm971 = vweird.f32 %v808
          %vm972 = vweird.f32 %v966
          %vm973 = vmor %vm971, %vm972
          %v974 = vsel %vm973, %v966, %v970
          %v975 = vand.u32 2147483647, %v808
          %vm976 = vcmp.eq.f32.partialorder %v975, 8.507059e+37
          %v977 = vand.u32 %v808, 2147483648
          %v978 = vor.u32 1.1754944e-38, %v977
          %v979 = vsel %vm976, %v978, %v974
          %v980 = vmul.f32 1.0, %v979
          %v981 = vrcp.pop %v809
          %v982 = vmul.f32 %v809, %v981
          %v983 = vsub.f32 1.0, %v982
          %v984 = vmul.f32 %v981, %v983
          %v985 = vadd.f32 %v981, %v984
          %vm986 = vweird.f32 %v809
          %vm987 = vweird.f32 %v981
          %vm988 = vmor %vm986, %vm987
          %v989 = vsel %vm988, %v981, %v985
          %v990 = vand.u32 2147483647, %v809
          %vm991 = vcmp.eq.f32.partialorder %v990, 8.507059e+37
          %v992 = vand.u32 %v809, 2147483648
          %v993 = vor.u32 1.1754944e-38, %v992
          %v994 = vsel %vm991, %v993, %v989
          %v995 = vmul.f32 1.0, %v994
          %v996 = vrcp.pop %v810
          %v997 = vmul.f32 %v810, %v996
          %v998 = vsub.f32 1.0, %v997
          %v999 = vmul.f32 %v996, %v998
          %v1000 = vadd.f32 %v996, %v999
          %vm1001 = vweird.f32 %v810
          %vm1002 = vweird.f32 %v996
          %vm1003 = vmor %vm1001, %vm1002
          %v1004 = vsel %vm1003, %v996, %v1000
          %v1005 = vand.u32 2147483647, %v810
          %vm1006 = vcmp.eq.f32.partialorder %v1005, 8.507059e+37
          %v1007 = vand.u32 %v810, 2147483648
          %v1008 = vor.u32 1.1754944e-38, %v1007
          %v1009 = vsel %vm1006, %v1008, %v1004
          %v1010 = vmul.f32 1.0, %v1009
          %v1011 = vrcp.pop %v811
          %v1012 = vmul.f32 %v811, %v1011
          %v1013 = vsub.f32 1.0, %v1012
          %v1014 = vmul.f32 %v1011, %v1013
          %v1015 = vadd.f32 %v1011, %v1014
          %vm1016 = vweird.f32 %v811
          %vm1017 = vweird.f32 %v1011
          %vm1018 = vmor %vm1016, %vm1017
          %v1019 = vsel %vm1018, %v1011, %v1015
          %v1020 = vand.u32 2147483647, %v811
          %vm1021 = vcmp.eq.f32.partialorder %v1020, 8.507059e+37
          %v1022 = vand.u32 %v811, 2147483648
          %v1023 = vor.u32 1.1754944e-38, %v1022
          %v1024 = vsel %vm1021, %v1023, %v1019
          %v1025 = vmul.f32 1.0, %v1024
          %v1026 = vrcp.pop %v812
          %v1027 = vmul.f32 %v812, %v1026
          %v1028 = vsub.f32 1.0, %v1027
          %v1029 = vmul.f32 %v1026, %v1028
          %v1030 = vadd.f32 %v1026, %v1029
          %vm1031 = vweird.f32 %v812
          %vm1032 = vweird.f32 %v1026
          %vm1033 = vmor %vm1031, %vm1032
          %v1034 = vsel %vm1033, %v1026, %v1030
          %v1035 = vand.u32 2147483647, %v812
          %vm1036 = vcmp.eq.f32.partialorder %v1035, 8.507059e+37
          %v1037 = vand.u32 %v812, 2147483648
          %v1038 = vor.u32 1.1754944e-38, %v1037
          %v1039 = vsel %vm1036, %v1038, %v1034
          %v1040 = vmul.f32 1.0, %v1039
          %v1041 = vrcp.pop %v813
          %v1042 = vmul.f32 %v813, %v1041
          %v1043 = vsub.f32 1.0, %v1042
          %v1044 = vmul.f32 %v1041, %v1043
          %v1045 = vadd.f32 %v1041, %v1044
          %vm1046 = vweird.f32 %v813
          %vm1047 = vweird.f32 %v1041
          %vm1048 = vmor %vm1046, %vm1047
          %v1049 = vsel %vm1048, %v1041, %v1045
          %v1050 = vand.u32 2147483647, %v813
          %vm1051 = vcmp.eq.f32.partialorder %v1050, 8.507059e+37
          %v1052 = vand.u32 %v813, 2147483648
          %v1053 = vor.u32 1.1754944e-38, %v1052
          %v1054 = vsel %vm1051, %v1053, %v1049
          %v1055 = vmul.f32 1.0, %v1054
          %v1056 = vrcp.pop %v814
          %v1057 = vmul.f32 %v814, %v1056
          %v1058 = vsub.f32 1.0, %v1057
          %v1059 = vmul.f32 %v1056, %v1058
          %v1060 = vadd.f32 %v1056, %v1059
          %vm1061 = vweird.f32 %v814
          %vm1062 = vweird.f32 %v1056
          %vm1063 = vmor %vm1061, %vm1062
          %v1064 = vsel %vm1063, %v1056, %v1060
          %v1065 = vand.u32 2147483647, %v814
          %vm1066 = vcmp.eq.f32.partialorder %v1065, 8.507059e+37
          %v1067 = vand.u32 %v814, 2147483648
          %v1068 = vor.u32 1.1754944e-38, %v1067
          %v1069 = vsel %vm1066, %v1068, %v1064
          %v1070 = vmul.f32 1.0, %v1069
          %v1071 = vrcp.pop %v815
          %v1072 = vmul.f32 %v815, %v1071
          %v1073 = vsub.f32 1.0, %v1072
          %v1074 = vmul.f32 %v1071, %v1073
          %v1075 = vadd.f32 %v1071, %v1074
          %vm1076 = vweird.f32 %v815
          %vm1077 = vweird.f32 %v1071
          %vm1078 = vmor %vm1076, %vm1077
          %v1079 = vsel %vm1078, %v1071, %v1075
          %v1080 = vand.u32 2147483647, %v815
          %vm1081 = vcmp.eq.f32.partialorder %v1080, 8.507059e+37
          %v1082 = vand.u32 %v815, 2147483648
          %v1083 = vor.u32 1.1754944e-38, %v1082
          %v1084 = vsel %vm1081, %v1083, %v1079
          %v1085 = vmul.f32 1.0, %v1084
          %v1086 = vrcp.pop %v816
          %v1087 = vmul.f32 %v816, %v1086
          %v1088 = vsub.f32 1.0, %v1087
          %v1089 = vmul.f32 %v1086, %v1088
          %v1090 = vadd.f32 %v1086, %v1089
          %vm1091 = vweird.f32 %v816
          %vm1092 = vweird.f32 %v1086
          %vm1093 = vmor %vm1091, %vm1092
          %v1094 = vsel %vm1093, %v1086, %v1090
          %v1095 = vand.u32 2147483647, %v816
          %vm1096 = vcmp.eq.f32.partialorder %v1095, 8.507059e+37
          %v1097 = vand.u32 %v816, 2147483648
          %v1098 = vor.u32 1.1754944e-38, %v1097
          %v1099 = vsel %vm1096, %v1098, %v1094
          %v1100 = vmul.f32 1.0, %v1099
          %v1101 = vrcp.pop %v817
          %v1102 = vmul.f32 %v817, %v1101
          %v1103 = vsub.f32 1.0, %v1102
          %v1104 = vmul.f32 %v1101, %v1103
          %v1105 = vadd.f32 %v1101, %v1104
          %vm1106 = vweird.f32 %v817
          %vm1107 = vweird.f32 %v1101
          %vm1108 = vmor %vm1106, %vm1107
          %v1109 = vsel %vm1108, %v1101, %v1105
          %v1110 = vand.u32 2147483647, %v817
          %vm1111 = vcmp.eq.f32.partialorder %v1110, 8.507059e+37
          %v1112 = vand.u32 %v817, 2147483648
          %v1113 = vor.u32 1.1754944e-38, %v1112
          %v1114 = vsel %vm1111, %v1113, %v1109
          %v1115 = vmul.f32 1.0, %v1114
          %v1116 = vrcp.pop %v818
          %v1117 = vmul.f32 %v818, %v1116
          %v1118 = vsub.f32 1.0, %v1117
          %v1119 = vmul.f32 %v1116, %v1118
          %v1120 = vadd.f32 %v1116, %v1119
          %vm1121 = vweird.f32 %v818
          %vm1122 = vweird.f32 %v1116
          %vm1123 = vmor %vm1121, %vm1122
          %v1124 = vsel %vm1123, %v1116, %v1120
          %v1125 = vand.u32 2147483647, %v818
          %vm1126 = vcmp.eq.f32.partialorder %v1125, 8.507059e+37
          %v1127 = vand.u32 %v818, 2147483648
          %v1128 = vor.u32 1.1754944e-38, %v1127
          %v1129 = vsel %vm1126, %v1128, %v1124
          %v1130 = vmul.f32 1.0, %v1129
          %v1131 = vrcp.pop %v819
          %v1132 = vmul.f32 %v819, %v1131
          %v1133 = vsub.f32 1.0, %v1132
          %v1134 = vmul.f32 %v1131, %v1133
          %v1135 = vadd.f32 %v1131, %v1134
          %vm1136 = vweird.f32 %v819
          %vm1137 = vweird.f32 %v1131
          %vm1138 = vmor %vm1136, %vm1137
          %v1139 = vsel %vm1138, %v1131, %v1135
          %v1140 = vand.u32 2147483647, %v819
          %vm1141 = vcmp.eq.f32.partialorder %v1140, 8.507059e+37
          %v1142 = vand.u32 %v819, 2147483648
          %v1143 = vor.u32 1.1754944e-38, %v1142
          %v1144 = vsel %vm1141, %v1143, %v1139
          %v1145 = vmul.f32 1.0, %v1144
          %v1146 = vrcp.pop %v820
          %v1147 = vmul.f32 %v820, %v1146
          %v1148 = vsub.f32 1.0, %v1147
          %v1149 = vmul.f32 %v1146, %v1148
          %v1150 = vadd.f32 %v1146, %v1149
          %vm1151 = vweird.f32 %v820
          %vm1152 = vweird.f32 %v1146
          %vm1153 = vmor %vm1151, %vm1152
          %v1154 = vsel %vm1153, %v1146, %v1150
          %v1155 = vand.u32 2147483647, %v820
          %vm1156 = vcmp.eq.f32.partialorder %v1155, 8.507059e+37
          %v1157 = vand.u32 %v820, 2147483648
          %v1158 = vor.u32 1.1754944e-38, %v1157
          %v1159 = vsel %vm1156, %v1158, %v1154
          %v1160 = vmul.f32 1.0, %v1159
          %v1161 = vrcp.pop %v821
          %v1162 = vmul.f32 %v821, %v1161
          %v1163 = vsub.f32 1.0, %v1162
          %v1164 = vmul.f32 %v1161, %v1163
          %v1165 = vadd.f32 %v1161, %v1164
          %vm1166 = vweird.f32 %v821
          %vm1167 = vweird.f32 %v1161
          %vm1168 = vmor %vm1166, %vm1167
          %v1169 = vsel %vm1168, %v1161, %v1165
          %v1170 = vand.u32 2147483647, %v821
          %vm1171 = vcmp.eq.f32.partialorder %v1170, 8.507059e+37
          %v1172 = vand.u32 %v821, 2147483648
          %v1173 = vor.u32 1.1754944e-38, %v1172
          %v1174 = vsel %vm1171, %v1173, %v1169
          %v1175 = vmul.f32 1.0, %v1174
          %v1176 = vrcp.pop %v822
          %v1177 = vmul.f32 %v822, %v1176
          %v1178 = vsub.f32 1.0, %v1177
          %v1179 = vmul.f32 %v1176, %v1178
          %v1180 = vadd.f32 %v1176, %v1179
          %vm1181 = vweird.f32 %v822
          %vm1182 = vweird.f32 %v1176
          %vm1183 = vmor %vm1181, %vm1182
          %v1184 = vsel %vm1183, %v1176, %v1180
          %v1185 = vand.u32 2147483647, %v822
          %vm1186 = vcmp.eq.f32.partialorder %v1185, 8.507059e+37
          %v1187 = vand.u32 %v822, 2147483648
          %v1188 = vor.u32 1.1754944e-38, %v1187
          %v1189 = vsel %vm1186, %v1188, %v1184
          %v1190 = vmul.f32 1.0, %v1189
          %v1191 = vrcp.pop %v823
          %v1192 = vmul.f32 %v823, %v1191
          %v1193 = vsub.f32 1.0, %v1192
          %v1194 = vmul.f32 %v1191, %v1193
          %v1195 = vadd.f32 %v1191, %v1194
          %vm1196 = vweird.f32 %v823
          %vm1197 = vweird.f32 %v1191
          %vm1198 = vmor %vm1196, %vm1197
          %v1199 = vsel %vm1198, %v1191, %v1195
          %v1200 = vand.u32 2147483647, %v823
          %vm1201 = vcmp.eq.f32.partialorder %v1200, 8.507059e+37
          %v1202 = vand.u32 %v823, 2147483648
          %v1203 = vor.u32 1.1754944e-38, %v1202
          %v1204 = vsel %vm1201, %v1203, %v1199
          %v1205 = vmul.f32 1.0, %v1204
          %v1206 = vrcp.pop %v824
          %v1207 = vmul.f32 %v824, %v1206
          %v1208 = vsub.f32 1.0, %v1207
          %v1209 = vmul.f32 %v1206, %v1208
          %v1210 = vadd.f32 %v1206, %v1209
          %vm1211 = vweird.f32 %v824
          %vm1212 = vweird.f32 %v1206
          %vm1213 = vmor %vm1211, %vm1212
          %v1214 = vsel %vm1213, %v1206, %v1210
          %v1215 = vand.u32 2147483647, %v824
          %vm1216 = vcmp.eq.f32.partialorder %v1215, 8.507059e+37
          %v1217 = vand.u32 %v824, 2147483648
          %v1218 = vor.u32 1.1754944e-38, %v1217
          %v1219 = vsel %vm1216, %v1218, %v1214
          %v1220 = vmul.f32 1.0, %v1219
          %v1221 = vrcp.pop %v825
          %v1222 = vmul.f32 %v825, %v1221
          %v1223 = vsub.f32 1.0, %v1222
          %v1224 = vmul.f32 %v1221, %v1223
          %v1225 = vadd.f32 %v1221, %v1224
          %vm1226 = vweird.f32 %v825
          %vm1227 = vweird.f32 %v1221
          %vm1228 = vmor %vm1226, %vm1227
          %v1229 = vsel %vm1228, %v1221, %v1225
          %v1230 = vand.u32 2147483647, %v825
          %vm1231 = vcmp.eq.f32.partialorder %v1230, 8.507059e+37
          %v1232 = vand.u32 %v825, 2147483648
          %v1233 = vor.u32 1.1754944e-38, %v1232
          %v1234 = vsel %vm1231, %v1233, %v1229
          %v1235 = vmul.f32 1.0, %v1234
          %v1236 = vrcp.pop %v826
          %v1237 = vmul.f32 %v826, %v1236
          %v1238 = vsub.f32 1.0, %v1237
          %v1239 = vmul.f32 %v1236, %v1238
          %v1240 = vadd.f32 %v1236, %v1239
          %vm1241 = vweird.f32 %v826
          %vm1242 = vweird.f32 %v1236
          %vm1243 = vmor %vm1241, %vm1242
          %v1244 = vsel %vm1243, %v1236, %v1240
          %v1245 = vand.u32 2147483647, %v826
          %vm1246 = vcmp.eq.f32.partialorder %v1245, 8.507059e+37
          %v1247 = vand.u32 %v826, 2147483648
          %v1248 = vor.u32 1.1754944e-38, %v1247
          %v1249 = vsel %vm1246, %v1248, %v1244
          %v1250 = vmul.f32 1.0, %v1249
          %v1251 = vrcp.pop %v827
          %v1252 = vmul.f32 %v827, %v1251
          %v1253 = vsub.f32 1.0, %v1252
          %v1254 = vmul.f32 %v1251, %v1253
          %v1255 = vadd.f32 %v1251, %v1254
          %vm1256 = vweird.f32 %v827
          %vm1257 = vweird.f32 %v1251
          %vm1258 = vmor %vm1256, %vm1257
          %v1259 = vsel %vm1258, %v1251, %v1255
          %v1260 = vand.u32 2147483647, %v827
          %vm1261 = vcmp.eq.f32.partialorder %v1260, 8.507059e+37
          %v1262 = vand.u32 %v827, 2147483648
          %v1263 = vor.u32 1.1754944e-38, %v1262
          %v1264 = vsel %vm1261, %v1263, %v1259
          %v1265 = vmul.f32 1.0, %v1264
          %v1266 = vrcp.pop %v828
          %v1267 = vmul.f32 %v828, %v1266
          %v1268 = vsub.f32 1.0, %v1267
          %v1269 = vmul.f32 %v1266, %v1268
          %v1270 = vadd.f32 %v1266, %v1269
          %vm1271 = vweird.f32 %v828
          %vm1272 = vweird.f32 %v1266
          %vm1273 = vmor %vm1271, %vm1272
          %v1274 = vsel %vm1273, %v1266, %v1270
          %v1275 = vand.u32 2147483647, %v828
          %vm1276 = vcmp.eq.f32.partialorder %v1275, 8.507059e+37
          %v1277 = vand.u32 %v828, 2147483648
          %v1278 = vor.u32 1.1754944e-38, %v1277
          %v1279 = vsel %vm1276, %v1278, %v1274
          %v1280 = vmul.f32 1.0, %v1279
          %v1281 = vrcp.pop %v829
          %v1282 = vmul.f32 %v829, %v1281
          %v1283 = vsub.f32 1.0, %v1282
          %v1284 = vmul.f32 %v1281, %v1283
          %v1285 = vadd.f32 %v1281, %v1284
          %vm1286 = vweird.f32 %v829
          %vm1287 = vweird.f32 %v1281
          %vm1288 = vmor %vm1286, %vm1287
          %v1289 = vsel %vm1288, %v1281, %v1285
          %v1290 = vand.u32 2147483647, %v829
          %vm1291 = vcmp.eq.f32.partialorder %v1290, 8.507059e+37
          %v1292 = vand.u32 %v829, 2147483648
          %v1293 = vor.u32 1.1754944e-38, %v1292
          %v1294 = vsel %vm1291, %v1293, %v1289
          %v1295 = vmul.f32 1.0, %v1294
          %v1296 = vrcp.pop %v830
          %v1297 = vmul.f32 %v830, %v1296
          %v1298 = vsub.f32 1.0, %v1297
          %v1299 = vmul.f32 %v1296, %v1298
          %v1300 = vadd.f32 %v1296, %v1299
          %vm1301 = vweird.f32 %v830
          %vm1302 = vweird.f32 %v1296
          %vm1303 = vmor %vm1301, %vm1302
          %v1304 = vsel %vm1303, %v1296, %v1300
          %v1305 = vand.u32 2147483647, %v830
          %vm1306 = vcmp.eq.f32.partialorder %v1305, 8.507059e+37
          %v1307 = vand.u32 %v830, 2147483648
          %v1308 = vor.u32 1.1754944e-38, %v1307
          %v1309 = vsel %vm1306, %v1308, %v1304
          %v1310 = vmul.f32 1.0, %v1309
          %v1311 = vmul.f32 %v608, %v845
          %v1312 = vmul.f32 %v611, %v860
          %v1313 = vmul.f32 %v614, %v875
          %v1314 = vmul.f32 %v617, %v890
          %v1315 = vmul.f32 %v620, %v905
          %v1316 = vmul.f32 %v623, %v920
          %v1317 = vmul.f32 %v626, %v935
          %v1318 = vmul.f32 %v629, %v950
          %v1319 = vmul.f32 %v632, %v965
          %v1320 = vmul.f32 %v635, %v980
          %v1321 = vmul.f32 %v638, %v995
          %v1322 = vmul.f32 %v641, %v1010
          %v1323 = vmul.f32 %v644, %v1025
          %v1324 = vmul.f32 %v647, %v1040
          %v1325 = vmul.f32 %v650, %v1055
          %v1326 = vmul.f32 %v653, %v1070
          %v1327 = vmul.f32 %v656, %v1085
          %v1328 = vmul.f32 %v659, %v1100
          %v1329 = vmul.f32 %v662, %v1115
          %v1330 = vmul.f32 %v665, %v1130
          %v1331 = vmul.f32 %v668, %v1145
          %v1332 = vmul.f32 %v671, %v1160
          %v1333 = vmul.f32 %v674, %v1175
          %v1334 = vmul.f32 %v677, %v1190
          %v1335 = vmul.f32 %v680, %v1205
          %v1336 = vmul.f32 %v683, %v1220
          %v1337 = vmul.f32 %v686, %v1235
          %v1338 = vmul.f32 %v689, %v1250
          %v1339 = vmul.f32 %v692, %v1265
          %v1340 = vmul.f32 %v695, %v1280
          %v1341 = vmul.f32 %v698, %v1295
          %v1342 = vmul.f32 %v701, %v1310
          %v1343 = vld [vmem:[%s3] sm:$0xff]
          %v1344 = vld [vmem:[%s3 + $0x8] sm:$0xff]
          %v1345 = vld [vmem:[%s3 + $0x10] sm:$0xff]
          %v1346 = vld [vmem:[%s3 + $0x18] sm:$0xff]
          %v1347 = vld [vmem:[%s3 + $0x20] sm:$0xff]
          %v1348 = vld [vmem:[%s3 + $0x28] sm:$0xff]
          %v1349 = vld [vmem:[%s3 + $0x30] sm:$0xff]
          %v1350 = vld [vmem:[%s3 + $0x38] sm:$0xff]
          %v1351 = vld [vmem:[%s3 + $0x40] sm:$0xff]
          %v1352 = vld [vmem:[%s3 + $0x48] sm:$0xff]
          %v1353 = vld [vmem:[%s3 + $0x50] sm:$0xff]
          %v1354 = vld [vmem:[%s3 + $0x58] sm:$0xff]
          %v1355 = vld [vmem:[%s3 + $0x60] sm:$0xff]
          %v1356 = vld [vmem:[%s3 + $0x68] sm:$0xff]
          %v1357 = vld [vmem:[%s3 + $0x70] sm:$0xff]
          %v1358 = vld [vmem:[%s3 + $0x78] sm:$0xff]
          %v1359 = vperm.slane %v491, 1
          %1360 = vmatpush.msra.mxu0 %v1358
          %1361 = vmatpush.msra.mxu0 %v1357
          %1362 = vmatpush.msra.mxu0 %v1356
          %1363 = vmatpush.msra.mxu0 %v1355
          %1364 = vmatpush.msra.mxu0 %v1354
          %1365 = vmatpush.msra.mxu0 %v1353
          %1366 = vmatpush.msra.mxu0 %v1352
          %1367 = vmatpush.msra.mxu0 %v1351
          %1368 = vmatpush.msra.mxu0 %v1350
          %1369 = vmatpush.msra.mxu0 %v1349
          %1370 = vmatpush.msra.mxu0 %v1348
          %1371 = vmatpush.msra.mxu0 %v1347
          %1372 = vmatpush.msra.mxu0 %v1346
          %1373 = vmatpush.msra.mxu0 %v1345
          %1374 = vmatpush.msra.mxu0 %v1344
          %1375 = vmatpush.msra.mxu0 %v1343
          %1376 = vmatmul.f32.gmra.mxu0 %v1311
          %v1377 = vpop.f32.mrf.mxu0
          %v1378 = vadd.f32 %v1359, %v1377
          %1379 = vmatmul.f32.gmra.mxu0 %v1312
          %v1380 = vpop.f32.mrf.mxu0
          %v1381 = vadd.f32 %v1359, %v1380
          %1382 = vmatmul.f32.gmra.mxu0 %v1313
          %v1383 = vpop.f32.mrf.mxu0
          %v1384 = vadd.f32 %v1359, %v1383
          %1385 = vmatmul.f32.gmra.mxu0 %v1314
          %v1386 = vpop.f32.mrf.mxu0
          %v1387 = vadd.f32 %v1359, %v1386
          %1388 = vmatmul.f32.gmra.mxu0 %v1315
          %v1389 = vpop.f32.mrf.mxu0
          %v1390 = vadd.f32 %v1359, %v1389
          %1391 = vmatmul.f32.gmra.mxu0 %v1316
          %v1392 = vpop.f32.mrf.mxu0
          %v1393 = vadd.f32 %v1359, %v1392
          %1394 = vmatmul.f32.gmra.mxu0 %v1317
          %v1395 = vpop.f32.mrf.mxu0
          %v1396 = vadd.f32 %v1359, %v1395
          %1397 = vmatmul.f32.gmra.mxu0 %v1318
          %v1398 = vpop.f32.mrf.mxu0
          %v1399 = vadd.f32 %v1359, %v1398
          %1400 = vmatmul.f32.gmra.mxu0 %v1319
          %v1401 = vpop.f32.mrf.mxu0
          %v1402 = vadd.f32 %v1359, %v1401
          %1403 = vmatmul.f32.gmra.mxu0 %v1320
          %v1404 = vpop.f32.mrf.mxu0
          %v1405 = vadd.f32 %v1359, %v1404
          %1406 = vmatmul.f32.gmra.mxu0 %v1321
          %v1407 = vpop.f32.mrf.mxu0
          %v1408 = vadd.f32 %v1359, %v1407
          %1409 = vmatmul.f32.gmra.mxu0 %v1322
          %v1410 = vpop.f32.mrf.mxu0
          %v1411 = vadd.f32 %v1359, %v1410
          %1412 = vmatmul.f32.gmra.mxu0 %v1323
          %v1413 = vpop.f32.mrf.mxu0
          %v1414 = vadd.f32 %v1359, %v1413
          %1415 = vmatmul.f32.gmra.mxu0 %v1324
          %v1416 = vpop.f32.mrf.mxu0
          %v1417 = vadd.f32 %v1359, %v1416
          %1418 = vmatmul.f32.gmra.mxu0 %v1325
          %v1419 = vpop.f32.mrf.mxu0
          %v1420 = vadd.f32 %v1359, %v1419
          %1421 = vmatmul.f32.gmra.mxu0 %v1326
          %v1422 = vpop.f32.mrf.mxu0
          %v1423 = vadd.f32 %v1359, %v1422
          %1424 = vmatmul.f32.gmra.mxu0 %v1327
          %v1425 = vpop.f32.mrf.mxu0
          %v1426 = vadd.f32 %v1359, %v1425
          %1427 = vmatmul.f32.gmra.mxu0 %v1328
          %v1428 = vpop.f32.mrf.mxu0
          %v1429 = vadd.f32 %v1359, %v1428
          %1430 = vmatmul.f32.gmra.mxu0 %v1329
          %v1431 = vpop.f32.mrf.mxu0
          %v1432 = vadd.f32 %v1359, %v1431
          %1433 = vmatmul.f32.gmra.mxu0 %v1330
          %v1434 = vpop.f32.mrf.mxu0
          %v1435 = vadd.f32 %v1359, %v1434
          %1436 = vmatmul.f32.gmra.mxu0 %v1331
          %v1437 = vpop.f32.mrf.mxu0
          %v1438 = vadd.f32 %v1359, %v1437
          %1439 = vmatmul.f32.gmra.mxu0 %v1332
          %v1440 = vpop.f32.mrf.mxu0
          %v1441 = vadd.f32 %v1359, %v1440
          %1442 = vmatmul.f32.gmra.mxu0 %v1333
          %v1443 = vpop.f32.mrf.mxu0
          %v1444 = vadd.f32 %v1359, %v1443
          %1445 = vmatmul.f32.gmra.mxu0 %v1334
          %v1446 = vpop.f32.mrf.mxu0
          %v1447 = vadd.f32 %v1359, %v1446
          %1448 = vmatmul.f32.gmra.mxu0 %v1335
          %v1449 = vpop.f32.mrf.mxu0
          %v1450 = vadd.f32 %v1359, %v1449
          %1451 = vmatmul.f32.gmra.mxu0 %v1336
          %v1452 = vpop.f32.mrf.mxu0
          %v1453 = vadd.f32 %v1359, %v1452
          %1454 = vmatmul.f32.gmra.mxu0 %v1337
          %v1455 = vpop.f32.mrf.mxu0
          %v1456 = vadd.f32 %v1359, %v1455
          %1457 = vmatmul.f32.gmra.mxu0 %v1338
          %v1458 = vpop.f32.mrf.mxu0
          %v1459 = vadd.f32 %v1359, %v1458
          %1460 = vmatmul.f32.gmra.mxu0 %v1339
          %v1461 = vpop.f32.mrf.mxu0
          %v1462 = vadd.f32 %v1359, %v1461
          %1463 = vmatmul.f32.gmra.mxu0 %v1340
          %v1464 = vpop.f32.mrf.mxu0
          %v1465 = vadd.f32 %v1359, %v1464
          %1466 = vmatmul.f32.gmra.mxu0 %v1341
          %v1467 = vpop.f32.mrf.mxu0
          %v1468 = vadd.f32 %v1359, %v1467
          %1469 = vmatmul.f32.gmra.mxu0 %v1342
          %v1470 = vpop.f32.mrf.mxu0
          %v1471 = vadd.f32 %v1359, %v1470
          %1472 = vdwg.mxu0
          %1473 = vadd.xlane.f32.xlu0 %v1378
          %v1474 = vpop.xlane.xlu0 %1473
          %1475 = vadd.xlane.f32.xlu0 %v1381
          %v1476 = vpop.xlane.xlu0 %1475
          %1477 = vadd.xlane.f32.xlu0 %v1384
          %v1478 = vpop.xlane.xlu0 %1477
          %1479 = vadd.xlane.f32.xlu0 %v1387
          %v1480 = vpop.xlane.xlu0 %1479
          %1481 = vadd.xlane.f32.xlu0 %v1390
          %v1482 = vpop.xlane.xlu0 %1481
          %1483 = vadd.xlane.f32.xlu0 %v1393
          %v1484 = vpop.xlane.xlu0 %1483
          %1485 = vadd.xlane.f32.xlu0 %v1396
          %v1486 = vpop.xlane.xlu0 %1485
          %1487 = vadd.xlane.f32.xlu0 %v1399
          %v1488 = vpop.xlane.xlu0 %1487
          %1489 = vadd.xlane.f32.xlu0 %v1402
          %v1490 = vpop.xlane.xlu0 %1489
          %1491 = vadd.xlane.f32.xlu0 %v1405
          %v1492 = vpop.xlane.xlu0 %1491
          %1493 = vadd.xlane.f32.xlu0 %v1408
          %v1494 = vpop.xlane.xlu0 %1493
          %1495 = vadd.xlane.f32.xlu0 %v1411
          %v1496 = vpop.xlane.xlu0 %1495
          %1497 = vadd.xlane.f32.xlu0 %v1414
          %v1498 = vpop.xlane.xlu0 %1497
          %1499 = vadd.xlane.f32.xlu0 %v1417
          %v1500 = vpop.xlane.xlu0 %1499
          %1501 = vadd.xlane.f32.xlu0 %v1420
          %v1502 = vpop.xlane.xlu0 %1501
          %1503 = vadd.xlane.f32.xlu0 %v1423
          %v1504 = vpop.xlane.xlu0 %1503
          %1505 = vadd.xlane.f32.xlu0 %v1426
          %v1506 = vpop.xlane.xlu0 %1505
          %1507 = vadd.xlane.f32.xlu0 %v1429
          %v1508 = vpop.xlane.xlu0 %1507
          %1509 = vadd.xlane.f32.xlu0 %v1432
          %v1510 = vpop.xlane.xlu0 %1509
          %1511 = vadd.xlane.f32.xlu0 %v1435
          %v1512 = vpop.xlane.xlu0 %1511
          %1513 = vadd.xlane.f32.xlu0 %v1438
          %v1514 = vpop.xlane.xlu0 %1513
          %1515 = vadd.xlane.f32.xlu0 %v1441
          %v1516 = vpop.xlane.xlu0 %1515
          %1517 = vadd.xlane.f32.xlu0 %v1444
          %v1518 = vpop.xlane.xlu0 %1517
          %1519 = vadd.xlane.f32.xlu0 %v1447
          %v1520 = vpop.xlane.xlu0 %1519
          %1521 = vadd.xlane.f32.xlu0 %v1450
          %v1522 = vpop.xlane.xlu0 %1521
          %1523 = vadd.xlane.f32.xlu0 %v1453
          %v1524 = vpop.xlane.xlu0 %1523
          %1525 = vadd.xlane.f32.xlu0 %v1456
          %v1526 = vpop.xlane.xlu0 %1525
          %1527 = vadd.xlane.f32.xlu0 %v1459
          %v1528 = vpop.xlane.xlu0 %1527
          %1529 = vadd.xlane.f32.xlu0 %v1462
          %v1530 = vpop.xlane.xlu0 %1529
          %1531 = vadd.xlane.f32.xlu0 %v1465
          %v1532 = vpop.xlane.xlu0 %1531
          %1533 = vadd.xlane.f32.xlu0 %v1468
          %v1534 = vpop.xlane.xlu0 %1533
          %1535 = vadd.xlane.f32.xlu0 %v1471
          %v1536 = vpop.xlane.xlu0 %1535
          %v1537 = vrcp.pop 128.0
          %v1538 = vmul.f32 128.0, %v1537
          %v1539 = vsub.f32 1.0, %v1538
          %v1540 = vmul.f32 %v1537, %v1539
          %v1541 = vadd.f32 %v1537, %v1540
          %vm1542 = vweird.f32 %v1537
          %v1543 = vsel %vm1542, %v1537, %v1541
          %v1544 = vmul.f32 %v1474, %v1543
          %v1545 = vmul.f32 %v1476, %v1543
          %v1546 = vmul.f32 %v1478, %v1543
          %v1547 = vmul.f32 %v1480, %v1543
          %v1548 = vmul.f32 %v1482, %v1543
          %v1549 = vmul.f32 %v1484, %v1543
          %v1550 = vmul.f32 %v1486, %v1543
          %v1551 = vmul.f32 %v1488, %v1543
          %v1552 = vmul.f32 %v1490, %v1543
          %v1553 = vmul.f32 %v1492, %v1543
          %v1554 = vmul.f32 %v1494, %v1543
          %v1555 = vmul.f32 %v1496, %v1543
          %v1556 = vmul.f32 %v1498, %v1543
          %v1557 = vmul.f32 %v1500, %v1543
          %v1558 = vmul.f32 %v1502, %v1543
          %v1559 = vmul.f32 %v1504, %v1543
          %v1560 = vmul.f32 %v1506, %v1543
          %v1561 = vmul.f32 %v1508, %v1543
          %v1562 = vmul.f32 %v1510, %v1543
          %v1563 = vmul.f32 %v1512, %v1543
          %v1564 = vmul.f32 %v1514, %v1543
          %v1565 = vmul.f32 %v1516, %v1543
          %v1566 = vmul.f32 %v1518, %v1543
          %v1567 = vmul.f32 %v1520, %v1543
          %v1568 = vmul.f32 %v1522, %v1543
          %v1569 = vmul.f32 %v1524, %v1543
          %v1570 = vmul.f32 %v1526, %v1543
          %v1571 = vmul.f32 %v1528, %v1543
          %v1572 = vmul.f32 %v1530, %v1543
          %v1573 = vmul.f32 %v1532, %v1543
          %v1574 = vmul.f32 %v1534, %v1543
          %v1575 = vmul.f32 %v1536, %v1543
          %v1576 = vsub.f32 %v1378, %v1544
          %v1577 = vsub.f32 %v1381, %v1545
          %v1578 = vsub.f32 %v1384, %v1546
          %v1579 = vsub.f32 %v1387, %v1547
          %v1580 = vsub.f32 %v1390, %v1548
          %v1581 = vsub.f32 %v1393, %v1549
          %v1582 = vsub.f32 %v1396, %v1550
          %v1583 = vsub.f32 %v1399, %v1551
          %v1584 = vsub.f32 %v1402, %v1552
          %v1585 = vsub.f32 %v1405, %v1553
          %v1586 = vsub.f32 %v1408, %v1554
          %v1587 = vsub.f32 %v1411, %v1555
          %v1588 = vsub.f32 %v1414, %v1556
          %v1589 = vsub.f32 %v1417, %v1557
          %v1590 = vsub.f32 %v1420, %v1558
          %v1591 = vsub.f32 %v1423, %v1559
          %v1592 = vsub.f32 %v1426, %v1560
          %v1593 = vsub.f32 %v1429, %v1561
          %v1594 = vsub.f32 %v1432, %v1562
          %v1595 = vsub.f32 %v1435, %v1563
          %v1596 = vsub.f32 %v1438, %v1564
          %v1597 = vsub.f32 %v1441, %v1565
          %v1598 = vsub.f32 %v1444, %v1566
          %v1599 = vsub.f32 %v1447, %v1567
          %v1600 = vsub.f32 %v1450, %v1568
          %v1601 = vsub.f32 %v1453, %v1569
          %v1602 = vsub.f32 %v1456, %v1570
          %v1603 = vsub.f32 %v1459, %v1571
          %v1604 = vsub.f32 %v1462, %v1572
          %v1605 = vsub.f32 %v1465, %v1573
          %v1606 = vsub.f32 %v1468, %v1574
          %v1607 = vsub.f32 %v1471, %v1575
          %v1608 = vmul.f32 %v1576, %v1576
          %v1609 = vmul.f32 %v1577, %v1577
          %v1610 = vmul.f32 %v1578, %v1578
          %v1611 = vmul.f32 %v1579, %v1579
          %v1612 = vmul.f32 %v1580, %v1580
          %v1613 = vmul.f32 %v1581, %v1581
          %v1614 = vmul.f32 %v1582, %v1582
          %v1615 = vmul.f32 %v1583, %v1583
          %v1616 = vmul.f32 %v1584, %v1584
          %v1617 = vmul.f32 %v1585, %v1585
          %v1618 = vmul.f32 %v1586, %v1586
          %v1619 = vmul.f32 %v1587, %v1587
          %v1620 = vmul.f32 %v1588, %v1588
          %v1621 = vmul.f32 %v1589, %v1589
          %v1622 = vmul.f32 %v1590, %v1590
          %v1623 = vmul.f32 %v1591, %v1591
          %v1624 = vmul.f32 %v1592, %v1592
          %v1625 = vmul.f32 %v1593, %v1593
          %v1626 = vmul.f32 %v1594, %v1594
          %v1627 = vmul.f32 %v1595, %v1595
          %v1628 = vmul.f32 %v1596, %v1596
          %v1629 = vmul.f32 %v1597, %v1597
          %v1630 = vmul.f32 %v1598, %v1598
          %v1631 = vmul.f32 %v1599, %v1599
          %v1632 = vmul.f32 %v1600, %v1600
          %v1633 = vmul.f32 %v1601, %v1601
          %v1634 = vmul.f32 %v1602, %v1602
          %v1635 = vmul.f32 %v1603, %v1603
          %v1636 = vmul.f32 %v1604, %v1604
          %v1637 = vmul.f32 %v1605, %v1605
          %v1638 = vmul.f32 %v1606, %v1606
          %v1639 = vmul.f32 %v1607, %v1607
          %1640 = vadd.xlane.f32.xlu0 %v1608
          %v1641 = vpop.xlane.xlu0 %1640
          %1642 = vadd.xlane.f32.xlu0 %v1609
          %v1643 = vpop.xlane.xlu0 %1642
          %1644 = vadd.xlane.f32.xlu0 %v1610
          %v1645 = vpop.xlane.xlu0 %1644
          %1646 = vadd.xlane.f32.xlu0 %v1611
          %v1647 = vpop.xlane.xlu0 %1646
          %1648 = vadd.xlane.f32.xlu0 %v1612
          %v1649 = vpop.xlane.xlu0 %1648
          %1650 = vadd.xlane.f32.xlu0 %v1613
          %v1651 = vpop.xlane.xlu0 %1650
          %1652 = vadd.xlane.f32.xlu0 %v1614
          %v1653 = vpop.xlane.xlu0 %1652
          %1654 = vadd.xlane.f32.xlu0 %v1615
          %v1655 = vpop.xlane.xlu0 %1654
          %1656 = vadd.xlane.f32.xlu0 %v1616
          %v1657 = vpop.xlane.xlu0 %1656
          %1658 = vadd.xlane.f32.xlu0 %v1617
          %v1659 = vpop.xlane.xlu0 %1658
          %1660 = vadd.xlane.f32.xlu0 %v1618
          %v1661 = vpop.xlane.xlu0 %1660
          %1662 = vadd.xlane.f32.xlu0 %v1619
          %v1663 = vpop.xlane.xlu0 %1662
          %1664 = vadd.xlane.f32.xlu0 %v1620
          %v1665 = vpop.xlane.xlu0 %1664
          %1666 = vadd.xlane.f32.xlu0 %v1621
          %v1667 = vpop.xlane.xlu0 %1666
          %1668 = vadd.xlane.f32.xlu0 %v1622
          %v1669 = vpop.xlane.xlu0 %1668
          %1670 = vadd.xlane.f32.xlu0 %v1623
          %v1671 = vpop.xlane.xlu0 %1670
          %1672 = vadd.xlane.f32.xlu0 %v1624
          %v1673 = vpop.xlane.xlu0 %1672
          %1674 = vadd.xlane.f32.xlu0 %v1625
          %v1675 = vpop.xlane.xlu0 %1674
          %1676 = vadd.xlane.f32.xlu0 %v1626
          %v1677 = vpop.xlane.xlu0 %1676
          %1678 = vadd.xlane.f32.xlu0 %v1627
          %v1679 = vpop.xlane.xlu0 %1678
          %1680 = vadd.xlane.f32.xlu0 %v1628
          %v1681 = vpop.xlane.xlu0 %1680
          %1682 = vadd.xlane.f32.xlu0 %v1629
          %v1683 = vpop.xlane.xlu0 %1682
          %1684 = vadd.xlane.f32.xlu0 %v1630
          %v1685 = vpop.xlane.xlu0 %1684
          %1686 = vadd.xlane.f32.xlu0 %v1631
          %v1687 = vpop.xlane.xlu0 %1686
          %1688 = vadd.xlane.f32.xlu0 %v1632
          %v1689 = vpop.xlane.xlu0 %1688
          %1690 = vadd.xlane.f32.xlu0 %v1633
          %v1691 = vpop.xlane.xlu0 %1690
          %1692 = vadd.xlane.f32.xlu0 %v1634
          %v1693 = vpop.xlane.xlu0 %1692
          %1694 = vadd.xlane.f32.xlu0 %v1635
          %v1695 = vpop.xlane.xlu0 %1694
          %1696 = vadd.xlane.f32.xlu0 %v1636
          %v1697 = vpop.xlane.xlu0 %1696
          %1698 = vadd.xlane.f32.xlu0 %v1637
          %v1699 = vpop.xlane.xlu0 %1698
          %1700 = vadd.xlane.f32.xlu0 %v1638
          %v1701 = vpop.xlane.xlu0 %1700
          %1702 = vadd.xlane.f32.xlu0 %v1639
          %v1703 = vpop.xlane.xlu0 %1702
          %v1704 = vmul.f32 %v1641, %v1543
          %v1705 = vmul.f32 %v1643, %v1543
          %v1706 = vmul.f32 %v1645, %v1543
          %v1707 = vmul.f32 %v1647, %v1543
          %v1708 = vmul.f32 %v1649, %v1543
          %v1709 = vmul.f32 %v1651, %v1543
          %v1710 = vmul.f32 %v1653, %v1543
          %v1711 = vmul.f32 %v1655, %v1543
          %v1712 = vmul.f32 %v1657, %v1543
          %v1713 = vmul.f32 %v1659, %v1543
          %v1714 = vmul.f32 %v1661, %v1543
          %v1715 = vmul.f32 %v1663, %v1543
          %v1716 = vmul.f32 %v1665, %v1543
          %v1717 = vmul.f32 %v1667, %v1543
          %v1718 = vmul.f32 %v1669, %v1543
          %v1719 = vmul.f32 %v1671, %v1543
          %v1720 = vmul.f32 %v1673, %v1543
          %v1721 = vmul.f32 %v1675, %v1543
          %v1722 = vmul.f32 %v1677, %v1543
          %v1723 = vmul.f32 %v1679, %v1543
          %v1724 = vmul.f32 %v1681, %v1543
          %v1725 = vmul.f32 %v1683, %v1543
          %v1726 = vmul.f32 %v1685, %v1543
          %v1727 = vmul.f32 %v1687, %v1543
          %v1728 = vmul.f32 %v1689, %v1543
          %v1729 = vmul.f32 %v1691, %v1543
          %v1730 = vmul.f32 %v1693, %v1543
          %v1731 = vmul.f32 %v1695, %v1543
          %v1732 = vmul.f32 %v1697, %v1543
          %v1733 = vmul.f32 %v1699, %v1543
          %v1734 = vmul.f32 %v1701, %v1543
          %v1735 = vmul.f32 %v1703, %v1543
          %v1736 = vadd.f32 %v1704, 1e-05
          %v1737 = vadd.f32 %v1705, 1e-05
          %v1738 = vadd.f32 %v1706, 1e-05
          %v1739 = vadd.f32 %v1707, 1e-05
          %v1740 = vadd.f32 %v1708, 1e-05
          %v1741 = vadd.f32 %v1709, 1e-05
          %v1742 = vadd.f32 %v1710, 1e-05
          %v1743 = vadd.f32 %v1711, 1e-05
          %v1744 = vadd.f32 %v1712, 1e-05
          %v1745 = vadd.f32 %v1713, 1e-05
          %v1746 = vadd.f32 %v1714, 1e-05
          %v1747 = vadd.f32 %v1715, 1e-05
          %v1748 = vadd.f32 %v1716, 1e-05
          %v1749 = vadd.f32 %v1717, 1e-05
          %v1750 = vadd.f32 %v1718, 1e-05
          %v1751 = vadd.f32 %v1719, 1e-05
          %v1752 = vadd.f32 %v1720, 1e-05
          %v1753 = vadd.f32 %v1721, 1e-05
          %v1754 = vadd.f32 %v1722, 1e-05
          %v1755 = vadd.f32 %v1723, 1e-05
          %v1756 = vadd.f32 %v1724, 1e-05
          %v1757 = vadd.f32 %v1725, 1e-05
          %v1758 = vadd.f32 %v1726, 1e-05
          %v1759 = vadd.f32 %v1727, 1e-05
          %v1760 = vadd.f32 %v1728, 1e-05
          %v1761 = vadd.f32 %v1729, 1e-05
          %v1762 = vadd.f32 %v1730, 1e-05
          %v1763 = vadd.f32 %v1731, 1e-05
          %v1764 = vadd.f32 %v1732, 1e-05
          %v1765 = vadd.f32 %v1733, 1e-05
          %v1766 = vadd.f32 %v1734, 1e-05
          %v1767 = vadd.f32 %v1735, 1e-05
          %v1768 = vrsqrt.pop %v1736
          %v1769 = vmul.f32 %v1768, %v1736
          %v1770 = vmul.f32 %v1769, %v1768
          %v1771 = vmul.f32 0.5, %v1770
          %v1772 = vsub.f32 1.5, %v1771
          %v1773 = vmul.f32 %v1768, %v1772
          %vm1774 = vweird.f32 %v1736
          %vm1775 = vweird.f32 %v1768
          %vm1776 = vmor %vm1774, %vm1775
          %v1777 = vsel %vm1776, %v1768, %v1773
          %v1778 = vrsqrt.pop %v1737
          %v1779 = vmul.f32 %v1778, %v1737
          %v1780 = vmul.f32 %v1779, %v1778
          %v1781 = vmul.f32 0.5, %v1780
          %v1782 = vsub.f32 1.5, %v1781
          %v1783 = vmul.f32 %v1778, %v1782
          %vm1784 = vweird.f32 %v1737
          %vm1785 = vweird.f32 %v1778
          %vm1786 = vmor %vm1784, %vm1785
          %v1787 = vsel %vm1786, %v1778, %v1783
          %v1788 = vrsqrt.pop %v1738
          %v1789 = vmul.f32 %v1788, %v1738
          %v1790 = vmul.f32 %v1789, %v1788
          %v1791 = vmul.f32 0.5, %v1790
          %v1792 = vsub.f32 1.5, %v1791
          %v1793 = vmul.f32 %v1788, %v1792
          %vm1794 = vweird.f32 %v1738
          %vm1795 = vweird.f32 %v1788
          %vm1796 = vmor %vm1794, %vm1795
          %v1797 = vsel %vm1796, %v1788, %v1793
          %v1798 = vrsqrt.pop %v1739
          %v1799 = vmul.f32 %v1798, %v1739
          %v1800 = vmul.f32 %v1799, %v1798
          %v1801 = vmul.f32 0.5, %v1800
          %v1802 = vsub.f32 1.5, %v1801
          %v1803 = vmul.f32 %v1798, %v1802
          %vm1804 = vweird.f32 %v1739
          %vm1805 = vweird.f32 %v1798
          %vm1806 = vmor %vm1804, %vm1805
          %v1807 = vsel %vm1806, %v1798, %v1803
          %v1808 = vrsqrt.pop %v1740
          %v1809 = vmul.f32 %v1808, %v1740
          %v1810 = vmul.f32 %v1809, %v1808
          %v1811 = vmul.f32 0.5, %v1810
          %v1812 = vsub.f32 1.5, %v1811
          %v1813 = vmul.f32 %v1808, %v1812
          %vm1814 = vweird.f32 %v1740
          %vm1815 = vweird.f32 %v1808
          %vm1816 = vmor %vm1814, %vm1815
          %v1817 = vsel %vm1816, %v1808, %v1813
          %v1818 = vrsqrt.pop %v1741
          %v1819 = vmul.f32 %v1818, %v1741
          %v1820 = vmul.f32 %v1819, %v1818
          %v1821 = vmul.f32 0.5, %v1820
          %v1822 = vsub.f32 1.5, %v1821
          %v1823 = vmul.f32 %v1818, %v1822
          %vm1824 = vweird.f32 %v1741
          %vm1825 = vweird.f32 %v1818
          %vm1826 = vmor %vm1824, %vm1825
          %v1827 = vsel %vm1826, %v1818, %v1823
          %v1828 = vrsqrt.pop %v1742
          %v1829 = vmul.f32 %v1828, %v1742
          %v1830 = vmul.f32 %v1829, %v1828
          %v1831 = vmul.f32 0.5, %v1830
          %v1832 = vsub.f32 1.5, %v1831
          %v1833 = vmul.f32 %v1828, %v1832
          %vm1834 = vweird.f32 %v1742
          %vm1835 = vweird.f32 %v1828
          %vm1836 = vmor %vm1834, %vm1835
          %v1837 = vsel %vm1836, %v1828, %v1833
          %v1838 = vrsqrt.pop %v1743
          %v1839 = vmul.f32 %v1838, %v1743
          %v1840 = vmul.f32 %v1839, %v1838
          %v1841 = vmul.f32 0.5, %v1840
          %v1842 = vsub.f32 1.5, %v1841
          %v1843 = vmul.f32 %v1838, %v1842
          %vm1844 = vweird.f32 %v1743
          %vm1845 = vweird.f32 %v1838
          %vm1846 = vmor %vm1844, %vm1845
          %v1847 = vsel %vm1846, %v1838, %v1843
          %v1848 = vrsqrt.pop %v1744
          %v1849 = vmul.f32 %v1848, %v1744
          %v1850 = vmul.f32 %v1849, %v1848
          %v1851 = vmul.f32 0.5, %v1850
          %v1852 = vsub.f32 1.5, %v1851
          %v1853 = vmul.f32 %v1848, %v1852
          %vm1854 = vweird.f32 %v1744
          %vm1855 = vweird.f32 %v1848
          %vm1856 = vmor %vm1854, %vm1855
          %v1857 = vsel %vm1856, %v1848, %v1853
          %v1858 = vrsqrt.pop %v1745
          %v1859 = vmul.f32 %v1858, %v1745
          %v1860 = vmul.f32 %v1859, %v1858
          %v1861 = vmul.f32 0.5, %v1860
          %v1862 = vsub.f32 1.5, %v1861
          %v1863 = vmul.f32 %v1858, %v1862
          %vm1864 = vweird.f32 %v1745
          %vm1865 = vweird.f32 %v1858
          %vm1866 = vmor %vm1864, %vm1865
          %v1867 = vsel %vm1866, %v1858, %v1863
          %v1868 = vrsqrt.pop %v1746
          %v1869 = vmul.f32 %v1868, %v1746
          %v1870 = vmul.f32 %v1869, %v1868
          %v1871 = vmul.f32 0.5, %v1870
          %v1872 = vsub.f32 1.5, %v1871
          %v1873 = vmul.f32 %v1868, %v1872
          %vm1874 = vweird.f32 %v1746
          %vm1875 = vweird.f32 %v1868
          %vm1876 = vmor %vm1874, %vm1875
          %v1877 = vsel %vm1876, %v1868, %v1873
          %v1878 = vrsqrt.pop %v1747
          %v1879 = vmul.f32 %v1878, %v1747
          %v1880 = vmul.f32 %v1879, %v1878
          %v1881 = vmul.f32 0.5, %v1880
          %v1882 = vsub.f32 1.5, %v1881
          %v1883 = vmul.f32 %v1878, %v1882
          %vm1884 = vweird.f32 %v1747
          %vm1885 = vweird.f32 %v1878
          %vm1886 = vmor %vm1884, %vm1885
          %v1887 = vsel %vm1886, %v1878, %v1883
          %v1888 = vrsqrt.pop %v1748
          %v1889 = vmul.f32 %v1888, %v1748
          %v1890 = vmul.f32 %v1889, %v1888
          %v1891 = vmul.f32 0.5, %v1890
          %v1892 = vsub.f32 1.5, %v1891
          %v1893 = vmul.f32 %v1888, %v1892
          %vm1894 = vweird.f32 %v1748
          %vm1895 = vweird.f32 %v1888
          %vm1896 = vmor %vm1894, %vm1895
          %v1897 = vsel %vm1896, %v1888, %v1893
          %v1898 = vrsqrt.pop %v1749
          %v1899 = vmul.f32 %v1898, %v1749
          %v1900 = vmul.f32 %v1899, %v1898
          %v1901 = vmul.f32 0.5, %v1900
          %v1902 = vsub.f32 1.5, %v1901
          %v1903 = vmul.f32 %v1898, %v1902
          %vm1904 = vweird.f32 %v1749
          %vm1905 = vweird.f32 %v1898
          %vm1906 = vmor %vm1904, %vm1905
          %v1907 = vsel %vm1906, %v1898, %v1903
          %v1908 = vrsqrt.pop %v1750
          %v1909 = vmul.f32 %v1908, %v1750
          %v1910 = vmul.f32 %v1909, %v1908
          %v1911 = vmul.f32 0.5, %v1910
          %v1912 = vsub.f32 1.5, %v1911
          %v1913 = vmul.f32 %v1908, %v1912
          %vm1914 = vweird.f32 %v1750
          %vm1915 = vweird.f32 %v1908
          %vm1916 = vmor %vm1914, %vm1915
          %v1917 = vsel %vm1916, %v1908, %v1913
          %v1918 = vrsqrt.pop %v1751
          %v1919 = vmul.f32 %v1918, %v1751
          %v1920 = vmul.f32 %v1919, %v1918
          %v1921 = vmul.f32 0.5, %v1920
          %v1922 = vsub.f32 1.5, %v1921
          %v1923 = vmul.f32 %v1918, %v1922
          %vm1924 = vweird.f32 %v1751
          %vm1925 = vweird.f32 %v1918
          %vm1926 = vmor %vm1924, %vm1925
          %v1927 = vsel %vm1926, %v1918, %v1923
          %v1928 = vrsqrt.pop %v1752
          %v1929 = vmul.f32 %v1928, %v1752
          %v1930 = vmul.f32 %v1929, %v1928
          %v1931 = vmul.f32 0.5, %v1930
          %v1932 = vsub.f32 1.5, %v1931
          %v1933 = vmul.f32 %v1928, %v1932
          %vm1934 = vweird.f32 %v1752
          %vm1935 = vweird.f32 %v1928
          %vm1936 = vmor %vm1934, %vm1935
          %v1937 = vsel %vm1936, %v1928, %v1933
          %v1938 = vrsqrt.pop %v1753
          %v1939 = vmul.f32 %v1938, %v1753
          %v1940 = vmul.f32 %v1939, %v1938
          %v1941 = vmul.f32 0.5, %v1940
          %v1942 = vsub.f32 1.5, %v1941
          %v1943 = vmul.f32 %v1938, %v1942
          %vm1944 = vweird.f32 %v1753
          %vm1945 = vweird.f32 %v1938
          %vm1946 = vmor %vm1944, %vm1945
          %v1947 = vsel %vm1946, %v1938, %v1943
          %v1948 = vrsqrt.pop %v1754
          %v1949 = vmul.f32 %v1948, %v1754
          %v1950 = vmul.f32 %v1949, %v1948
          %v1951 = vmul.f32 0.5, %v1950
          %v1952 = vsub.f32 1.5, %v1951
          %v1953 = vmul.f32 %v1948, %v1952
          %vm1954 = vweird.f32 %v1754
          %vm1955 = vweird.f32 %v1948
          %vm1956 = vmor %vm1954, %vm1955
          %v1957 = vsel %vm1956, %v1948, %v1953
          %v1958 = vrsqrt.pop %v1755
          %v1959 = vmul.f32 %v1958, %v1755
          %v1960 = vmul.f32 %v1959, %v1958
          %v1961 = vmul.f32 0.5, %v1960
          %v1962 = vsub.f32 1.5, %v1961
          %v1963 = vmul.f32 %v1958, %v1962
          %vm1964 = vweird.f32 %v1755
          %vm1965 = vweird.f32 %v1958
          %vm1966 = vmor %vm1964, %vm1965
          %v1967 = vsel %vm1966, %v1958, %v1963
          %v1968 = vrsqrt.pop %v1756
          %v1969 = vmul.f32 %v1968, %v1756
          %v1970 = vmul.f32 %v1969, %v1968
          %v1971 = vmul.f32 0.5, %v1970
          %v1972 = vsub.f32 1.5, %v1971
          %v1973 = vmul.f32 %v1968, %v1972
          %vm1974 = vweird.f32 %v1756
          %vm1975 = vweird.f32 %v1968
          %vm1976 = vmor %vm1974, %vm1975
          %v1977 = vsel %vm1976, %v1968, %v1973
          %v1978 = vrsqrt.pop %v1757
          %v1979 = vmul.f32 %v1978, %v1757
          %v1980 = vmul.f32 %v1979, %v1978
          %v1981 = vmul.f32 0.5, %v1980
          %v1982 = vsub.f32 1.5, %v1981
          %v1983 = vmul.f32 %v1978, %v1982
          %vm1984 = vweird.f32 %v1757
          %vm1985 = vweird.f32 %v1978
          %vm1986 = vmor %vm1984, %vm1985
          %v1987 = vsel %vm1986, %v1978, %v1983
          %v1988 = vrsqrt.pop %v1758
          %v1989 = vmul.f32 %v1988, %v1758
          %v1990 = vmul.f32 %v1989, %v1988
          %v1991 = vmul.f32 0.5, %v1990
          %v1992 = vsub.f32 1.5, %v1991
          %v1993 = vmul.f32 %v1988, %v1992
          %vm1994 = vweird.f32 %v1758
          %vm1995 = vweird.f32 %v1988
          %vm1996 = vmor %vm1994, %vm1995
          %v1997 = vsel %vm1996, %v1988, %v1993
          %v1998 = vrsqrt.pop %v1759
          %v1999 = vmul.f32 %v1998, %v1759
          %v2000 = vmul.f32 %v1999, %v1998
          %v2001 = vmul.f32 0.5, %v2000
          %v2002 = vsub.f32 1.5, %v2001
          %v2003 = vmul.f32 %v1998, %v2002
          %vm2004 = vweird.f32 %v1759
          %vm2005 = vweird.f32 %v1998
          %vm2006 = vmor %vm2004, %vm2005
          %v2007 = vsel %vm2006, %v1998, %v2003
          %v2008 = vrsqrt.pop %v1760
          %v2009 = vmul.f32 %v2008, %v1760
          %v2010 = vmul.f32 %v2009, %v2008
          %v2011 = vmul.f32 0.5, %v2010
          %v2012 = vsub.f32 1.5, %v2011
          %v2013 = vmul.f32 %v2008, %v2012
          %vm2014 = vweird.f32 %v1760
          %vm2015 = vweird.f32 %v2008
          %vm2016 = vmor %vm2014, %vm2015
          %v2017 = vsel %vm2016, %v2008, %v2013
          %v2018 = vrsqrt.pop %v1761
          %v2019 = vmul.f32 %v2018, %v1761
          %v2020 = vmul.f32 %v2019, %v2018
          %v2021 = vmul.f32 0.5, %v2020
          %v2022 = vsub.f32 1.5, %v2021
          %v2023 = vmul.f32 %v2018, %v2022
          %vm2024 = vweird.f32 %v1761
          %vm2025 = vweird.f32 %v2018
          %vm2026 = vmor %vm2024, %vm2025
          %v2027 = vsel %vm2026, %v2018, %v2023
          %v2028 = vrsqrt.pop %v1762
          %v2029 = vmul.f32 %v2028, %v1762
          %v2030 = vmul.f32 %v2029, %v2028
          %v2031 = vmul.f32 0.5, %v2030
          %v2032 = vsub.f32 1.5, %v2031
          %v2033 = vmul.f32 %v2028, %v2032
          %vm2034 = vweird.f32 %v1762
          %vm2035 = vweird.f32 %v2028
          %vm2036 = vmor %vm2034, %vm2035
          %v2037 = vsel %vm2036, %v2028, %v2033
          %v2038 = vrsqrt.pop %v1763
          %v2039 = vmul.f32 %v2038, %v1763
          %v2040 = vmul.f32 %v2039, %v2038
          %v2041 = vmul.f32 0.5, %v2040
          %v2042 = vsub.f32 1.5, %v2041
          %v2043 = vmul.f32 %v2038, %v2042
          %vm2044 = vweird.f32 %v1763
          %vm2045 = vweird.f32 %v2038
          %vm2046 = vmor %vm2044, %vm2045
          %v2047 = vsel %vm2046, %v2038, %v2043
          %v2048 = vrsqrt.pop %v1764
          %v2049 = vmul.f32 %v2048, %v1764
          %v2050 = vmul.f32 %v2049, %v2048
          %v2051 = vmul.f32 0.5, %v2050
          %v2052 = vsub.f32 1.5, %v2051
          %v2053 = vmul.f32 %v2048, %v2052
          %vm2054 = vweird.f32 %v1764
          %vm2055 = vweird.f32 %v2048
          %vm2056 = vmor %vm2054, %vm2055
          %v2057 = vsel %vm2056, %v2048, %v2053
          %v2058 = vrsqrt.pop %v1765
          %v2059 = vmul.f32 %v2058, %v1765
          %v2060 = vmul.f32 %v2059, %v2058
          %v2061 = vmul.f32 0.5, %v2060
          %v2062 = vsub.f32 1.5, %v2061
          %v2063 = vmul.f32 %v2058, %v2062
          %vm2064 = vweird.f32 %v1765
          %vm2065 = vweird.f32 %v2058
          %vm2066 = vmor %vm2064, %vm2065
          %v2067 = vsel %vm2066, %v2058, %v2063
          %v2068 = vrsqrt.pop %v1766
          %v2069 = vmul.f32 %v2068, %v1766
          %v2070 = vmul.f32 %v2069, %v2068
          %v2071 = vmul.f32 0.5, %v2070
          %v2072 = vsub.f32 1.5, %v2071
          %v2073 = vmul.f32 %v2068, %v2072
          %vm2074 = vweird.f32 %v1766
          %vm2075 = vweird.f32 %v2068
          %vm2076 = vmor %vm2074, %vm2075
          %v2077 = vsel %vm2076, %v2068, %v2073
          %v2078 = vrsqrt.pop %v1767
          %v2079 = vmul.f32 %v2078, %v1767
          %v2080 = vmul.f32 %v2079, %v2078
          %v2081 = vmul.f32 0.5, %v2080
          %v2082 = vsub.f32 1.5, %v2081
          %v2083 = vmul.f32 %v2078, %v2082
          %vm2084 = vweird.f32 %v1767
          %vm2085 = vweird.f32 %v2078
          %vm2086 = vmor %vm2084, %vm2085
          %v2087 = vsel %vm2086, %v2078, %v2083
          %v2088 = vmul.f32 %v1576, %v1777
          %v2089 = vmul.f32 %v1577, %v1787
          %v2090 = vmul.f32 %v1578, %v1797
          %v2091 = vmul.f32 %v1579, %v1807
          %v2092 = vmul.f32 %v1580, %v1817
          %v2093 = vmul.f32 %v1581, %v1827
          %v2094 = vmul.f32 %v1582, %v1837
          %v2095 = vmul.f32 %v1583, %v1847
          %v2096 = vmul.f32 %v1584, %v1857
          %v2097 = vmul.f32 %v1585, %v1867
          %v2098 = vmul.f32 %v1586, %v1877
          %v2099 = vmul.f32 %v1587, %v1887
          %v2100 = vmul.f32 %v1588, %v1897
          %v2101 = vmul.f32 %v1589, %v1907
          %v2102 = vmul.f32 %v1590, %v1917
          %v2103 = vmul.f32 %v1591, %v1927
          %v2104 = vmul.f32 %v1592, %v1937
          %v2105 = vmul.f32 %v1593, %v1947
          %v2106 = vmul.f32 %v1594, %v1957
          %v2107 = vmul.f32 %v1595, %v1967
          %v2108 = vmul.f32 %v1596, %v1977
          %v2109 = vmul.f32 %v1597, %v1987
          %v2110 = vmul.f32 %v1598, %v1997
          %v2111 = vmul.f32 %v1599, %v2007
          %v2112 = vmul.f32 %v1600, %v2017
          %v2113 = vmul.f32 %v1601, %v2027
          %v2114 = vmul.f32 %v1602, %v2037
          %v2115 = vmul.f32 %v1603, %v2047
          %v2116 = vmul.f32 %v1604, %v2057
          %v2117 = vmul.f32 %v1605, %v2067
          %v2118 = vmul.f32 %v1606, %v2077
          %v2119 = vmul.f32 %v1607, %v2087
          %v2120 = vperm.slane %v491, 2
          %v2121 = vmul.f32 %v2088, %v2120
          %v2122 = vmul.f32 %v2089, %v2120
          %v2123 = vmul.f32 %v2090, %v2120
          %v2124 = vmul.f32 %v2091, %v2120
          %v2125 = vmul.f32 %v2092, %v2120
          %v2126 = vmul.f32 %v2093, %v2120
          %v2127 = vmul.f32 %v2094, %v2120
          %v2128 = vmul.f32 %v2095, %v2120
          %v2129 = vmul.f32 %v2096, %v2120
          %v2130 = vmul.f32 %v2097, %v2120
          %v2131 = vmul.f32 %v2098, %v2120
          %v2132 = vmul.f32 %v2099, %v2120
          %v2133 = vmul.f32 %v2100, %v2120
          %v2134 = vmul.f32 %v2101, %v2120
          %v2135 = vmul.f32 %v2102, %v2120
          %v2136 = vmul.f32 %v2103, %v2120
          %v2137 = vmul.f32 %v2104, %v2120
          %v2138 = vmul.f32 %v2105, %v2120
          %v2139 = vmul.f32 %v2106, %v2120
          %v2140 = vmul.f32 %v2107, %v2120
          %v2141 = vmul.f32 %v2108, %v2120
          %v2142 = vmul.f32 %v2109, %v2120
          %v2143 = vmul.f32 %v2110, %v2120
          %v2144 = vmul.f32 %v2111, %v2120
          %v2145 = vmul.f32 %v2112, %v2120
          %v2146 = vmul.f32 %v2113, %v2120
          %v2147 = vmul.f32 %v2114, %v2120
          %v2148 = vmul.f32 %v2115, %v2120
          %v2149 = vmul.f32 %v2116, %v2120
          %v2150 = vmul.f32 %v2117, %v2120
          %v2151 = vmul.f32 %v2118, %v2120
          %v2152 = vmul.f32 %v2119, %v2120
          %v2153 = vperm.slane %v491, 3
          %v2154 = vadd.f32 %v2121, %v2153
          %v2155 = vadd.f32 %v2122, %v2153
          %v2156 = vadd.f32 %v2123, %v2153
          %v2157 = vadd.f32 %v2124, %v2153
          %v2158 = vadd.f32 %v2125, %v2153
          %v2159 = vadd.f32 %v2126, %v2153
          %v2160 = vadd.f32 %v2127, %v2153
          %v2161 = vadd.f32 %v2128, %v2153
          %v2162 = vadd.f32 %v2129, %v2153
          %v2163 = vadd.f32 %v2130, %v2153
          %v2164 = vadd.f32 %v2131, %v2153
          %v2165 = vadd.f32 %v2132, %v2153
          %v2166 = vadd.f32 %v2133, %v2153
          %v2167 = vadd.f32 %v2134, %v2153
          %v2168 = vadd.f32 %v2135, %v2153
          %v2169 = vadd.f32 %v2136, %v2153
          %v2170 = vadd.f32 %v2137, %v2153
          %v2171 = vadd.f32 %v2138, %v2153
          %v2172 = vadd.f32 %v2139, %v2153
          %v2173 = vadd.f32 %v2140, %v2153
          %v2174 = vadd.f32 %v2141, %v2153
          %v2175 = vadd.f32 %v2142, %v2153
          %v2176 = vadd.f32 %v2143, %v2153
          %v2177 = vadd.f32 %v2144, %v2153
          %v2178 = vadd.f32 %v2145, %v2153
          %v2179 = vadd.f32 %v2146, %v2153
          %v2180 = vadd.f32 %v2147, %v2153
          %v2181 = vadd.f32 %v2148, %v2153
          %v2182 = vadd.f32 %v2149, %v2153
          %v2183 = vadd.f32 %v2150, %v2153
          %v2184 = vadd.f32 %v2151, %v2153
          %v2185 = vadd.f32 %v2152, %v2153
          %2186 = vst [vmem:[%s399] sm:$0xff] %v2154
          %2187 = vst [vmem:[%s399 + $0x8] sm:$0xff] %v2155
          %2188 = vst [vmem:[%s399 + $0x10] sm:$0xff] %v2156
          %2189 = vst [vmem:[%s399 + $0x18] sm:$0xff] %v2157
          %2190 = vst [vmem:[%s399 + $0x20] sm:$0xff] %v2158
          %2191 = vst [vmem:[%s399 + $0x28] sm:$0xff] %v2159
          %2192 = vst [vmem:[%s399 + $0x30] sm:$0xff] %v2160
          %2193 = vst [vmem:[%s399 + $0x38] sm:$0xff] %v2161
          %2194 = vst [vmem:[%s399 + $0x40] sm:$0xff] %v2162
          %2195 = vst [vmem:[%s399 + $0x48] sm:$0xff] %v2163
          %2196 = vst [vmem:[%s399 + $0x50] sm:$0xff] %v2164
          %2197 = vst [vmem:[%s399 + $0x58] sm:$0xff] %v2165
          %2198 = vst [vmem:[%s399 + $0x60] sm:$0xff] %v2166
          %2199 = vst [vmem:[%s399 + $0x68] sm:$0xff] %v2167
          %2200 = vst [vmem:[%s399 + $0x70] sm:$0xff] %v2168
          %2201 = vst [vmem:[%s399 + $0x78] sm:$0xff] %v2169
          %2202 = vst [vmem:[%s399 + $0x80] sm:$0xff] %v2170
          %2203 = vst [vmem:[%s399 + $0x88] sm:$0xff] %v2171
          %2204 = vst [vmem:[%s399 + $0x90] sm:$0xff] %v2172
          %2205 = vst [vmem:[%s399 + $0x98] sm:$0xff] %v2173
          %2206 = vst [vmem:[%s399 + $0xa0] sm:$0xff] %v2174
          %2207 = vst [vmem:[%s399 + $0xa8] sm:$0xff] %v2175
          %2208 = vst [vmem:[%s399 + $0xb0] sm:$0xff] %v2176
          %2209 = vst [vmem:[%s399 + $0xb8] sm:$0xff] %v2177
          %2210 = vst [vmem:[%s399 + $0xc0] sm:$0xff] %v2178
          %2211 = vst [vmem:[%s399 + $0xc8] sm:$0xff] %v2179
          %2212 = vst [vmem:[%s399 + $0xd0] sm:$0xff] %v2180
          %2213 = vst [vmem:[%s399 + $0xd8] sm:$0xff] %v2181
          %2214 = vst [vmem:[%s399 + $0xe0] sm:$0xff] %v2182
          %2215 = vst [vmem:[%s399 + $0xe8] sm:$0xff] %v2183
          %2216 = vst [vmem:[%s399 + $0xf0] sm:$0xff] %v2184
          %2217 = vst [vmem:[%s399 + $0xf8] sm:$0xff] %v2185
        $region56: #{tpu_custom_call.1} parent=51 // pred_fallthru
          _
        %p2218 = scmp.ge.s32.totalorder %s27, 1
        // Predicated region
        $region57: #{tpu_custom_call.1} parent=51 // pred_check
          %p2219 = pneg %p2218
        $region58: #{tpu_custom_call.1} parent=51 // pred_check_branch
          %2221 = sbr.rel (%p2219) target = $region60
        $region59: #{tpu_custom_call.1} parent=51 // pred_region
          %v2222 = vld [vmem:[%s432] sm:$0xff]
          %v2223 = vld [vmem:[%s432 + $0x8] sm:$0xff]
          %v2224 = vld [vmem:[%s432 + $0x10] sm:$0xff]
          %v2225 = vld [vmem:[%s432 + $0x18] sm:$0xff]
          %v2226 = vld [vmem:[%s432 + $0x20] sm:$0xff]
          %v2227 = vld [vmem:[%s432 + $0x28] sm:$0xff]
          %v2228 = vld [vmem:[%s432 + $0x30] sm:$0xff]
          %v2229 = vld [vmem:[%s432 + $0x38] sm:$0xff]
          %v2230 = vld [vmem:[%s432 + $0x40] sm:$0xff]
          %v2231 = vld [vmem:[%s432 + $0x48] sm:$0xff]
          %v2232 = vld [vmem:[%s432 + $0x50] sm:$0xff]
          %v2233 = vld [vmem:[%s432 + $0x58] sm:$0xff]
          %v2234 = vld [vmem:[%s432 + $0x60] sm:$0xff]
          %v2235 = vld [vmem:[%s432 + $0x68] sm:$0xff]
          %v2236 = vld [vmem:[%s432 + $0x70] sm:$0xff]
          %v2237 = vld [vmem:[%s432 + $0x78] sm:$0xff]
          %v2238 = vld [vmem:[%s432 + $0x80] sm:$0xff]
          %v2239 = vld [vmem:[%s432 + $0x88] sm:$0xff]
          %v2240 = vld [vmem:[%s432 + $0x90] sm:$0xff]
          %v2241 = vld [vmem:[%s432 + $0x98] sm:$0xff]
          %v2242 = vld [vmem:[%s432 + $0xa0] sm:$0xff]
          %v2243 = vld [vmem:[%s432 + $0xa8] sm:$0xff]
          %v2244 = vld [vmem:[%s432 + $0xb0] sm:$0xff]
          %v2245 = vld [vmem:[%s432 + $0xb8] sm:$0xff]
          %v2246 = vld [vmem:[%s432 + $0xc0] sm:$0xff]
          %v2247 = vld [vmem:[%s432 + $0xc8] sm:$0xff]
          %v2248 = vld [vmem:[%s432 + $0xd0] sm:$0xff]
          %v2249 = vld [vmem:[%s432 + $0xd8] sm:$0xff]
          %v2250 = vld [vmem:[%s432 + $0xe0] sm:$0xff]
          %v2251 = vld [vmem:[%s432 + $0xe8] sm:$0xff]
          %v2252 = vld [vmem:[%s432 + $0xf0] sm:$0xff]
          %v2253 = vld [vmem:[%s432 + $0xf8] sm:$0xff]
          %v2254 = vld [vmem:[%s5] sm:$0xf]
          %v2255 = vld [vmem:[%s7] sm:$0xf]
          %v2256 = vperm.slane %v2255, 0
          %vm2257 = vcmask 31744
          %v2259 = vsel %vm2257, %v2222, 0
          %v2262 = vsel %vm2257, %v2223, 0
          %v2265 = vsel %vm2257, %v2224, 0
          %v2268 = vsel %vm2257, %v2225, 0
          %v2271 = vsel %vm2257, %v2226, 0
          %v2274 = vsel %vm2257, %v2227, 0
          %v2277 = vsel %vm2257, %v2228, 0
          %v2280 = vsel %vm2257, %v2229, 0
          %v2283 = vsel %vm2257, %v2230, 0
          %v2286 = vsel %vm2257, %v2231, 0
          %v2289 = vsel %vm2257, %v2232, 0
          %v2292 = vsel %vm2257, %v2233, 0
          %v2295 = vsel %vm2257, %v2234, 0
          %v2298 = vsel %vm2257, %v2235, 0
          %v2301 = vsel %vm2257, %v2236, 0
          %v2304 = vsel %vm2257, %v2237, 0
          %v2307 = vsel %vm2257, %v2238, 0
          %v2310 = vsel %vm2257, %v2239, 0
          %v2313 = vsel %vm2257, %v2240, 0
          %v2316 = vsel %vm2257, %v2241, 0
          %v2319 = vsel %vm2257, %v2242, 0
          %v2322 = vsel %vm2257, %v2243, 0
          %v2325 = vsel %vm2257, %v2244, 0
          %v2328 = vsel %vm2257, %v2245, 0
          %v2331 = vsel %vm2257, %v2246, 0
          %v2334 = vsel %vm2257, %v2247, 0
          %v2337 = vsel %vm2257, %v2248, 0
          %v2340 = vsel %vm2257, %v2249, 0
          %v2343 = vsel %vm2257, %v2250, 0
          %v2346 = vsel %vm2257, %v2251, 0
          %v2349 = vsel %vm2257, %v2252, 0
          %v2352 = vsel %vm2257, %v2253, 0
          %vm2354 = vcmask 1043456
          %v2356 = vsel %vm2354, %v2254, 0
          %2358 = vmatpush.msra.mxu0 0.0
          %2359 = vmatpush.msra.mxu0 0.0
          %2360 = vmatpush.msra.mxu0 0.0
          %2361 = vmatpush.msra.mxu0 0.0
          %2362 = vmatpush.msra.mxu0 0.0
          %2363 = vmatpush.msra.mxu0 0.0
          %2364 = vmatpush.msra.mxu0 0.0
          %2365 = vmatpush.msra.mxu0 0.0
          %2366 = vmatpush.msra.mxu0 0.0
          %2367 = vmatpush.msra.mxu0 0.0
          %2368 = vmatpush.msra.mxu0 0.0
          %2369 = vmatpush.msra.mxu0 0.0
          %2370 = vmatpush.msra.mxu0 0.0
          %2371 = vmatpush.msra.mxu0 0.0
          %2372 = vmatpush.msra.mxu0 0.0
          %2373 = vmatpush.msra.mxu0 %v2356
          %2374 = vmatmul.f32.gmra.mxu0 %v2259
          %v2375 = vpop.f32.mrf.mxu0
          %v2376 = vadd.f32 %v2256, %v2375
          %2377 = vmatmul.f32.gmra.mxu0 %v2262
          %v2378 = vpop.f32.mrf.mxu0
          %v2379 = vadd.f32 %v2256, %v2378
          %2380 = vmatmul.f32.gmra.mxu0 %v2265
          %v2381 = vpop.f32.mrf.mxu0
          %v2382 = vadd.f32 %v2256, %v2381
          %2383 = vmatmul.f32.gmra.mxu0 %v2268
          %v2384 = vpop.f32.mrf.mxu0
          %v2385 = vadd.f32 %v2256, %v2384
          %2386 = vmatmul.f32.gmra.mxu0 %v2271
          %v2387 = vpop.f32.mrf.mxu0
          %v2388 = vadd.f32 %v2256, %v2387
          %2389 = vmatmul.f32.gmra.mxu0 %v2274
          %v2390 = vpop.f32.mrf.mxu0
          %v2391 = vadd.f32 %v2256, %v2390
          %2392 = vmatmul.f32.gmra.mxu0 %v2277
          %v2393 = vpop.f32.mrf.mxu0
          %v2394 = vadd.f32 %v2256, %v2393
          %2395 = vmatmul.f32.gmra.mxu0 %v2280
          %v2396 = vpop.f32.mrf.mxu0
          %v2397 = vadd.f32 %v2256, %v2396
          %2398 = vmatmul.f32.gmra.mxu0 %v2283
          %v2399 = vpop.f32.mrf.mxu0
          %v2400 = vadd.f32 %v2256, %v2399
          %2401 = vmatmul.f32.gmra.mxu0 %v2286
          %v2402 = vpop.f32.mrf.mxu0
          %v2403 = vadd.f32 %v2256, %v2402
          %2404 = vmatmul.f32.gmra.mxu0 %v2289
          %v2405 = vpop.f32.mrf.mxu0
          %v2406 = vadd.f32 %v2256, %v2405
          %2407 = vmatmul.f32.gmra.mxu0 %v2292
          %v2408 = vpop.f32.mrf.mxu0
          %v2409 = vadd.f32 %v2256, %v2408
          %2410 = vmatmul.f32.gmra.mxu0 %v2295
          %v2411 = vpop.f32.mrf.mxu0
          %v2412 = vadd.f32 %v2256, %v2411
          %2413 = vmatmul.f32.gmra.mxu0 %v2298
          %v2414 = vpop.f32.mrf.mxu0
          %v2415 = vadd.f32 %v2256, %v2414
          %2416 = vmatmul.f32.gmra.mxu0 %v2301
          %v2417 = vpop.f32.mrf.mxu0
          %v2418 = vadd.f32 %v2256, %v2417
          %2419 = vmatmul.f32.gmra.mxu0 %v2304
          %v2420 = vpop.f32.mrf.mxu0
          %v2421 = vadd.f32 %v2256, %v2420
          %2422 = vmatmul.f32.gmra.mxu0 %v2307
          %v2423 = vpop.f32.mrf.mxu0
          %v2424 = vadd.f32 %v2256, %v2423
          %2425 = vmatmul.f32.gmra.mxu0 %v2310
          %v2426 = vpop.f32.mrf.mxu0
          %v2427 = vadd.f32 %v2256, %v2426
          %2428 = vmatmul.f32.gmra.mxu0 %v2313
          %v2429 = vpop.f32.mrf.mxu0
          %v2430 = vadd.f32 %v2256, %v2429
          %2431 = vmatmul.f32.gmra.mxu0 %v2316
          %v2432 = vpop.f32.mrf.mxu0
          %v2433 = vadd.f32 %v2256, %v2432
          %2434 = vmatmul.f32.gmra.mxu0 %v2319
          %v2435 = vpop.f32.mrf.mxu0
          %v2436 = vadd.f32 %v2256, %v2435
          %2437 = vmatmul.f32.gmra.mxu0 %v2322
          %v2438 = vpop.f32.mrf.mxu0
          %v2439 = vadd.f32 %v2256, %v2438
          %2440 = vmatmul.f32.gmra.mxu0 %v2325
          %v2441 = vpop.f32.mrf.mxu0
          %v2442 = vadd.f32 %v2256, %v2441
          %2443 = vmatmul.f32.gmra.mxu0 %v2328
          %v2444 = vpop.f32.mrf.mxu0
          %v2445 = vadd.f32 %v2256, %v2444
          %2446 = vmatmul.f32.gmra.mxu0 %v2331
          %v2447 = vpop.f32.mrf.mxu0
          %v2448 = vadd.f32 %v2256, %v2447
          %2449 = vmatmul.f32.gmra.mxu0 %v2334
          %v2450 = vpop.f32.mrf.mxu0
          %v2451 = vadd.f32 %v2256, %v2450
          %2452 = vmatmul.f32.gmra.mxu0 %v2337
          %v2453 = vpop.f32.mrf.mxu0
          %v2454 = vadd.f32 %v2256, %v2453
          %2455 = vmatmul.f32.gmra.mxu0 %v2340
          %v2456 = vpop.f32.mrf.mxu0
          %v2457 = vadd.f32 %v2256, %v2456
          %2458 = vmatmul.f32.gmra.mxu0 %v2343
          %v2459 = vpop.f32.mrf.mxu0
          %v2460 = vadd.f32 %v2256, %v2459
          %2461 = vmatmul.f32.gmra.mxu0 %v2346
          %v2462 = vpop.f32.mrf.mxu0
          %v2463 = vadd.f32 %v2256, %v2462
          %2464 = vmatmul.f32.gmra.mxu0 %v2349
          %v2465 = vpop.f32.mrf.mxu0
          %v2466 = vadd.f32 %v2256, %v2465
          %2467 = vmatmul.f32.gmra.mxu0 %v2352
          %v2468 = vpop.f32.mrf.mxu0
          %v2469 = vadd.f32 %v2256, %v2468
          %2470 = vdwg.mxu0
          %v2471 = vxor.u32 %v2376, 2147483648
          %v2472 = vxor.u32 %v2379, 2147483648
          %v2473 = vxor.u32 %v2382, 2147483648
          %v2474 = vxor.u32 %v2385, 2147483648
          %v2475 = vxor.u32 %v2388, 2147483648
          %v2476 = vxor.u32 %v2391, 2147483648
          %v2477 = vxor.u32 %v2394, 2147483648
          %v2478 = vxor.u32 %v2397, 2147483648
          %v2479 = vxor.u32 %v2400, 2147483648
          %v2480 = vxor.u32 %v2403, 2147483648
          %v2481 = vxor.u32 %v2406, 2147483648
          %v2482 = vxor.u32 %v2409, 2147483648
          %v2483 = vxor.u32 %v2412, 2147483648
          %v2484 = vxor.u32 %v2415, 2147483648
          %v2485 = vxor.u32 %v2418, 2147483648
          %v2486 = vxor.u32 %v2421, 2147483648
          %v2487 = vxor.u32 %v2424, 2147483648
          %v2488 = vxor.u32 %v2427, 2147483648
          %v2489 = vxor.u32 %v2430, 2147483648
          %v2490 = vxor.u32 %v2433, 2147483648
          %v2491 = vxor.u32 %v2436, 2147483648
          %v2492 = vxor.u32 %v2439, 2147483648
          %v2493 = vxor.u32 %v2442, 2147483648
          %v2494 = vxor.u32 %v2445, 2147483648
          %v2495 = vxor.u32 %v2448, 2147483648
          %v2496 = vxor.u32 %v2451, 2147483648
          %v2497 = vxor.u32 %v2454, 2147483648
          %v2498 = vxor.u32 %v2457, 2147483648
          %v2499 = vxor.u32 %v2460, 2147483648
          %v2500 = vxor.u32 %v2463, 2147483648
          %v2501 = vxor.u32 %v2466, 2147483648
          %v2502 = vxor.u32 %v2469, 2147483648
          %v2503 = vmul.f32 %v2471, 1.442695
          %v2504 = vpow.pop %v2503
          %v2505 = vmul.f32 %v2472, 1.442695
          %v2506 = vpow.pop %v2505
          %v2507 = vmul.f32 %v2473, 1.442695
          %v2508 = vpow.pop %v2507
          %v2509 = vmul.f32 %v2474, 1.442695
          %v2510 = vpow.pop %v2509
          %v2511 = vmul.f32 %v2475, 1.442695
          %v2512 = vpow.pop %v2511
          %v2513 = vmul.f32 %v2476, 1.442695
          %v2514 = vpow.pop %v2513
          %v2515 = vmul.f32 %v2477, 1.442695
          %v2516 = vpow.pop %v2515
          %v2517 = vmul.f32 %v2478, 1.442695
          %v2518 = vpow.pop %v2517
          %v2519 = vmul.f32 %v2479, 1.442695
          %v2520 = vpow.pop %v2519
          %v2521 = vmul.f32 %v2480, 1.442695
          %v2522 = vpow.pop %v2521
          %v2523 = vmul.f32 %v2481, 1.442695
          %v2524 = vpow.pop %v2523
          %v2525 = vmul.f32 %v2482, 1.442695
          %v2526 = vpow.pop %v2525
          %v2527 = vmul.f32 %v2483, 1.442695
          %v2528 = vpow.pop %v2527
          %v2529 = vmul.f32 %v2484, 1.442695
          %v2530 = vpow.pop %v2529
          %v2531 = vmul.f32 %v2485, 1.442695
          %v2532 = vpow.pop %v2531
          %v2533 = vmul.f32 %v2486, 1.442695
          %v2534 = vpow.pop %v2533
          %v2535 = vmul.f32 %v2487, 1.442695
          %v2536 = vpow.pop %v2535
          %v2537 = vmul.f32 %v2488, 1.442695
          %v2538 = vpow.pop %v2537
          %v2539 = vmul.f32 %v2489, 1.442695
          %v2540 = vpow.pop %v2539
          %v2541 = vmul.f32 %v2490, 1.442695
          %v2542 = vpow.pop %v2541
          %v2543 = vmul.f32 %v2491, 1.442695
          %v2544 = vpow.pop %v2543
          %v2545 = vmul.f32 %v2492, 1.442695
          %v2546 = vpow.pop %v2545
          %v2547 = vmul.f32 %v2493, 1.442695
          %v2548 = vpow.pop %v2547
          %v2549 = vmul.f32 %v2494, 1.442695
          %v2550 = vpow.pop %v2549
          %v2551 = vmul.f32 %v2495, 1.442695
          %v2552 = vpow.pop %v2551
          %v2553 = vmul.f32 %v2496, 1.442695
          %v2554 = vpow.pop %v2553
          %v2555 = vmul.f32 %v2497, 1.442695
          %v2556 = vpow.pop %v2555
          %v2557 = vmul.f32 %v2498, 1.442695
          %v2558 = vpow.pop %v2557
          %v2559 = vmul.f32 %v2499, 1.442695
          %v2560 = vpow.pop %v2559
          %v2561 = vmul.f32 %v2500, 1.442695
          %v2562 = vpow.pop %v2561
          %v2563 = vmul.f32 %v2501, 1.442695
          %v2564 = vpow.pop %v2563
          %v2565 = vmul.f32 %v2502, 1.442695
          %v2566 = vpow.pop %v2565
          %v2567 = vadd.f32 %v2504, 1.0
          %v2568 = vadd.f32 %v2506, 1.0
          %v2569 = vadd.f32 %v2508, 1.0
          %v2570 = vadd.f32 %v2510, 1.0
          %v2571 = vadd.f32 %v2512, 1.0
          %v2572 = vadd.f32 %v2514, 1.0
          %v2573 = vadd.f32 %v2516, 1.0
          %v2574 = vadd.f32 %v2518, 1.0
          %v2575 = vadd.f32 %v2520, 1.0
          %v2576 = vadd.f32 %v2522, 1.0
          %v2577 = vadd.f32 %v2524, 1.0
          %v2578 = vadd.f32 %v2526, 1.0
          %v2579 = vadd.f32 %v2528, 1.0
          %v2580 = vadd.f32 %v2530, 1.0
          %v2581 = vadd.f32 %v2532, 1.0
          %v2582 = vadd.f32 %v2534, 1.0
          %v2583 = vadd.f32 %v2536, 1.0
          %v2584 = vadd.f32 %v2538, 1.0
          %v2585 = vadd.f32 %v2540, 1.0
          %v2586 = vadd.f32 %v2542, 1.0
          %v2587 = vadd.f32 %v2544, 1.0
          %v2588 = vadd.f32 %v2546, 1.0
          %v2589 = vadd.f32 %v2548, 1.0
          %v2590 = vadd.f32 %v2550, 1.0
          %v2591 = vadd.f32 %v2552, 1.0
          %v2592 = vadd.f32 %v2554, 1.0
          %v2593 = vadd.f32 %v2556, 1.0
          %v2594 = vadd.f32 %v2558, 1.0
          %v2595 = vadd.f32 %v2560, 1.0
          %v2596 = vadd.f32 %v2562, 1.0
          %v2597 = vadd.f32 %v2564, 1.0
          %v2598 = vadd.f32 %v2566, 1.0
          %v2599 = vrcp.pop %v2567
          %v2600 = vmul.f32 %v2567, %v2599
          %v2601 = vsub.f32 1.0, %v2600
          %v2602 = vmul.f32 %v2599, %v2601
          %v2603 = vadd.f32 %v2599, %v2602
          %vm2604 = vweird.f32 %v2567
          %vm2605 = vweird.f32 %v2599
          %vm2606 = vmor %vm2604, %vm2605
          %v2607 = vsel %vm2606, %v2599, %v2603
          %v2608 = vand.u32 2147483647, %v2567
          %vm2609 = vcmp.eq.f32.partialorder %v2608, 8.507059e+37
          %v2610 = vand.u32 %v2567, 2147483648
          %v2611 = vor.u32 1.1754944e-38, %v2610
          %v2612 = vsel %vm2609, %v2611, %v2607
          %v2613 = vmul.f32 1.0, %v2612
          %v2614 = vrcp.pop %v2568
          %v2615 = vmul.f32 %v2568, %v2614
          %v2616 = vsub.f32 1.0, %v2615
          %v2617 = vmul.f32 %v2614, %v2616
          %v2618 = vadd.f32 %v2614, %v2617
          %vm2619 = vweird.f32 %v2568
          %vm2620 = vweird.f32 %v2614
          %vm2621 = vmor %vm2619, %vm2620
          %v2622 = vsel %vm2621, %v2614, %v2618
          %v2623 = vand.u32 2147483647, %v2568
          %vm2624 = vcmp.eq.f32.partialorder %v2623, 8.507059e+37
          %v2625 = vand.u32 %v2568, 2147483648
          %v2626 = vor.u32 1.1754944e-38, %v2625
          %v2627 = vsel %vm2624, %v2626, %v2622
          %v2628 = vmul.f32 1.0, %v2627
          %v2629 = vrcp.pop %v2569
          %v2630 = vmul.f32 %v2569, %v2629
          %v2631 = vsub.f32 1.0, %v2630
          %v2632 = vmul.f32 %v2629, %v2631
          %v2633 = vadd.f32 %v2629, %v2632
          %vm2634 = vweird.f32 %v2569
          %vm2635 = vweird.f32 %v2629
          %vm2636 = vmor %vm2634, %vm2635
          %v2637 = vsel %vm2636, %v2629, %v2633
          %v2638 = vand.u32 2147483647, %v2569
          %vm2639 = vcmp.eq.f32.partialorder %v2638, 8.507059e+37
          %v2640 = vand.u32 %v2569, 2147483648
          %v2641 = vor.u32 1.1754944e-38, %v2640
          %v2642 = vsel %vm2639, %v2641, %v2637
          %v2643 = vmul.f32 1.0, %v2642
          %v2644 = vrcp.pop %v2570
          %v2645 = vmul.f32 %v2570, %v2644
          %v2646 = vsub.f32 1.0, %v2645
          %v2647 = vmul.f32 %v2644, %v2646
          %v2648 = vadd.f32 %v2644, %v2647
          %vm2649 = vweird.f32 %v2570
          %vm2650 = vweird.f32 %v2644
          %vm2651 = vmor %vm2649, %vm2650
          %v2652 = vsel %vm2651, %v2644, %v2648
          %v2653 = vand.u32 2147483647, %v2570
          %vm2654 = vcmp.eq.f32.partialorder %v2653, 8.507059e+37
          %v2655 = vand.u32 %v2570, 2147483648
          %v2656 = vor.u32 1.1754944e-38, %v2655
          %v2657 = vsel %vm2654, %v2656, %v2652
          %v2658 = vmul.f32 1.0, %v2657
          %v2659 = vrcp.pop %v2571
          %v2660 = vmul.f32 %v2571, %v2659
          %v2661 = vsub.f32 1.0, %v2660
          %v2662 = vmul.f32 %v2659, %v2661
          %v2663 = vadd.f32 %v2659, %v2662
          %vm2664 = vweird.f32 %v2571
          %vm2665 = vweird.f32 %v2659
          %vm2666 = vmor %vm2664, %vm2665
          %v2667 = vsel %vm2666, %v2659, %v2663
          %v2668 = vand.u32 2147483647, %v2571
          %vm2669 = vcmp.eq.f32.partialorder %v2668, 8.507059e+37
          %v2670 = vand.u32 %v2571, 2147483648
          %v2671 = vor.u32 1.1754944e-38, %v2670
          %v2672 = vsel %vm2669, %v2671, %v2667
          %v2673 = vmul.f32 1.0, %v2672
          %v2674 = vrcp.pop %v2572
          %v2675 = vmul.f32 %v2572, %v2674
          %v2676 = vsub.f32 1.0, %v2675
          %v2677 = vmul.f32 %v2674, %v2676
          %v2678 = vadd.f32 %v2674, %v2677
          %vm2679 = vweird.f32 %v2572
          %vm2680 = vweird.f32 %v2674
          %vm2681 = vmor %vm2679, %vm2680
          %v2682 = vsel %vm2681, %v2674, %v2678
          %v2683 = vand.u32 2147483647, %v2572
          %vm2684 = vcmp.eq.f32.partialorder %v2683, 8.507059e+37
          %v2685 = vand.u32 %v2572, 2147483648
          %v2686 = vor.u32 1.1754944e-38, %v2685
          %v2687 = vsel %vm2684, %v2686, %v2682
          %v2688 = vmul.f32 1.0, %v2687
          %v2689 = vrcp.pop %v2573
          %v2690 = vmul.f32 %v2573, %v2689
          %v2691 = vsub.f32 1.0, %v2690
          %v2692 = vmul.f32 %v2689, %v2691
          %v2693 = vadd.f32 %v2689, %v2692
          %vm2694 = vweird.f32 %v2573
          %vm2695 = vweird.f32 %v2689
          %vm2696 = vmor %vm2694, %vm2695
          %v2697 = vsel %vm2696, %v2689, %v2693
          %v2698 = vand.u32 2147483647, %v2573
          %vm2699 = vcmp.eq.f32.partialorder %v2698, 8.507059e+37
          %v2700 = vand.u32 %v2573, 2147483648
          %v2701 = vor.u32 1.1754944e-38, %v2700
          %v2702 = vsel %vm2699, %v2701, %v2697
          %v2703 = vmul.f32 1.0, %v2702
          %v2704 = vrcp.pop %v2574
          %v2705 = vmul.f32 %v2574, %v2704
          %v2706 = vsub.f32 1.0, %v2705
          %v2707 = vmul.f32 %v2704, %v2706
          %v2708 = vadd.f32 %v2704, %v2707
          %vm2709 = vweird.f32 %v2574
          %vm2710 = vweird.f32 %v2704
          %vm2711 = vmor %vm2709, %vm2710
          %v2712 = vsel %vm2711, %v2704, %v2708
          %v2713 = vand.u32 2147483647, %v2574
          %vm2714 = vcmp.eq.f32.partialorder %v2713, 8.507059e+37
          %v2715 = vand.u32 %v2574, 2147483648
          %v2716 = vor.u32 1.1754944e-38, %v2715
          %v2717 = vsel %vm2714, %v2716, %v2712
          %v2718 = vmul.f32 1.0, %v2717
          %v2719 = vrcp.pop %v2575
          %v2720 = vmul.f32 %v2575, %v2719
          %v2721 = vsub.f32 1.0, %v2720
          %v2722 = vmul.f32 %v2719, %v2721
          %v2723 = vadd.f32 %v2719, %v2722
          %vm2724 = vweird.f32 %v2575
          %vm2725 = vweird.f32 %v2719
          %vm2726 = vmor %vm2724, %vm2725
          %v2727 = vsel %vm2726, %v2719, %v2723
          %v2728 = vand.u32 2147483647, %v2575
          %vm2729 = vcmp.eq.f32.partialorder %v2728, 8.507059e+37
          %v2730 = vand.u32 %v2575, 2147483648
          %v2731 = vor.u32 1.1754944e-38, %v2730
          %v2732 = vsel %vm2729, %v2731, %v2727
          %v2733 = vmul.f32 1.0, %v2732
          %v2734 = vrcp.pop %v2576
          %v2735 = vmul.f32 %v2576, %v2734
          %v2736 = vsub.f32 1.0, %v2735
          %v2737 = vmul.f32 %v2734, %v2736
          %v2738 = vadd.f32 %v2734, %v2737
          %vm2739 = vweird.f32 %v2576
          %vm2740 = vweird.f32 %v2734
          %vm2741 = vmor %vm2739, %vm2740
          %v2742 = vsel %vm2741, %v2734, %v2738
          %v2743 = vand.u32 2147483647, %v2576
          %vm2744 = vcmp.eq.f32.partialorder %v2743, 8.507059e+37
          %v2745 = vand.u32 %v2576, 2147483648
          %v2746 = vor.u32 1.1754944e-38, %v2745
          %v2747 = vsel %vm2744, %v2746, %v2742
          %v2748 = vmul.f32 1.0, %v2747
          %v2749 = vrcp.pop %v2577
          %v2750 = vmul.f32 %v2577, %v2749
          %v2751 = vsub.f32 1.0, %v2750
          %v2752 = vmul.f32 %v2749, %v2751
          %v2753 = vadd.f32 %v2749, %v2752
          %vm2754 = vweird.f32 %v2577
          %vm2755 = vweird.f32 %v2749
          %vm2756 = vmor %vm2754, %vm2755
          %v2757 = vsel %vm2756, %v2749, %v2753
          %v2758 = vand.u32 2147483647, %v2577
          %vm2759 = vcmp.eq.f32.partialorder %v2758, 8.507059e+37
          %v2760 = vand.u32 %v2577, 2147483648
          %v2761 = vor.u32 1.1754944e-38, %v2760
          %v2762 = vsel %vm2759, %v2761, %v2757
          %v2763 = vmul.f32 1.0, %v2762
          %v2764 = vrcp.pop %v2578
          %v2765 = vmul.f32 %v2578, %v2764
          %v2766 = vsub.f32 1.0, %v2765
          %v2767 = vmul.f32 %v2764, %v2766
          %v2768 = vadd.f32 %v2764, %v2767
          %vm2769 = vweird.f32 %v2578
          %vm2770 = vweird.f32 %v2764
          %vm2771 = vmor %vm2769, %vm2770
          %v2772 = vsel %vm2771, %v2764, %v2768
          %v2773 = vand.u32 2147483647, %v2578
          %vm2774 = vcmp.eq.f32.partialorder %v2773, 8.507059e+37
          %v2775 = vand.u32 %v2578, 2147483648
          %v2776 = vor.u32 1.1754944e-38, %v2775
          %v2777 = vsel %vm2774, %v2776, %v2772
          %v2778 = vmul.f32 1.0, %v2777
          %v2779 = vrcp.pop %v2579
          %v2780 = vmul.f32 %v2579, %v2779
          %v2781 = vsub.f32 1.0, %v2780
          %v2782 = vmul.f32 %v2779, %v2781
          %v2783 = vadd.f32 %v2779, %v2782
          %vm2784 = vweird.f32 %v2579
          %vm2785 = vweird.f32 %v2779
          %vm2786 = vmor %vm2784, %vm2785
          %v2787 = vsel %vm2786, %v2779, %v2783
          %v2788 = vand.u32 2147483647, %v2579
          %vm2789 = vcmp.eq.f32.partialorder %v2788, 8.507059e+37
          %v2790 = vand.u32 %v2579, 2147483648
          %v2791 = vor.u32 1.1754944e-38, %v2790
          %v2792 = vsel %vm2789, %v2791, %v2787
          %v2793 = vmul.f32 1.0, %v2792
          %v2794 = vrcp.pop %v2580
          %v2795 = vmul.f32 %v2580, %v2794
          %v2796 = vsub.f32 1.0, %v2795
          %v2797 = vmul.f32 %v2794, %v2796
          %v2798 = vadd.f32 %v2794, %v2797
          %vm2799 = vweird.f32 %v2580
          %vm2800 = vweird.f32 %v2794
          %vm2801 = vmor %vm2799, %vm2800
          %v2802 = vsel %vm2801, %v2794, %v2798
          %v2803 = vand.u32 2147483647, %v2580
          %vm2804 = vcmp.eq.f32.partialorder %v2803, 8.507059e+37
          %v2805 = vand.u32 %v2580, 2147483648
          %v2806 = vor.u32 1.1754944e-38, %v2805
          %v2807 = vsel %vm2804, %v2806, %v2802
          %v2808 = vmul.f32 1.0, %v2807
          %v2809 = vrcp.pop %v2581
          %v2810 = vmul.f32 %v2581, %v2809
          %v2811 = vsub.f32 1.0, %v2810
          %v2812 = vmul.f32 %v2809, %v2811
          %v2813 = vadd.f32 %v2809, %v2812
          %vm2814 = vweird.f32 %v2581
          %vm2815 = vweird.f32 %v2809
          %vm2816 = vmor %vm2814, %vm2815
          %v2817 = vsel %vm2816, %v2809, %v2813
          %v2818 = vand.u32 2147483647, %v2581
          %vm2819 = vcmp.eq.f32.partialorder %v2818, 8.507059e+37
          %v2820 = vand.u32 %v2581, 2147483648
          %v2821 = vor.u32 1.1754944e-38, %v2820
          %v2822 = vsel %vm2819, %v2821, %v2817
          %v2823 = vmul.f32 1.0, %v2822
          %v2824 = vrcp.pop %v2582
          %v2825 = vmul.f32 %v2582, %v2824
          %v2826 = vsub.f32 1.0, %v2825
          %v2827 = vmul.f32 %v2824, %v2826
          %v2828 = vadd.f32 %v2824, %v2827
          %vm2829 = vweird.f32 %v2582
          %vm2830 = vweird.f32 %v2824
          %vm2831 = vmor %vm2829, %vm2830
          %v2832 = vsel %vm2831, %v2824, %v2828
          %v2833 = vand.u32 2147483647, %v2582
          %vm2834 = vcmp.eq.f32.partialorder %v2833, 8.507059e+37
          %v2835 = vand.u32 %v2582, 2147483648
          %v2836 = vor.u32 1.1754944e-38, %v2835
          %v2837 = vsel %vm2834, %v2836, %v2832
          %v2838 = vmul.f32 1.0, %v2837
          %v2839 = vrcp.pop %v2583
          %v2840 = vmul.f32 %v2583, %v2839
          %v2841 = vsub.f32 1.0, %v2840
          %v2842 = vmul.f32 %v2839, %v2841
          %v2843 = vadd.f32 %v2839, %v2842
          %vm2844 = vweird.f32 %v2583
          %vm2845 = vweird.f32 %v2839
          %vm2846 = vmor %vm2844, %vm2845
          %v2847 = vsel %vm2846, %v2839, %v2843
          %v2848 = vand.u32 2147483647, %v2583
          %vm2849 = vcmp.eq.f32.partialorder %v2848, 8.507059e+37
          %v2850 = vand.u32 %v2583, 2147483648
          %v2851 = vor.u32 1.1754944e-38, %v2850
          %v2852 = vsel %vm2849, %v2851, %v2847
          %v2853 = vmul.f32 1.0, %v2852
          %v2854 = vrcp.pop %v2584
          %v2855 = vmul.f32 %v2584, %v2854
          %v2856 = vsub.f32 1.0, %v2855
          %v2857 = vmul.f32 %v2854, %v2856
          %v2858 = vadd.f32 %v2854, %v2857
          %vm2859 = vweird.f32 %v2584
          %vm2860 = vweird.f32 %v2854
          %vm2861 = vmor %vm2859, %vm2860
          %v2862 = vsel %vm2861, %v2854, %v2858
          %v2863 = vand.u32 2147483647, %v2584
          %vm2864 = vcmp.eq.f32.partialorder %v2863, 8.507059e+37
          %v2865 = vand.u32 %v2584, 2147483648
          %v2866 = vor.u32 1.1754944e-38, %v2865
          %v2867 = vsel %vm2864, %v2866, %v2862
          %v2868 = vmul.f32 1.0, %v2867
          %v2869 = vrcp.pop %v2585
          %v2870 = vmul.f32 %v2585, %v2869
          %v2871 = vsub.f32 1.0, %v2870
          %v2872 = vmul.f32 %v2869, %v2871
          %v2873 = vadd.f32 %v2869, %v2872
          %vm2874 = vweird.f32 %v2585
          %vm2875 = vweird.f32 %v2869
          %vm2876 = vmor %vm2874, %vm2875
          %v2877 = vsel %vm2876, %v2869, %v2873
          %v2878 = vand.u32 2147483647, %v2585
          %vm2879 = vcmp.eq.f32.partialorder %v2878, 8.507059e+37
          %v2880 = vand.u32 %v2585, 2147483648
          %v2881 = vor.u32 1.1754944e-38, %v2880
          %v2882 = vsel %vm2879, %v2881, %v2877
          %v2883 = vmul.f32 1.0, %v2882
          %v2884 = vrcp.pop %v2586
          %v2885 = vmul.f32 %v2586, %v2884
          %v2886 = vsub.f32 1.0, %v2885
          %v2887 = vmul.f32 %v2884, %v2886
          %v2888 = vadd.f32 %v2884, %v2887
          %vm2889 = vweird.f32 %v2586
          %vm2890 = vweird.f32 %v2884
          %vm2891 = vmor %vm2889, %vm2890
          %v2892 = vsel %vm2891, %v2884, %v2888
          %v2893 = vand.u32 2147483647, %v2586
          %vm2894 = vcmp.eq.f32.partialorder %v2893, 8.507059e+37
          %v2895 = vand.u32 %v2586, 2147483648
          %v2896 = vor.u32 1.1754944e-38, %v2895
          %v2897 = vsel %vm2894, %v2896, %v2892
          %v2898 = vmul.f32 1.0, %v2897
          %v2899 = vrcp.pop %v2587
          %v2900 = vmul.f32 %v2587, %v2899
          %v2901 = vsub.f32 1.0, %v2900
          %v2902 = vmul.f32 %v2899, %v2901
          %v2903 = vadd.f32 %v2899, %v2902
          %vm2904 = vweird.f32 %v2587
          %vm2905 = vweird.f32 %v2899
          %vm2906 = vmor %vm2904, %vm2905
          %v2907 = vsel %vm2906, %v2899, %v2903
          %v2908 = vand.u32 2147483647, %v2587
          %vm2909 = vcmp.eq.f32.partialorder %v2908, 8.507059e+37
          %v2910 = vand.u32 %v2587, 2147483648
          %v2911 = vor.u32 1.1754944e-38, %v2910
          %v2912 = vsel %vm2909, %v2911, %v2907
          %v2913 = vmul.f32 1.0, %v2912
          %v2914 = vrcp.pop %v2588
          %v2915 = vmul.f32 %v2588, %v2914
          %v2916 = vsub.f32 1.0, %v2915
          %v2917 = vmul.f32 %v2914, %v2916
          %v2918 = vadd.f32 %v2914, %v2917
          %vm2919 = vweird.f32 %v2588
          %vm2920 = vweird.f32 %v2914
          %vm2921 = vmor %vm2919, %vm2920
          %v2922 = vsel %vm2921, %v2914, %v2918
          %v2923 = vand.u32 2147483647, %v2588
          %vm2924 = vcmp.eq.f32.partialorder %v2923, 8.507059e+37
          %v2925 = vand.u32 %v2588, 2147483648
          %v2926 = vor.u32 1.1754944e-38, %v2925
          %v2927 = vsel %vm2924, %v2926, %v2922
          %v2928 = vmul.f32 1.0, %v2927
          %v2929 = vrcp.pop %v2589
          %v2930 = vmul.f32 %v2589, %v2929
          %v2931 = vsub.f32 1.0, %v2930
          %v2932 = vmul.f32 %v2929, %v2931
          %v2933 = vadd.f32 %v2929, %v2932
          %vm2934 = vweird.f32 %v2589
          %vm2935 = vweird.f32 %v2929
          %vm2936 = vmor %vm2934, %vm2935
          %v2937 = vsel %vm2936, %v2929, %v2933
          %v2938 = vand.u32 2147483647, %v2589
          %vm2939 = vcmp.eq.f32.partialorder %v2938, 8.507059e+37
          %v2940 = vand.u32 %v2589, 2147483648
          %v2941 = vor.u32 1.1754944e-38, %v2940
          %v2942 = vsel %vm2939, %v2941, %v2937
          %v2943 = vmul.f32 1.0, %v2942
          %v2944 = vrcp.pop %v2590
          %v2945 = vmul.f32 %v2590, %v2944
          %v2946 = vsub.f32 1.0, %v2945
          %v2947 = vmul.f32 %v2944, %v2946
          %v2948 = vadd.f32 %v2944, %v2947
          %vm2949 = vweird.f32 %v2590
          %vm2950 = vweird.f32 %v2944
          %vm2951 = vmor %vm2949, %vm2950
          %v2952 = vsel %vm2951, %v2944, %v2948
          %v2953 = vand.u32 2147483647, %v2590
          %vm2954 = vcmp.eq.f32.partialorder %v2953, 8.507059e+37
          %v2955 = vand.u32 %v2590, 2147483648
          %v2956 = vor.u32 1.1754944e-38, %v2955
          %v2957 = vsel %vm2954, %v2956, %v2952
          %v2958 = vmul.f32 1.0, %v2957
          %v2959 = vrcp.pop %v2591
          %v2960 = vmul.f32 %v2591, %v2959
          %v2961 = vsub.f32 1.0, %v2960
          %v2962 = vmul.f32 %v2959, %v2961
          %v2963 = vadd.f32 %v2959, %v2962
          %vm2964 = vweird.f32 %v2591
          %vm2965 = vweird.f32 %v2959
          %vm2966 = vmor %vm2964, %vm2965
          %v2967 = vsel %vm2966, %v2959, %v2963
          %v2968 = vand.u32 2147483647, %v2591
          %vm2969 = vcmp.eq.f32.partialorder %v2968, 8.507059e+37
          %v2970 = vand.u32 %v2591, 2147483648
          %v2971 = vor.u32 1.1754944e-38, %v2970
          %v2972 = vsel %vm2969, %v2971, %v2967
          %v2973 = vmul.f32 1.0, %v2972
          %v2974 = vrcp.pop %v2592
          %v2975 = vmul.f32 %v2592, %v2974
          %v2976 = vsub.f32 1.0, %v2975
          %v2977 = vmul.f32 %v2974, %v2976
          %v2978 = vadd.f32 %v2974, %v2977
          %vm2979 = vweird.f32 %v2592
          %vm2980 = vweird.f32 %v2974
          %vm2981 = vmor %vm2979, %vm2980
          %v2982 = vsel %vm2981, %v2974, %v2978
          %v2983 = vand.u32 2147483647, %v2592
          %vm2984 = vcmp.eq.f32.partialorder %v2983, 8.507059e+37
          %v2985 = vand.u32 %v2592, 2147483648
          %v2986 = vor.u32 1.1754944e-38, %v2985
          %v2987 = vsel %vm2984, %v2986, %v2982
          %v2988 = vmul.f32 1.0, %v2987
          %v2989 = vrcp.pop %v2593
          %v2990 = vmul.f32 %v2593, %v2989
          %v2991 = vsub.f32 1.0, %v2990
          %v2992 = vmul.f32 %v2989, %v2991
          %v2993 = vadd.f32 %v2989, %v2992
          %vm2994 = vweird.f32 %v2593
          %vm2995 = vweird.f32 %v2989
          %vm2996 = vmor %vm2994, %vm2995
          %v2997 = vsel %vm2996, %v2989, %v2993
          %v2998 = vand.u32 2147483647, %v2593
          %vm2999 = vcmp.eq.f32.partialorder %v2998, 8.507059e+37
          %v3000 = vand.u32 %v2593, 2147483648
          %v3001 = vor.u32 1.1754944e-38, %v3000
          %v3002 = vsel %vm2999, %v3001, %v2997
          %v3003 = vmul.f32 1.0, %v3002
          %v3004 = vrcp.pop %v2594
          %v3005 = vmul.f32 %v2594, %v3004
          %v3006 = vsub.f32 1.0, %v3005
          %v3007 = vmul.f32 %v3004, %v3006
          %v3008 = vadd.f32 %v3004, %v3007
          %vm3009 = vweird.f32 %v2594
          %vm3010 = vweird.f32 %v3004
          %vm3011 = vmor %vm3009, %vm3010
          %v3012 = vsel %vm3011, %v3004, %v3008
          %v3013 = vand.u32 2147483647, %v2594
          %vm3014 = vcmp.eq.f32.partialorder %v3013, 8.507059e+37
          %v3015 = vand.u32 %v2594, 2147483648
          %v3016 = vor.u32 1.1754944e-38, %v3015
          %v3017 = vsel %vm3014, %v3016, %v3012
          %v3018 = vmul.f32 1.0, %v3017
          %v3019 = vrcp.pop %v2595
          %v3020 = vmul.f32 %v2595, %v3019
          %v3021 = vsub.f32 1.0, %v3020
          %v3022 = vmul.f32 %v3019, %v3021
          %v3023 = vadd.f32 %v3019, %v3022
          %vm3024 = vweird.f32 %v2595
          %vm3025 = vweird.f32 %v3019
          %vm3026 = vmor %vm3024, %vm3025
          %v3027 = vsel %vm3026, %v3019, %v3023
          %v3028 = vand.u32 2147483647, %v2595
          %vm3029 = vcmp.eq.f32.partialorder %v3028, 8.507059e+37
          %v3030 = vand.u32 %v2595, 2147483648
          %v3031 = vor.u32 1.1754944e-38, %v3030
          %v3032 = vsel %vm3029, %v3031, %v3027
          %v3033 = vmul.f32 1.0, %v3032
          %v3034 = vrcp.pop %v2596
          %v3035 = vmul.f32 %v2596, %v3034
          %v3036 = vsub.f32 1.0, %v3035
          %v3037 = vmul.f32 %v3034, %v3036
          %v3038 = vadd.f32 %v3034, %v3037
          %vm3039 = vweird.f32 %v2596
          %vm3040 = vweird.f32 %v3034
          %vm3041 = vmor %vm3039, %vm3040
          %v3042 = vsel %vm3041, %v3034, %v3038
          %v3043 = vand.u32 2147483647, %v2596
          %vm3044 = vcmp.eq.f32.partialorder %v3043, 8.507059e+37
          %v3045 = vand.u32 %v2596, 2147483648
          %v3046 = vor.u32 1.1754944e-38, %v3045
          %v3047 = vsel %vm3044, %v3046, %v3042
          %v3048 = vmul.f32 1.0, %v3047
          %v3049 = vrcp.pop %v2597
          %v3050 = vmul.f32 %v2597, %v3049
          %v3051 = vsub.f32 1.0, %v3050
          %v3052 = vmul.f32 %v3049, %v3051
          %v3053 = vadd.f32 %v3049, %v3052
          %vm3054 = vweird.f32 %v2597
          %vm3055 = vweird.f32 %v3049
          %vm3056 = vmor %vm3054, %vm3055
          %v3057 = vsel %vm3056, %v3049, %v3053
          %v3058 = vand.u32 2147483647, %v2597
          %vm3059 = vcmp.eq.f32.partialorder %v3058, 8.507059e+37
          %v3060 = vand.u32 %v2597, 2147483648
          %v3061 = vor.u32 1.1754944e-38, %v3060
          %v3062 = vsel %vm3059, %v3061, %v3057
          %v3063 = vmul.f32 1.0, %v3062
          %v3064 = vrcp.pop %v2598
          %v3065 = vmul.f32 %v2598, %v3064
          %v3066 = vsub.f32 1.0, %v3065
          %v3067 = vmul.f32 %v3064, %v3066
          %v3068 = vadd.f32 %v3064, %v3067
          %vm3069 = vweird.f32 %v2598
          %vm3070 = vweird.f32 %v3064
          %vm3071 = vmor %vm3069, %vm3070
          %v3072 = vsel %vm3071, %v3064, %v3068
          %v3073 = vand.u32 2147483647, %v2598
          %vm3074 = vcmp.eq.f32.partialorder %v3073, 8.507059e+37
          %v3075 = vand.u32 %v2598, 2147483648
          %v3076 = vor.u32 1.1754944e-38, %v3075
          %v3077 = vsel %vm3074, %v3076, %v3072
          %v3078 = vmul.f32 1.0, %v3077
          %v3079 = vmul.f32 %v2376, %v2613
          %v3080 = vmul.f32 %v2379, %v2628
          %v3081 = vmul.f32 %v2382, %v2643
          %v3082 = vmul.f32 %v2385, %v2658
          %v3083 = vmul.f32 %v2388, %v2673
          %v3084 = vmul.f32 %v2391, %v2688
          %v3085 = vmul.f32 %v2394, %v2703
          %v3086 = vmul.f32 %v2397, %v2718
          %v3087 = vmul.f32 %v2400, %v2733
          %v3088 = vmul.f32 %v2403, %v2748
          %v3089 = vmul.f32 %v2406, %v2763
          %v3090 = vmul.f32 %v2409, %v2778
          %v3091 = vmul.f32 %v2412, %v2793
          %v3092 = vmul.f32 %v2415, %v2808
          %v3093 = vmul.f32 %v2418, %v2823
          %v3094 = vmul.f32 %v2421, %v2838
          %v3095 = vmul.f32 %v2424, %v2853
          %v3096 = vmul.f32 %v2427, %v2868
          %v3097 = vmul.f32 %v2430, %v2883
          %v3098 = vmul.f32 %v2433, %v2898
          %v3099 = vmul.f32 %v2436, %v2913
          %v3100 = vmul.f32 %v2439, %v2928
          %v3101 = vmul.f32 %v2442, %v2943
          %v3102 = vmul.f32 %v2445, %v2958
          %v3103 = vmul.f32 %v2448, %v2973
          %v3104 = vmul.f32 %v2451, %v2988
          %v3105 = vmul.f32 %v2454, %v3003
          %v3106 = vmul.f32 %v2457, %v3018
          %v3107 = vmul.f32 %v2460, %v3033
          %v3108 = vmul.f32 %v2463, %v3048
          %v3109 = vmul.f32 %v2466, %v3063
          %v3110 = vmul.f32 %v2469, %v3078
          %v3111 = vld [vmem:[%s6] sm:$0xff]
          %v3112 = vld [vmem:[%s6 + $0x8] sm:$0xff]
          %v3113 = vld [vmem:[%s6 + $0x10] sm:$0xff]
          %v3114 = vld [vmem:[%s6 + $0x18] sm:$0xff]
          %v3115 = vld [vmem:[%s6 + $0x20] sm:$0xff]
          %v3116 = vld [vmem:[%s6 + $0x28] sm:$0xff]
          %v3117 = vld [vmem:[%s6 + $0x30] sm:$0xff]
          %v3118 = vld [vmem:[%s6 + $0x38] sm:$0xff]
          %v3119 = vld [vmem:[%s6 + $0x40] sm:$0xff]
          %v3120 = vld [vmem:[%s6 + $0x48] sm:$0xff]
          %v3121 = vld [vmem:[%s6 + $0x50] sm:$0xff]
          %v3122 = vld [vmem:[%s6 + $0x58] sm:$0xff]
          %v3123 = vld [vmem:[%s6 + $0x60] sm:$0xff]
          %v3124 = vld [vmem:[%s6 + $0x68] sm:$0xff]
          %v3125 = vld [vmem:[%s6 + $0x70] sm:$0xff]
          %v3126 = vld [vmem:[%s6 + $0x78] sm:$0xff]
          %v3127 = vperm.slane %v2255, 1
          %3128 = vmatpush.msra.mxu0 %v3126
          %3129 = vmatpush.msra.mxu0 %v3125
          %3130 = vmatpush.msra.mxu0 %v3124
          %3131 = vmatpush.msra.mxu0 %v3123
          %3132 = vmatpush.msra.mxu0 %v3122
          %3133 = vmatpush.msra.mxu0 %v3121
          %3134 = vmatpush.msra.mxu0 %v3120
          %3135 = vmatpush.msra.mxu0 %v3119
          %3136 = vmatpush.msra.mxu0 %v3118
          %3137 = vmatpush.msra.mxu0 %v3117
          %3138 = vmatpush.msra.mxu0 %v3116
          %3139 = vmatpush.msra.mxu0 %v3115
          %3140 = vmatpush.msra.mxu0 %v3114
          %3141 = vmatpush.msra.mxu0 %v3113
          %3142 = vmatpush.msra.mxu0 %v3112
          %3143 = vmatpush.msra.mxu0 %v3111
          %3144 = vmatmul.f32.gmra.mxu0 %v3079
          %v3145 = vpop.f32.mrf.mxu0
          %v3146 = vadd.f32 %v3127, %v3145
          %3147 = vmatmul.f32.gmra.mxu0 %v3080
          %v3148 = vpop.f32.mrf.mxu0
          %v3149 = vadd.f32 %v3127, %v3148
          %3150 = vmatmul.f32.gmra.mxu0 %v3081
          %v3151 = vpop.f32.mrf.mxu0
          %v3152 = vadd.f32 %v3127, %v3151
          %3153 = vmatmul.f32.gmra.mxu0 %v3082
          %v3154 = vpop.f32.mrf.mxu0
          %v3155 = vadd.f32 %v3127, %v3154
          %3156 = vmatmul.f32.gmra.mxu0 %v3083
          %v3157 = vpop.f32.mrf.mxu0
          %v3158 = vadd.f32 %v3127, %v3157
          %3159 = vmatmul.f32.gmra.mxu0 %v3084
          %v3160 = vpop.f32.mrf.mxu0
          %v3161 = vadd.f32 %v3127, %v3160
          %3162 = vmatmul.f32.gmra.mxu0 %v3085
          %v3163 = vpop.f32.mrf.mxu0
          %v3164 = vadd.f32 %v3127, %v3163
          %3165 = vmatmul.f32.gmra.mxu0 %v3086
          %v3166 = vpop.f32.mrf.mxu0
          %v3167 = vadd.f32 %v3127, %v3166
          %3168 = vmatmul.f32.gmra.mxu0 %v3087
          %v3169 = vpop.f32.mrf.mxu0
          %v3170 = vadd.f32 %v3127, %v3169
          %3171 = vmatmul.f32.gmra.mxu0 %v3088
          %v3172 = vpop.f32.mrf.mxu0
          %v3173 = vadd.f32 %v3127, %v3172
          %3174 = vmatmul.f32.gmra.mxu0 %v3089
          %v3175 = vpop.f32.mrf.mxu0
          %v3176 = vadd.f32 %v3127, %v3175
          %3177 = vmatmul.f32.gmra.mxu0 %v3090
          %v3178 = vpop.f32.mrf.mxu0
          %v3179 = vadd.f32 %v3127, %v3178
          %3180 = vmatmul.f32.gmra.mxu0 %v3091
          %v3181 = vpop.f32.mrf.mxu0
          %v3182 = vadd.f32 %v3127, %v3181
          %3183 = vmatmul.f32.gmra.mxu0 %v3092
          %v3184 = vpop.f32.mrf.mxu0
          %v3185 = vadd.f32 %v3127, %v3184
          %3186 = vmatmul.f32.gmra.mxu0 %v3093
          %v3187 = vpop.f32.mrf.mxu0
          %v3188 = vadd.f32 %v3127, %v3187
          %3189 = vmatmul.f32.gmra.mxu0 %v3094
          %v3190 = vpop.f32.mrf.mxu0
          %v3191 = vadd.f32 %v3127, %v3190
          %3192 = vmatmul.f32.gmra.mxu0 %v3095
          %v3193 = vpop.f32.mrf.mxu0
          %v3194 = vadd.f32 %v3127, %v3193
          %3195 = vmatmul.f32.gmra.mxu0 %v3096
          %v3196 = vpop.f32.mrf.mxu0
          %v3197 = vadd.f32 %v3127, %v3196
          %3198 = vmatmul.f32.gmra.mxu0 %v3097
          %v3199 = vpop.f32.mrf.mxu0
          %v3200 = vadd.f32 %v3127, %v3199
          %3201 = vmatmul.f32.gmra.mxu0 %v3098
          %v3202 = vpop.f32.mrf.mxu0
          %v3203 = vadd.f32 %v3127, %v3202
          %3204 = vmatmul.f32.gmra.mxu0 %v3099
          %v3205 = vpop.f32.mrf.mxu0
          %v3206 = vadd.f32 %v3127, %v3205
          %3207 = vmatmul.f32.gmra.mxu0 %v3100
          %v3208 = vpop.f32.mrf.mxu0
          %v3209 = vadd.f32 %v3127, %v3208
          %3210 = vmatmul.f32.gmra.mxu0 %v3101
          %v3211 = vpop.f32.mrf.mxu0
          %v3212 = vadd.f32 %v3127, %v3211
          %3213 = vmatmul.f32.gmra.mxu0 %v3102
          %v3214 = vpop.f32.mrf.mxu0
          %v3215 = vadd.f32 %v3127, %v3214
          %3216 = vmatmul.f32.gmra.mxu0 %v3103
          %v3217 = vpop.f32.mrf.mxu0
          %v3218 = vadd.f32 %v3127, %v3217
          %3219 = vmatmul.f32.gmra.mxu0 %v3104
          %v3220 = vpop.f32.mrf.mxu0
          %v3221 = vadd.f32 %v3127, %v3220
          %3222 = vmatmul.f32.gmra.mxu0 %v3105
          %v3223 = vpop.f32.mrf.mxu0
          %v3224 = vadd.f32 %v3127, %v3223
          %3225 = vmatmul.f32.gmra.mxu0 %v3106
          %v3226 = vpop.f32.mrf.mxu0
          %v3227 = vadd.f32 %v3127, %v3226
          %3228 = vmatmul.f32.gmra.mxu0 %v3107
          %v3229 = vpop.f32.mrf.mxu0
          %v3230 = vadd.f32 %v3127, %v3229
          %3231 = vmatmul.f32.gmra.mxu0 %v3108
          %v3232 = vpop.f32.mrf.mxu0
          %v3233 = vadd.f32 %v3127, %v3232
          %3234 = vmatmul.f32.gmra.mxu0 %v3109
          %v3235 = vpop.f32.mrf.mxu0
          %v3236 = vadd.f32 %v3127, %v3235
          %3237 = vmatmul.f32.gmra.mxu0 %v3110
          %v3238 = vpop.f32.mrf.mxu0
          %v3239 = vadd.f32 %v3127, %v3238
          %3240 = vdwg.mxu0
          %3241 = vadd.xlane.f32.xlu0 %v3146
          %v3242 = vpop.xlane.xlu0 %3241
          %3243 = vadd.xlane.f32.xlu0 %v3149
          %v3244 = vpop.xlane.xlu0 %3243
          %3245 = vadd.xlane.f32.xlu0 %v3152
          %v3246 = vpop.xlane.xlu0 %3245
          %3247 = vadd.xlane.f32.xlu0 %v3155
          %v3248 = vpop.xlane.xlu0 %3247
          %3249 = vadd.xlane.f32.xlu0 %v3158
          %v3250 = vpop.xlane.xlu0 %3249
          %3251 = vadd.xlane.f32.xlu0 %v3161
          %v3252 = vpop.xlane.xlu0 %3251
          %3253 = vadd.xlane.f32.xlu0 %v3164
          %v3254 = vpop.xlane.xlu0 %3253
          %3255 = vadd.xlane.f32.xlu0 %v3167
          %v3256 = vpop.xlane.xlu0 %3255
          %3257 = vadd.xlane.f32.xlu0 %v3170
          %v3258 = vpop.xlane.xlu0 %3257
          %3259 = vadd.xlane.f32.xlu0 %v3173
          %v3260 = vpop.xlane.xlu0 %3259
          %3261 = vadd.xlane.f32.xlu0 %v3176
          %v3262 = vpop.xlane.xlu0 %3261
          %3263 = vadd.xlane.f32.xlu0 %v3179
          %v3264 = vpop.xlane.xlu0 %3263
          %3265 = vadd.xlane.f32.xlu0 %v3182
          %v3266 = vpop.xlane.xlu0 %3265
          %3267 = vadd.xlane.f32.xlu0 %v3185
          %v3268 = vpop.xlane.xlu0 %3267
          %3269 = vadd.xlane.f32.xlu0 %v3188
          %v3270 = vpop.xlane.xlu0 %3269
          %3271 = vadd.xlane.f32.xlu0 %v3191
          %v3272 = vpop.xlane.xlu0 %3271
          %3273 = vadd.xlane.f32.xlu0 %v3194
          %v3274 = vpop.xlane.xlu0 %3273
          %3275 = vadd.xlane.f32.xlu0 %v3197
          %v3276 = vpop.xlane.xlu0 %3275
          %3277 = vadd.xlane.f32.xlu0 %v3200
          %v3278 = vpop.xlane.xlu0 %3277
          %3279 = vadd.xlane.f32.xlu0 %v3203
          %v3280 = vpop.xlane.xlu0 %3279
          %3281 = vadd.xlane.f32.xlu0 %v3206
          %v3282 = vpop.xlane.xlu0 %3281
          %3283 = vadd.xlane.f32.xlu0 %v3209
          %v3284 = vpop.xlane.xlu0 %3283
          %3285 = vadd.xlane.f32.xlu0 %v3212
          %v3286 = vpop.xlane.xlu0 %3285
          %3287 = vadd.xlane.f32.xlu0 %v3215
          %v3288 = vpop.xlane.xlu0 %3287
          %3289 = vadd.xlane.f32.xlu0 %v3218
          %v3290 = vpop.xlane.xlu0 %3289
          %3291 = vadd.xlane.f32.xlu0 %v3221
          %v3292 = vpop.xlane.xlu0 %3291
          %3293 = vadd.xlane.f32.xlu0 %v3224
          %v3294 = vpop.xlane.xlu0 %3293
          %3295 = vadd.xlane.f32.xlu0 %v3227
          %v3296 = vpop.xlane.xlu0 %3295
          %3297 = vadd.xlane.f32.xlu0 %v3230
          %v3298 = vpop.xlane.xlu0 %3297
          %3299 = vadd.xlane.f32.xlu0 %v3233
          %v3300 = vpop.xlane.xlu0 %3299
          %3301 = vadd.xlane.f32.xlu0 %v3236
          %v3302 = vpop.xlane.xlu0 %3301
          %3303 = vadd.xlane.f32.xlu0 %v3239
          %v3304 = vpop.xlane.xlu0 %3303
          %v3305 = vrcp.pop 128.0
          %v3306 = vmul.f32 128.0, %v3305
          %v3307 = vsub.f32 1.0, %v3306
          %v3308 = vmul.f32 %v3305, %v3307
          %v3309 = vadd.f32 %v3305, %v3308
          %vm3310 = vweird.f32 %v3305
          %v3311 = vsel %vm3310, %v3305, %v3309
          %v3312 = vmul.f32 %v3242, %v3311
          %v3313 = vmul.f32 %v3244, %v3311
          %v3314 = vmul.f32 %v3246, %v3311
          %v3315 = vmul.f32 %v3248, %v3311
          %v3316 = vmul.f32 %v3250, %v3311
          %v3317 = vmul.f32 %v3252, %v3311
          %v3318 = vmul.f32 %v3254, %v3311
          %v3319 = vmul.f32 %v3256, %v3311
          %v3320 = vmul.f32 %v3258, %v3311
          %v3321 = vmul.f32 %v3260, %v3311
          %v3322 = vmul.f32 %v3262, %v3311
          %v3323 = vmul.f32 %v3264, %v3311
          %v3324 = vmul.f32 %v3266, %v3311
          %v3325 = vmul.f32 %v3268, %v3311
          %v3326 = vmul.f32 %v3270, %v3311
          %v3327 = vmul.f32 %v3272, %v3311
          %v3328 = vmul.f32 %v3274, %v3311
          %v3329 = vmul.f32 %v3276, %v3311
          %v3330 = vmul.f32 %v3278, %v3311
          %v3331 = vmul.f32 %v3280, %v3311
          %v3332 = vmul.f32 %v3282, %v3311
          %v3333 = vmul.f32 %v3284, %v3311
          %v3334 = vmul.f32 %v3286, %v3311
          %v3335 = vmul.f32 %v3288, %v3311
          %v3336 = vmul.f32 %v3290, %v3311
          %v3337 = vmul.f32 %v3292, %v3311
          %v3338 = vmul.f32 %v3294, %v3311
          %v3339 = vmul.f32 %v3296, %v3311
          %v3340 = vmul.f32 %v3298, %v3311
          %v3341 = vmul.f32 %v3300, %v3311
          %v3342 = vmul.f32 %v3302, %v3311
          %v3343 = vmul.f32 %v3304, %v3311
          %v3344 = vsub.f32 %v3146, %v3312
          %v3345 = vsub.f32 %v3149, %v3313
          %v3346 = vsub.f32 %v3152, %v3314
          %v3347 = vsub.f32 %v3155, %v3315
          %v3348 = vsub.f32 %v3158, %v3316
          %v3349 = vsub.f32 %v3161, %v3317
          %v3350 = vsub.f32 %v3164, %v3318
          %v3351 = vsub.f32 %v3167, %v3319
          %v3352 = vsub.f32 %v3170, %v3320
          %v3353 = vsub.f32 %v3173, %v3321
          %v3354 = vsub.f32 %v3176, %v3322
          %v3355 = vsub.f32 %v3179, %v3323
          %v3356 = vsub.f32 %v3182, %v3324
          %v3357 = vsub.f32 %v3185, %v3325
          %v3358 = vsub.f32 %v3188, %v3326
          %v3359 = vsub.f32 %v3191, %v3327
          %v3360 = vsub.f32 %v3194, %v3328
          %v3361 = vsub.f32 %v3197, %v3329
          %v3362 = vsub.f32 %v3200, %v3330
          %v3363 = vsub.f32 %v3203, %v3331
          %v3364 = vsub.f32 %v3206, %v3332
          %v3365 = vsub.f32 %v3209, %v3333
          %v3366 = vsub.f32 %v3212, %v3334
          %v3367 = vsub.f32 %v3215, %v3335
          %v3368 = vsub.f32 %v3218, %v3336
          %v3369 = vsub.f32 %v3221, %v3337
          %v3370 = vsub.f32 %v3224, %v3338
          %v3371 = vsub.f32 %v3227, %v3339
          %v3372 = vsub.f32 %v3230, %v3340
          %v3373 = vsub.f32 %v3233, %v3341
          %v3374 = vsub.f32 %v3236, %v3342
          %v3375 = vsub.f32 %v3239, %v3343
          %v3376 = vmul.f32 %v3344, %v3344
          %v3377 = vmul.f32 %v3345, %v3345
          %v3378 = vmul.f32 %v3346, %v3346
          %v3379 = vmul.f32 %v3347, %v3347
          %v3380 = vmul.f32 %v3348, %v3348
          %v3381 = vmul.f32 %v3349, %v3349
          %v3382 = vmul.f32 %v3350, %v3350
          %v3383 = vmul.f32 %v3351, %v3351
          %v3384 = vmul.f32 %v3352, %v3352
          %v3385 = vmul.f32 %v3353, %v3353
          %v3386 = vmul.f32 %v3354, %v3354
          %v3387 = vmul.f32 %v3355, %v3355
          %v3388 = vmul.f32 %v3356, %v3356
          %v3389 = vmul.f32 %v3357, %v3357
          %v3390 = vmul.f32 %v3358, %v3358
          %v3391 = vmul.f32 %v3359, %v3359
          %v3392 = vmul.f32 %v3360, %v3360
          %v3393 = vmul.f32 %v3361, %v3361
          %v3394 = vmul.f32 %v3362, %v3362
          %v3395 = vmul.f32 %v3363, %v3363
          %v3396 = vmul.f32 %v3364, %v3364
          %v3397 = vmul.f32 %v3365, %v3365
          %v3398 = vmul.f32 %v3366, %v3366
          %v3399 = vmul.f32 %v3367, %v3367
          %v3400 = vmul.f32 %v3368, %v3368
          %v3401 = vmul.f32 %v3369, %v3369
          %v3402 = vmul.f32 %v3370, %v3370
          %v3403 = vmul.f32 %v3371, %v3371
          %v3404 = vmul.f32 %v3372, %v3372
          %v3405 = vmul.f32 %v3373, %v3373
          %v3406 = vmul.f32 %v3374, %v3374
          %v3407 = vmul.f32 %v3375, %v3375
          %3408 = vadd.xlane.f32.xlu0 %v3376
          %v3409 = vpop.xlane.xlu0 %3408
          %3410 = vadd.xlane.f32.xlu0 %v3377
          %v3411 = vpop.xlane.xlu0 %3410
          %3412 = vadd.xlane.f32.xlu0 %v3378
          %v3413 = vpop.xlane.xlu0 %3412
          %3414 = vadd.xlane.f32.xlu0 %v3379
          %v3415 = vpop.xlane.xlu0 %3414
          %3416 = vadd.xlane.f32.xlu0 %v3380
          %v3417 = vpop.xlane.xlu0 %3416
          %3418 = vadd.xlane.f32.xlu0 %v3381
          %v3419 = vpop.xlane.xlu0 %3418
          %3420 = vadd.xlane.f32.xlu0 %v3382
          %v3421 = vpop.xlane.xlu0 %3420
          %3422 = vadd.xlane.f32.xlu0 %v3383
          %v3423 = vpop.xlane.xlu0 %3422
          %3424 = vadd.xlane.f32.xlu0 %v3384
          %v3425 = vpop.xlane.xlu0 %3424
          %3426 = vadd.xlane.f32.xlu0 %v3385
          %v3427 = vpop.xlane.xlu0 %3426
          %3428 = vadd.xlane.f32.xlu0 %v3386
          %v3429 = vpop.xlane.xlu0 %3428
          %3430 = vadd.xlane.f32.xlu0 %v3387
          %v3431 = vpop.xlane.xlu0 %3430
          %3432 = vadd.xlane.f32.xlu0 %v3388
          %v3433 = vpop.xlane.xlu0 %3432
          %3434 = vadd.xlane.f32.xlu0 %v3389
          %v3435 = vpop.xlane.xlu0 %3434
          %3436 = vadd.xlane.f32.xlu0 %v3390
          %v3437 = vpop.xlane.xlu0 %3436
          %3438 = vadd.xlane.f32.xlu0 %v3391
          %v3439 = vpop.xlane.xlu0 %3438
          %3440 = vadd.xlane.f32.xlu0 %v3392
          %v3441 = vpop.xlane.xlu0 %3440
          %3442 = vadd.xlane.f32.xlu0 %v3393
          %v3443 = vpop.xlane.xlu0 %3442
          %3444 = vadd.xlane.f32.xlu0 %v3394
          %v3445 = vpop.xlane.xlu0 %3444
          %3446 = vadd.xlane.f32.xlu0 %v3395
          %v3447 = vpop.xlane.xlu0 %3446
          %3448 = vadd.xlane.f32.xlu0 %v3396
          %v3449 = vpop.xlane.xlu0 %3448
          %3450 = vadd.xlane.f32.xlu0 %v3397
          %v3451 = vpop.xlane.xlu0 %3450
          %3452 = vadd.xlane.f32.xlu0 %v3398
          %v3453 = vpop.xlane.xlu0 %3452
          %3454 = vadd.xlane.f32.xlu0 %v3399
          %v3455 = vpop.xlane.xlu0 %3454
          %3456 = vadd.xlane.f32.xlu0 %v3400
          %v3457 = vpop.xlane.xlu0 %3456
          %3458 = vadd.xlane.f32.xlu0 %v3401
          %v3459 = vpop.xlane.xlu0 %3458
          %3460 = vadd.xlane.f32.xlu0 %v3402
          %v3461 = vpop.xlane.xlu0 %3460
          %3462 = vadd.xlane.f32.xlu0 %v3403
          %v3463 = vpop.xlane.xlu0 %3462
          %3464 = vadd.xlane.f32.xlu0 %v3404
          %v3465 = vpop.xlane.xlu0 %3464
          %3466 = vadd.xlane.f32.xlu0 %v3405
          %v3467 = vpop.xlane.xlu0 %3466
          %3468 = vadd.xlane.f32.xlu0 %v3406
          %v3469 = vpop.xlane.xlu0 %3468
          %3470 = vadd.xlane.f32.xlu0 %v3407
          %v3471 = vpop.xlane.xlu0 %3470
          %v3472 = vmul.f32 %v3409, %v3311
          %v3473 = vmul.f32 %v3411, %v3311
          %v3474 = vmul.f32 %v3413, %v3311
          %v3475 = vmul.f32 %v3415, %v3311
          %v3476 = vmul.f32 %v3417, %v3311
          %v3477 = vmul.f32 %v3419, %v3311
          %v3478 = vmul.f32 %v3421, %v3311
          %v3479 = vmul.f32 %v3423, %v3311
          %v3480 = vmul.f32 %v3425, %v3311
          %v3481 = vmul.f32 %v3427, %v3311
          %v3482 = vmul.f32 %v3429, %v3311
          %v3483 = vmul.f32 %v3431, %v3311
          %v3484 = vmul.f32 %v3433, %v3311
          %v3485 = vmul.f32 %v3435, %v3311
          %v3486 = vmul.f32 %v3437, %v3311
          %v3487 = vmul.f32 %v3439, %v3311
          %v3488 = vmul.f32 %v3441, %v3311
          %v3489 = vmul.f32 %v3443, %v3311
          %v3490 = vmul.f32 %v3445, %v3311
          %v3491 = vmul.f32 %v3447, %v3311
          %v3492 = vmul.f32 %v3449, %v3311
          %v3493 = vmul.f32 %v3451, %v3311
          %v3494 = vmul.f32 %v3453, %v3311
          %v3495 = vmul.f32 %v3455, %v3311
          %v3496 = vmul.f32 %v3457, %v3311
          %v3497 = vmul.f32 %v3459, %v3311
          %v3498 = vmul.f32 %v3461, %v3311
          %v3499 = vmul.f32 %v3463, %v3311
          %v3500 = vmul.f32 %v3465, %v3311
          %v3501 = vmul.f32 %v3467, %v3311
          %v3502 = vmul.f32 %v3469, %v3311
          %v3503 = vmul.f32 %v3471, %v3311
          %v3504 = vadd.f32 %v3472, 1e-05
          %v3505 = vadd.f32 %v3473, 1e-05
          %v3506 = vadd.f32 %v3474, 1e-05
          %v3507 = vadd.f32 %v3475, 1e-05
          %v3508 = vadd.f32 %v3476, 1e-05
          %v3509 = vadd.f32 %v3477, 1e-05
          %v3510 = vadd.f32 %v3478, 1e-05
          %v3511 = vadd.f32 %v3479, 1e-05
          %v3512 = vadd.f32 %v3480, 1e-05
          %v3513 = vadd.f32 %v3481, 1e-05
          %v3514 = vadd.f32 %v3482, 1e-05
          %v3515 = vadd.f32 %v3483, 1e-05
          %v3516 = vadd.f32 %v3484, 1e-05
          %v3517 = vadd.f32 %v3485, 1e-05
          %v3518 = vadd.f32 %v3486, 1e-05
          %v3519 = vadd.f32 %v3487, 1e-05
          %v3520 = vadd.f32 %v3488, 1e-05
          %v3521 = vadd.f32 %v3489, 1e-05
          %v3522 = vadd.f32 %v3490, 1e-05
          %v3523 = vadd.f32 %v3491, 1e-05
          %v3524 = vadd.f32 %v3492, 1e-05
          %v3525 = vadd.f32 %v3493, 1e-05
          %v3526 = vadd.f32 %v3494, 1e-05
          %v3527 = vadd.f32 %v3495, 1e-05
          %v3528 = vadd.f32 %v3496, 1e-05
          %v3529 = vadd.f32 %v3497, 1e-05
          %v3530 = vadd.f32 %v3498, 1e-05
          %v3531 = vadd.f32 %v3499, 1e-05
          %v3532 = vadd.f32 %v3500, 1e-05
          %v3533 = vadd.f32 %v3501, 1e-05
          %v3534 = vadd.f32 %v3502, 1e-05
          %v3535 = vadd.f32 %v3503, 1e-05
          %v3536 = vrsqrt.pop %v3504
          %v3537 = vmul.f32 %v3536, %v3504
          %v3538 = vmul.f32 %v3537, %v3536
          %v3539 = vmul.f32 0.5, %v3538
          %v3540 = vsub.f32 1.5, %v3539
          %v3541 = vmul.f32 %v3536, %v3540
          %vm3542 = vweird.f32 %v3504
          %vm3543 = vweird.f32 %v3536
          %vm3544 = vmor %vm3542, %vm3543
          %v3545 = vsel %vm3544, %v3536, %v3541
          %v3546 = vrsqrt.pop %v3505
          %v3547 = vmul.f32 %v3546, %v3505
          %v3548 = vmul.f32 %v3547, %v3546
          %v3549 = vmul.f32 0.5, %v3548
          %v3550 = vsub.f32 1.5, %v3549
          %v3551 = vmul.f32 %v3546, %v3550
          %vm3552 = vweird.f32 %v3505
          %vm3553 = vweird.f32 %v3546
          %vm3554 = vmor %vm3552, %vm3553
          %v3555 = vsel %vm3554, %v3546, %v3551
          %v3556 = vrsqrt.pop %v3506
          %v3557 = vmul.f32 %v3556, %v3506
          %v3558 = vmul.f32 %v3557, %v3556
          %v3559 = vmul.f32 0.5, %v3558
          %v3560 = vsub.f32 1.5, %v3559
          %v3561 = vmul.f32 %v3556, %v3560
          %vm3562 = vweird.f32 %v3506
          %vm3563 = vweird.f32 %v3556
          %vm3564 = vmor %vm3562, %vm3563
          %v3565 = vsel %vm3564, %v3556, %v3561
          %v3566 = vrsqrt.pop %v3507
          %v3567 = vmul.f32 %v3566, %v3507
          %v3568 = vmul.f32 %v3567, %v3566
          %v3569 = vmul.f32 0.5, %v3568
          %v3570 = vsub.f32 1.5, %v3569
          %v3571 = vmul.f32 %v3566, %v3570
          %vm3572 = vweird.f32 %v3507
          %vm3573 = vweird.f32 %v3566
          %vm3574 = vmor %vm3572, %vm3573
          %v3575 = vsel %vm3574, %v3566, %v3571
          %v3576 = vrsqrt.pop %v3508
          %v3577 = vmul.f32 %v3576, %v3508
          %v3578 = vmul.f32 %v3577, %v3576
          %v3579 = vmul.f32 0.5, %v3578
          %v3580 = vsub.f32 1.5, %v3579
          %v3581 = vmul.f32 %v3576, %v3580
          %vm3582 = vweird.f32 %v3508
          %vm3583 = vweird.f32 %v3576
          %vm3584 = vmor %vm3582, %vm3583
          %v3585 = vsel %vm3584, %v3576, %v3581
          %v3586 = vrsqrt.pop %v3509
          %v3587 = vmul.f32 %v3586, %v3509
          %v3588 = vmul.f32 %v3587, %v3586
          %v3589 = vmul.f32 0.5, %v3588
          %v3590 = vsub.f32 1.5, %v3589
          %v3591 = vmul.f32 %v3586, %v3590
          %vm3592 = vweird.f32 %v3509
          %vm3593 = vweird.f32 %v3586
          %vm3594 = vmor %vm3592, %vm3593
          %v3595 = vsel %vm3594, %v3586, %v3591
          %v3596 = vrsqrt.pop %v3510
          %v3597 = vmul.f32 %v3596, %v3510
          %v3598 = vmul.f32 %v3597, %v3596
          %v3599 = vmul.f32 0.5, %v3598
          %v3600 = vsub.f32 1.5, %v3599
          %v3601 = vmul.f32 %v3596, %v3600
          %vm3602 = vweird.f32 %v3510
          %vm3603 = vweird.f32 %v3596
          %vm3604 = vmor %vm3602, %vm3603
          %v3605 = vsel %vm3604, %v3596, %v3601
          %v3606 = vrsqrt.pop %v3511
          %v3607 = vmul.f32 %v3606, %v3511
          %v3608 = vmul.f32 %v3607, %v3606
          %v3609 = vmul.f32 0.5, %v3608
          %v3610 = vsub.f32 1.5, %v3609
          %v3611 = vmul.f32 %v3606, %v3610
          %vm3612 = vweird.f32 %v3511
          %vm3613 = vweird.f32 %v3606
          %vm3614 = vmor %vm3612, %vm3613
          %v3615 = vsel %vm3614, %v3606, %v3611
          %v3616 = vrsqrt.pop %v3512
          %v3617 = vmul.f32 %v3616, %v3512
          %v3618 = vmul.f32 %v3617, %v3616
          %v3619 = vmul.f32 0.5, %v3618
          %v3620 = vsub.f32 1.5, %v3619
          %v3621 = vmul.f32 %v3616, %v3620
          %vm3622 = vweird.f32 %v3512
          %vm3623 = vweird.f32 %v3616
          %vm3624 = vmor %vm3622, %vm3623
          %v3625 = vsel %vm3624, %v3616, %v3621
          %v3626 = vrsqrt.pop %v3513
          %v3627 = vmul.f32 %v3626, %v3513
          %v3628 = vmul.f32 %v3627, %v3626
          %v3629 = vmul.f32 0.5, %v3628
          %v3630 = vsub.f32 1.5, %v3629
          %v3631 = vmul.f32 %v3626, %v3630
          %vm3632 = vweird.f32 %v3513
          %vm3633 = vweird.f32 %v3626
          %vm3634 = vmor %vm3632, %vm3633
          %v3635 = vsel %vm3634, %v3626, %v3631
          %v3636 = vrsqrt.pop %v3514
          %v3637 = vmul.f32 %v3636, %v3514
          %v3638 = vmul.f32 %v3637, %v3636
          %v3639 = vmul.f32 0.5, %v3638
          %v3640 = vsub.f32 1.5, %v3639
          %v3641 = vmul.f32 %v3636, %v3640
          %vm3642 = vweird.f32 %v3514
          %vm3643 = vweird.f32 %v3636
          %vm3644 = vmor %vm3642, %vm3643
          %v3645 = vsel %vm3644, %v3636, %v3641
          %v3646 = vrsqrt.pop %v3515
          %v3647 = vmul.f32 %v3646, %v3515
          %v3648 = vmul.f32 %v3647, %v3646
          %v3649 = vmul.f32 0.5, %v3648
          %v3650 = vsub.f32 1.5, %v3649
          %v3651 = vmul.f32 %v3646, %v3650
          %vm3652 = vweird.f32 %v3515
          %vm3653 = vweird.f32 %v3646
          %vm3654 = vmor %vm3652, %vm3653
          %v3655 = vsel %vm3654, %v3646, %v3651
          %v3656 = vrsqrt.pop %v3516
          %v3657 = vmul.f32 %v3656, %v3516
          %v3658 = vmul.f32 %v3657, %v3656
          %v3659 = vmul.f32 0.5, %v3658
          %v3660 = vsub.f32 1.5, %v3659
          %v3661 = vmul.f32 %v3656, %v3660
          %vm3662 = vweird.f32 %v3516
          %vm3663 = vweird.f32 %v3656
          %vm3664 = vmor %vm3662, %vm3663
          %v3665 = vsel %vm3664, %v3656, %v3661
          %v3666 = vrsqrt.pop %v3517
          %v3667 = vmul.f32 %v3666, %v3517
          %v3668 = vmul.f32 %v3667, %v3666
          %v3669 = vmul.f32 0.5, %v3668
          %v3670 = vsub.f32 1.5, %v3669
          %v3671 = vmul.f32 %v3666, %v3670
          %vm3672 = vweird.f32 %v3517
          %vm3673 = vweird.f32 %v3666
          %vm3674 = vmor %vm3672, %vm3673
          %v3675 = vsel %vm3674, %v3666, %v3671
          %v3676 = vrsqrt.pop %v3518
          %v3677 = vmul.f32 %v3676, %v3518
          %v3678 = vmul.f32 %v3677, %v3676
          %v3679 = vmul.f32 0.5, %v3678
          %v3680 = vsub.f32 1.5, %v3679
          %v3681 = vmul.f32 %v3676, %v3680
          %vm3682 = vweird.f32 %v3518
          %vm3683 = vweird.f32 %v3676
          %vm3684 = vmor %vm3682, %vm3683
          %v3685 = vsel %vm3684, %v3676, %v3681
          %v3686 = vrsqrt.pop %v3519
          %v3687 = vmul.f32 %v3686, %v3519
          %v3688 = vmul.f32 %v3687, %v3686
          %v3689 = vmul.f32 0.5, %v3688
          %v3690 = vsub.f32 1.5, %v3689
          %v3691 = vmul.f32 %v3686, %v3690
          %vm3692 = vweird.f32 %v3519
          %vm3693 = vweird.f32 %v3686
          %vm3694 = vmor %vm3692, %vm3693
          %v3695 = vsel %vm3694, %v3686, %v3691
          %v3696 = vrsqrt.pop %v3520
          %v3697 = vmul.f32 %v3696, %v3520
          %v3698 = vmul.f32 %v3697, %v3696
          %v3699 = vmul.f32 0.5, %v3698
          %v3700 = vsub.f32 1.5, %v3699
          %v3701 = vmul.f32 %v3696, %v3700
          %vm3702 = vweird.f32 %v3520
          %vm3703 = vweird.f32 %v3696
          %vm3704 = vmor %vm3702, %vm3703
          %v3705 = vsel %vm3704, %v3696, %v3701
          %v3706 = vrsqrt.pop %v3521
          %v3707 = vmul.f32 %v3706, %v3521
          %v3708 = vmul.f32 %v3707, %v3706
          %v3709 = vmul.f32 0.5, %v3708
          %v3710 = vsub.f32 1.5, %v3709
          %v3711 = vmul.f32 %v3706, %v3710
          %vm3712 = vweird.f32 %v3521
          %vm3713 = vweird.f32 %v3706
          %vm3714 = vmor %vm3712, %vm3713
          %v3715 = vsel %vm3714, %v3706, %v3711
          %v3716 = vrsqrt.pop %v3522
          %v3717 = vmul.f32 %v3716, %v3522
          %v3718 = vmul.f32 %v3717, %v3716
          %v3719 = vmul.f32 0.5, %v3718
          %v3720 = vsub.f32 1.5, %v3719
          %v3721 = vmul.f32 %v3716, %v3720
          %vm3722 = vweird.f32 %v3522
          %vm3723 = vweird.f32 %v3716
          %vm3724 = vmor %vm3722, %vm3723
          %v3725 = vsel %vm3724, %v3716, %v3721
          %v3726 = vrsqrt.pop %v3523
          %v3727 = vmul.f32 %v3726, %v3523
          %v3728 = vmul.f32 %v3727, %v3726
          %v3729 = vmul.f32 0.5, %v3728
          %v3730 = vsub.f32 1.5, %v3729
          %v3731 = vmul.f32 %v3726, %v3730
          %vm3732 = vweird.f32 %v3523
          %vm3733 = vweird.f32 %v3726
          %vm3734 = vmor %vm3732, %vm3733
          %v3735 = vsel %vm3734, %v3726, %v3731
          %v3736 = vrsqrt.pop %v3524
          %v3737 = vmul.f32 %v3736, %v3524
          %v3738 = vmul.f32 %v3737, %v3736
          %v3739 = vmul.f32 0.5, %v3738
          %v3740 = vsub.f32 1.5, %v3739
          %v3741 = vmul.f32 %v3736, %v3740
          %vm3742 = vweird.f32 %v3524
          %vm3743 = vweird.f32 %v3736
          %vm3744 = vmor %vm3742, %vm3743
          %v3745 = vsel %vm3744, %v3736, %v3741
          %v3746 = vrsqrt.pop %v3525
          %v3747 = vmul.f32 %v3746, %v3525
          %v3748 = vmul.f32 %v3747, %v3746
          %v3749 = vmul.f32 0.5, %v3748
          %v3750 = vsub.f32 1.5, %v3749
          %v3751 = vmul.f32 %v3746, %v3750
          %vm3752 = vweird.f32 %v3525
          %vm3753 = vweird.f32 %v3746
          %vm3754 = vmor %vm3752, %vm3753
          %v3755 = vsel %vm3754, %v3746, %v3751
          %v3756 = vrsqrt.pop %v3526
          %v3757 = vmul.f32 %v3756, %v3526
          %v3758 = vmul.f32 %v3757, %v3756
          %v3759 = vmul.f32 0.5, %v3758
          %v3760 = vsub.f32 1.5, %v3759
          %v3761 = vmul.f32 %v3756, %v3760
          %vm3762 = vweird.f32 %v3526
          %vm3763 = vweird.f32 %v3756
          %vm3764 = vmor %vm3762, %vm3763
          %v3765 = vsel %vm3764, %v3756, %v3761
          %v3766 = vrsqrt.pop %v3527
          %v3767 = vmul.f32 %v3766, %v3527
          %v3768 = vmul.f32 %v3767, %v3766
          %v3769 = vmul.f32 0.5, %v3768
          %v3770 = vsub.f32 1.5, %v3769
          %v3771 = vmul.f32 %v3766, %v3770
          %vm3772 = vweird.f32 %v3527
          %vm3773 = vweird.f32 %v3766
          %vm3774 = vmor %vm3772, %vm3773
          %v3775 = vsel %vm3774, %v3766, %v3771
          %v3776 = vrsqrt.pop %v3528
          %v3777 = vmul.f32 %v3776, %v3528
          %v3778 = vmul.f32 %v3777, %v3776
          %v3779 = vmul.f32 0.5, %v3778
          %v3780 = vsub.f32 1.5, %v3779
          %v3781 = vmul.f32 %v3776, %v3780
          %vm3782 = vweird.f32 %v3528
          %vm3783 = vweird.f32 %v3776
          %vm3784 = vmor %vm3782, %vm3783
          %v3785 = vsel %vm3784, %v3776, %v3781
          %v3786 = vrsqrt.pop %v3529
          %v3787 = vmul.f32 %v3786, %v3529
          %v3788 = vmul.f32 %v3787, %v3786
          %v3789 = vmul.f32 0.5, %v3788
          %v3790 = vsub.f32 1.5, %v3789
          %v3791 = vmul.f32 %v3786, %v3790
          %vm3792 = vweird.f32 %v3529
          %vm3793 = vweird.f32 %v3786
          %vm3794 = vmor %vm3792, %vm3793
          %v3795 = vsel %vm3794, %v3786, %v3791
          %v3796 = vrsqrt.pop %v3530
          %v3797 = vmul.f32 %v3796, %v3530
          %v3798 = vmul.f32 %v3797, %v3796
          %v3799 = vmul.f32 0.5, %v3798
          %v3800 = vsub.f32 1.5, %v3799
          %v3801 = vmul.f32 %v3796, %v3800
          %vm3802 = vweird.f32 %v3530
          %vm3803 = vweird.f32 %v3796
          %vm3804 = vmor %vm3802, %vm3803
          %v3805 = vsel %vm3804, %v3796, %v3801
          %v3806 = vrsqrt.pop %v3531
          %v3807 = vmul.f32 %v3806, %v3531
          %v3808 = vmul.f32 %v3807, %v3806
          %v3809 = vmul.f32 0.5, %v3808
          %v3810 = vsub.f32 1.5, %v3809
          %v3811 = vmul.f32 %v3806, %v3810
          %vm3812 = vweird.f32 %v3531
          %vm3813 = vweird.f32 %v3806
          %vm3814 = vmor %vm3812, %vm3813
          %v3815 = vsel %vm3814, %v3806, %v3811
          %v3816 = vrsqrt.pop %v3532
          %v3817 = vmul.f32 %v3816, %v3532
          %v3818 = vmul.f32 %v3817, %v3816
          %v3819 = vmul.f32 0.5, %v3818
          %v3820 = vsub.f32 1.5, %v3819
          %v3821 = vmul.f32 %v3816, %v3820
          %vm3822 = vweird.f32 %v3532
          %vm3823 = vweird.f32 %v3816
          %vm3824 = vmor %vm3822, %vm3823
          %v3825 = vsel %vm3824, %v3816, %v3821
          %v3826 = vrsqrt.pop %v3533
          %v3827 = vmul.f32 %v3826, %v3533
          %v3828 = vmul.f32 %v3827, %v3826
          %v3829 = vmul.f32 0.5, %v3828
          %v3830 = vsub.f32 1.5, %v3829
          %v3831 = vmul.f32 %v3826, %v3830
          %vm3832 = vweird.f32 %v3533
          %vm3833 = vweird.f32 %v3826
          %vm3834 = vmor %vm3832, %vm3833
          %v3835 = vsel %vm3834, %v3826, %v3831
          %v3836 = vrsqrt.pop %v3534
          %v3837 = vmul.f32 %v3836, %v3534
          %v3838 = vmul.f32 %v3837, %v3836
          %v3839 = vmul.f32 0.5, %v3838
          %v3840 = vsub.f32 1.5, %v3839
          %v3841 = vmul.f32 %v3836, %v3840
          %vm3842 = vweird.f32 %v3534
          %vm3843 = vweird.f32 %v3836
          %vm3844 = vmor %vm3842, %vm3843
          %v3845 = vsel %vm3844, %v3836, %v3841
          %v3846 = vrsqrt.pop %v3535
          %v3847 = vmul.f32 %v3846, %v3535
          %v3848 = vmul.f32 %v3847, %v3846
          %v3849 = vmul.f32 0.5, %v3848
          %v3850 = vsub.f32 1.5, %v3849
          %v3851 = vmul.f32 %v3846, %v3850
          %vm3852 = vweird.f32 %v3535
          %vm3853 = vweird.f32 %v3846
          %vm3854 = vmor %vm3852, %vm3853
          %v3855 = vsel %vm3854, %v3846, %v3851
          %v3856 = vmul.f32 %v3344, %v3545
          %v3857 = vmul.f32 %v3345, %v3555
          %v3858 = vmul.f32 %v3346, %v3565
          %v3859 = vmul.f32 %v3347, %v3575
          %v3860 = vmul.f32 %v3348, %v3585
          %v3861 = vmul.f32 %v3349, %v3595
          %v3862 = vmul.f32 %v3350, %v3605
          %v3863 = vmul.f32 %v3351, %v3615
          %v3864 = vmul.f32 %v3352, %v3625
          %v3865 = vmul.f32 %v3353, %v3635
          %v3866 = vmul.f32 %v3354, %v3645
          %v3867 = vmul.f32 %v3355, %v3655
          %v3868 = vmul.f32 %v3356, %v3665
          %v3869 = vmul.f32 %v3357, %v3675
          %v3870 = vmul.f32 %v3358, %v3685
          %v3871 = vmul.f32 %v3359, %v3695
          %v3872 = vmul.f32 %v3360, %v3705
          %v3873 = vmul.f32 %v3361, %v3715
          %v3874 = vmul.f32 %v3362, %v3725
          %v3875 = vmul.f32 %v3363, %v3735
          %v3876 = vmul.f32 %v3364, %v3745
          %v3877 = vmul.f32 %v3365, %v3755
          %v3878 = vmul.f32 %v3366, %v3765
          %v3879 = vmul.f32 %v3367, %v3775
          %v3880 = vmul.f32 %v3368, %v3785
          %v3881 = vmul.f32 %v3369, %v3795
          %v3882 = vmul.f32 %v3370, %v3805
          %v3883 = vmul.f32 %v3371, %v3815
          %v3884 = vmul.f32 %v3372, %v3825
          %v3885 = vmul.f32 %v3373, %v3835
          %v3886 = vmul.f32 %v3374, %v3845
          %v3887 = vmul.f32 %v3375, %v3855
          %v3888 = vperm.slane %v2255, 2
          %v3889 = vmul.f32 %v3856, %v3888
          %v3890 = vmul.f32 %v3857, %v3888
          %v3891 = vmul.f32 %v3858, %v3888
          %v3892 = vmul.f32 %v3859, %v3888
          %v3893 = vmul.f32 %v3860, %v3888
          %v3894 = vmul.f32 %v3861, %v3888
          %v3895 = vmul.f32 %v3862, %v3888
          %v3896 = vmul.f32 %v3863, %v3888
          %v3897 = vmul.f32 %v3864, %v3888
          %v3898 = vmul.f32 %v3865, %v3888
          %v3899 = vmul.f32 %v3866, %v3888
          %v3900 = vmul.f32 %v3867, %v3888
          %v3901 = vmul.f32 %v3868, %v3888
          %v3902 = vmul.f32 %v3869, %v3888
          %v3903 = vmul.f32 %v3870, %v3888
          %v3904 = vmul.f32 %v3871, %v3888
          %v3905 = vmul.f32 %v3872, %v3888
          %v3906 = vmul.f32 %v3873, %v3888
          %v3907 = vmul.f32 %v3874, %v3888
          %v3908 = vmul.f32 %v3875, %v3888
          %v3909 = vmul.f32 %v3876, %v3888
          %v3910 = vmul.f32 %v3877, %v3888
          %v3911 = vmul.f32 %v3878, %v3888
          %v3912 = vmul.f32 %v3879, %v3888
          %v3913 = vmul.f32 %v3880, %v3888
          %v3914 = vmul.f32 %v3881, %v3888
          %v3915 = vmul.f32 %v3882, %v3888
          %v3916 = vmul.f32 %v3883, %v3888
          %v3917 = vmul.f32 %v3884, %v3888
          %v3918 = vmul.f32 %v3885, %v3888
          %v3919 = vmul.f32 %v3886, %v3888
          %v3920 = vmul.f32 %v3887, %v3888
          %v3921 = vperm.slane %v2255, 3
          %v3922 = vadd.f32 %v3889, %v3921
          %v3923 = vadd.f32 %v3890, %v3921
          %v3924 = vadd.f32 %v3891, %v3921
          %v3925 = vadd.f32 %v3892, %v3921
          %v3926 = vadd.f32 %v3893, %v3921
          %v3927 = vadd.f32 %v3894, %v3921
          %v3928 = vadd.f32 %v3895, %v3921
          %v3929 = vadd.f32 %v3896, %v3921
          %v3930 = vadd.f32 %v3897, %v3921
          %v3931 = vadd.f32 %v3898, %v3921
          %v3932 = vadd.f32 %v3899, %v3921
          %v3933 = vadd.f32 %v3900, %v3921
          %v3934 = vadd.f32 %v3901, %v3921
          %v3935 = vadd.f32 %v3902, %v3921
          %v3936 = vadd.f32 %v3903, %v3921
          %v3937 = vadd.f32 %v3904, %v3921
          %v3938 = vadd.f32 %v3905, %v3921
          %v3939 = vadd.f32 %v3906, %v3921
          %v3940 = vadd.f32 %v3907, %v3921
          %v3941 = vadd.f32 %v3908, %v3921
          %v3942 = vadd.f32 %v3909, %v3921
          %v3943 = vadd.f32 %v3910, %v3921
          %v3944 = vadd.f32 %v3911, %v3921
          %v3945 = vadd.f32 %v3912, %v3921
          %v3946 = vadd.f32 %v3913, %v3921
          %v3947 = vadd.f32 %v3914, %v3921
          %v3948 = vadd.f32 %v3915, %v3921
          %v3949 = vadd.f32 %v3916, %v3921
          %v3950 = vadd.f32 %v3917, %v3921
          %v3951 = vadd.f32 %v3918, %v3921
          %v3952 = vadd.f32 %v3919, %v3921
          %v3953 = vadd.f32 %v3920, %v3921
          %3954 = vst [vmem:[%s406] sm:$0xff] %v3922
          %3955 = vst [vmem:[%s406 + $0x8] sm:$0xff] %v3923
          %3956 = vst [vmem:[%s406 + $0x10] sm:$0xff] %v3924
          %3957 = vst [vmem:[%s406 + $0x18] sm:$0xff] %v3925
          %3958 = vst [vmem:[%s406 + $0x20] sm:$0xff] %v3926
          %3959 = vst [vmem:[%s406 + $0x28] sm:$0xff] %v3927
          %3960 = vst [vmem:[%s406 + $0x30] sm:$0xff] %v3928
          %3961 = vst [vmem:[%s406 + $0x38] sm:$0xff] %v3929
          %3962 = vst [vmem:[%s406 + $0x40] sm:$0xff] %v3930
          %3963 = vst [vmem:[%s406 + $0x48] sm:$0xff] %v3931
          %3964 = vst [vmem:[%s406 + $0x50] sm:$0xff] %v3932
          %3965 = vst [vmem:[%s406 + $0x58] sm:$0xff] %v3933
          %3966 = vst [vmem:[%s406 + $0x60] sm:$0xff] %v3934
          %3967 = vst [vmem:[%s406 + $0x68] sm:$0xff] %v3935
          %3968 = vst [vmem:[%s406 + $0x70] sm:$0xff] %v3936
          %3969 = vst [vmem:[%s406 + $0x78] sm:$0xff] %v3937
          %3970 = vst [vmem:[%s406 + $0x80] sm:$0xff] %v3938
          %3971 = vst [vmem:[%s406 + $0x88] sm:$0xff] %v3939
          %3972 = vst [vmem:[%s406 + $0x90] sm:$0xff] %v3940
          %3973 = vst [vmem:[%s406 + $0x98] sm:$0xff] %v3941
          %3974 = vst [vmem:[%s406 + $0xa0] sm:$0xff] %v3942
          %3975 = vst [vmem:[%s406 + $0xa8] sm:$0xff] %v3943
          %3976 = vst [vmem:[%s406 + $0xb0] sm:$0xff] %v3944
          %3977 = vst [vmem:[%s406 + $0xb8] sm:$0xff] %v3945
          %3978 = vst [vmem:[%s406 + $0xc0] sm:$0xff] %v3946
          %3979 = vst [vmem:[%s406 + $0xc8] sm:$0xff] %v3947
          %3980 = vst [vmem:[%s406 + $0xd0] sm:$0xff] %v3948
          %3981 = vst [vmem:[%s406 + $0xd8] sm:$0xff] %v3949
          %3982 = vst [vmem:[%s406 + $0xe0] sm:$0xff] %v3950
          %3983 = vst [vmem:[%s406 + $0xe8] sm:$0xff] %v3951
          %3984 = vst [vmem:[%s406 + $0xf0] sm:$0xff] %v3952
          %3985 = vst [vmem:[%s406 + $0xf8] sm:$0xff] %v3953
        $region60: #{tpu_custom_call.1} parent=51 // pred_fallthru
          _
        %s3986 = sand.u32 %s227, 1
        %s3987 = scalar_lea.sflag [#allocation3], %s3986
        %s3988 = sand.u32 %s227, 1
        %s3989 = smul.addr %s3988, 256
        %s3990 = scalar_lea.vmem [#allocation2], %s3989
        %s3991 = sand.u32 %s259, 1
        %s3992 = scalar_lea.sflag [#allocation5], %s3991
        %s3993 = sand.u32 %s259, 1
        %s3994 = smul.addr %s3993, 256
        %s3995 = scalar_lea.vmem [#allocation4], %s3994
        // Predicated region
        $region61: #{tpu_custom_call.1} parent=51 // pred_check
          %p3996 = pneg %p237
        $region62: #{tpu_custom_call.1} parent=51 // pred_check_branch
          %3998 = sbr.rel (%p3996) target = $region64
        $region63: #{tpu_custom_call.1} parent=51 // pred_region
          %p3999 = scmp.lt.s32.totalorder %s27, 0
          %s4000 = scalar_select %p3999, %s27, 0
          %s4001 = smul.u32 32, %s4000
          %s4002 = ssub.s32 25, %s4001
          %s4003 = smul.u32 8, %s4002
          %s4004 = ssub.s32 256, %s4003
          %s4005 = sshll.u32 %s4004, 4
          %4006 = vsyncadd %s3987, %s4005
          %p4007 = scmp.ne.s32.totalorder 0, %s4003
          %s4008 = smul.addr %s4001, 8
          %s4009 = scalar_lea.hbm %s8, %s4008
          %s4010 = smul.u32 8, %s4002
          %s4011 = sshll.u32 %s3990, 4
          %s4012 = int_to_ptr.vmem [resolvable:$true] %s4011
          %s4013 = sshll.u32 %s4009, 4
          %s4014 = int_to_ptr.hbm [resolvable:$true] %s4013
          %s4015 = sshll.u32 %s4010, 4
          %4019 = dma.vmem_to_hbm [thread:$0]  (%p4007), %s4012, %s4015, %s4014, %s3987, 128, 128, 8
        $region64: #{tpu_custom_call.1} parent=51 // pred_fallthru
          _
        // Predicated region
        $region65: #{tpu_custom_call.1} parent=51 // pred_check
          %p4020 = pneg %p269
        $region66: #{tpu_custom_call.1} parent=51 // pred_check_branch
          %4022 = sbr.rel (%p4020) target = $region68
        $region67: #{tpu_custom_call.1} parent=51 // pred_region
          %s4023 = ssub.s32 %s27, 1
          %p4024 = scmp.gt.s32.totalorder %s4023, 0
          %s4025 = scalar_select %p4024, %s4023, 0
          %s4026 = smul.u32 32, %s4025
          %s4027 = ssub.s32 77, %s4026
          %p4028 = scmp.lt.s32.totalorder %s4027, 32
          %s4029 = scalar_select %p4028, %s4027, 32
          %s4030 = smul.u32 8, %s4029
          %s4031 = ssub.s32 256, %s4030
          %s4032 = sshll.u32 %s4031, 4
          %4033 = vsyncadd %s3992, %s4032
          %p4034 = scmp.ne.s32.totalorder 0, %s4030
          %s4035 = smul.addr %s4026, 8
          %s4036 = scalar_lea.hbm %s9, %s4035
          %s4037 = smul.u32 8, %s4029
          %s4038 = sshll.u32 %s3995, 4
          %s4039 = int_to_ptr.vmem [resolvable:$true] %s4038
          %s4040 = sshll.u32 %s4036, 4
          %s4041 = int_to_ptr.hbm [resolvable:$true] %s4040
          %s4042 = sshll.u32 %s4037, 4
          %4046 = dma.vmem_to_hbm [thread:$0]  (%p4034), %s4039, %s4042, %s4041, %s3992, 128, 128, 8
        $region68: #{tpu_custom_call.1} parent=51 // pred_fallthru
          _
      $region52: #{tpu_custom_call.1} parent=5 // pred_fallthru
        _
      %p4047 = scmp.le.s32.totalorder 2, %s22
      // Predicated region
      $region69: #{tpu_custom_call.1} parent=5 // pred_check
        %p4048 = pneg %p4047
      $region70: #{tpu_custom_call.1} parent=5 // pred_check_branch
        %4050 = sbr.rel (%p4048) target = $region72
      $region71: #{tpu_custom_call.1} parent=5 // pred_region
        %s4051 = ssub.s32 %s22, 2
        // Predicated region
        $region73: #{tpu_custom_call.1} parent=71 // pred_check
          %p4052 = pneg %p243
        $region74: #{tpu_custom_call.1} parent=71 // pred_check_branch
          %4054 = sbr.rel (%p4052) target = $region76
        $region75: #{tpu_custom_call.1} parent=71 // pred_region
          %s4055 = sand.u32 %s228, 1
          %s4056 = scalar_lea.sflag [#allocation3], %s4055
          %s4057 = sand.u32 %s228, 1
          %s4058 = smul.addr %s4057, 256
          %s4059 = scalar_lea.vmem [#allocation2], %s4058
          %4061 = dma.done %s4056, 4096
        $region76: #{tpu_custom_call.1} parent=71 // pred_fallthru
          _
        // Predicated region
        $region77: #{tpu_custom_call.1} parent=71 // pred_check
          %p4062 = pneg %p275
        $region78: #{tpu_custom_call.1} parent=71 // pred_check_branch
          %4064 = sbr.rel (%p4062) target = $region80
        $region79: #{tpu_custom_call.1} parent=71 // pred_region
          %s4065 = sand.u32 %s260, 1
          %s4066 = scalar_lea.sflag [#allocation5], %s4065
          %s4067 = sand.u32 %s260, 1
          %s4068 = smul.addr %s4067, 256
          %s4069 = scalar_lea.vmem [#allocation4], %s4068
          %4071 = dma.done %s4066, 4096
        $region80: #{tpu_custom_call.1} parent=71 // pred_fallthru
          _
      $region72: #{tpu_custom_call.1} parent=5 // pred_fallthru
        _
    $region6: #{tpu_custom_call.1} parent=1 // loop_footer
      %s26 = sadd.s32 1, %s22
    $region7: #{tpu_custom_call.1} parent=1 // loop_footer_branch
      %21 = sbr.rel target = $region3
    $region8: #{tpu_custom_call.1} parent=1 // loop_exit
      _
    %4072 = vsyncpa [#allocation3], 1
    %s4073 = scalar_lea.sflag [#allocation3], 1
    %4074 = vsyncpa %s4073, 1
    %4075 = vsyncpa [#allocation5], 1
    %s4076 = scalar_lea.sflag [#allocation5], 1
    %4077 = vsyncpa %s4076, 1

</llo_original>
